<compile_context>
chip_gen: v7x
topology: tpu7x:2x2x1
jax: 0.10.0
libtpu: 0.0.40
codegen_flags: <defaults>
</compile_context>

<pallas_src>
import jax
import jax.numpy as jnp
import numpy as np
from jax import lax
from jax.experimental import pallas as pl
from jax.experimental.pallas import tpu as pltpu


# ----------------------------------------------------------------------------
# Fused kernel builder: n_cols cLSTMLinear columns in one pallas_call
# ----------------------------------------------------------------------------
def build_fused_cpnn_kernel(n_cols, T, B, H):
    f32 = jnp.float32

    def kernel(*refs):
        it = iter(refs)
        x_ref = next(it)          # (T*B, IN)   batch-major rows (b*T + t)
        pin_ref = next(it)        # (T*B, T*B)  time-major <- batch-major permutation
        pout_ref = next(it)       # (T*B, T*B)  batch-major <- time-major permutation
        cols = []
        for c in range(n_cols):
            wx_ref = next(it)                          # (IN, 4H)  W_ih[:, :IN]^T
            wlat_ref = next(it) if c > 0 else None     # (H, 4H)   W_ih[:, IN:]^T
            wh_ref = next(it)                          # (H, 4H)   W_hh^T
            b_ref = next(it)                           # (1, 4H)   b_ih + b_hh
            cols.append((wx_ref, wlat_ref, wh_ref, b_ref))
        wlin_ref = next(it)       # (H, O)  last column Linear.weight^T
        blin_ref = next(it)       # (1, O)
        out_ref = next(it)        # (T*B, O) batch-major rows
        gx_refs = [next(it) for _ in range(n_cols)]    # (T*B, 4H) time-major scratch
        hseq_ref = next(it)                            # (T*B, H)  time-major scratch

        # Batch-major -> time-major row reorder done on the MXU (tiny constant
        # matmul) instead of a separate XLA transpose kernel in the wrapper.
        x_tm = jnp.dot(pin_ref[...], x_ref[...], preferred_element_type=f32)

        # Hoisted per-column input projections (one matmul covering all timesteps),
        # staged in VMEM scratch so the recurrence only does small contiguous loads.
        whh, wlat = [], []
        for ci, (wx_ref, wlat_ref, wh_ref, b_ref) in enumerate(cols):
            gx_refs[ci][...] = (jnp.dot(x_tm, wx_ref[...],
                                        preferred_element_type=f32) + b_ref[...])
            whh.append(wh_ref[...])
            wlat.append(None if wlat_ref is None else wlat_ref[...])

        # Hoisted gate-lane constants: the g-gate block [2H, 3H) uses
        # tanh(x) = 2*sigmoid(2x) - 1, so the whole (B, 4H) gate tensor needs a
        # single sigmoid (EUP) pass per step; the fixups are cheap VPU mul/sub.
        lane = lax.broadcasted_iota(jnp.int32, (B, 4 * H), 1)
        g_block = (lane >= 2 * H) & (lane < 3 * H)
        g_scale = jnp.where(g_block, 2.0, 1.0).astype(f32)
        g_shift = jnp.where(g_block, 1.0, 0.0).astype(f32)

        def lstm_cell(pre, h, c_state, whh_v):
            gates = pre + jnp.dot(h, whh_v, preferred_element_type=f32)
            s = jax.nn.sigmoid(gates * g_scale)      # single transcendental pass
            act = s * g_scale - g_shift              # g lanes -> 2*sigmoid(2x)-1 == tanh(x)
            i_g = act[:, 0 * H:1 * H]
            f_g = act[:, 1 * H:2 * H]
            g_g = act[:, 2 * H:3 * H]
            o_g = act[:, 3 * H:4 * H]
            c_new = f_g * c_state + i_g * g_g
            h_new = o_g * jnp.tanh(c_new)
            return h_new, c_new

        h = [jnp.zeros((B, H), f32) for _ in range(n_cols)]
        c = [jnp.zeros((B, H), f32) for _ in range(n_cols)]
        # Static unroll over time (T small & fixed); wavefront across columns so
        # column i consumes column i-1's hidden of the SAME timestep immediately.
        for t in range(T):
            for ci in range(n_cols):
                pre = gx_refs[ci][pl.ds(t * B, B), :]
                if ci > 0:
                    pre = pre + jnp.dot(h[ci - 1], wlat[ci],
                                        preferred_element_type=f32)
                h[ci], c[ci] = lstm_cell(pre, h[ci], c[ci], whh[ci])
            hseq_ref[pl.ds(t * B, B), :] = h[n_cols - 1]

        # Hoisted Linear head of the last column: one matmul over all timesteps,
        # then a constant permutation matmul writes the output batch-major in a
        # single full store (non-final columns' heads are never computed).
        out_tm = jnp.dot(hseq_ref[...], wlin_ref[...], preferred_element_type=f32)
        out_ref[...] = (jnp.dot(pout_ref[...], out_tm, preferred_element_type=f32)
                        + blin_ref[...])

    return kernel


# ----------------------------------------------------------------------------
# One-time parameter preparation (cache the result across forward calls)
# ----------------------------------------------------------------------------
def prepare_columns(columns, input_size):
    """Pre-transpose/split the PyTorch-shaped weights and fuse the biases once."""
    prepped = []
    for ci, p in enumerate(columns):
        wih_t = jnp.asarray(p["wih"]).T                       # (in_total, 4H)
        prepped.append({
            "wx": wih_t[:input_size, :],                      # x part
            "wlat": None if ci == 0 else wih_t[input_size:, :],  # lateral prev-h part
            "whh": jnp.asarray(p["whh"]).T,                   # (H, 4H)
            "b": (jnp.asarray(p["b_ih"]) + jnp.asarray(p["b_hh"])).reshape(1, -1),
        })
    head = {
        "wlin": jnp.asarray(columns[-1]["wlin"]).T,           # (H, O)
        "blin": jnp.asarray(columns[-1]["blin"]).reshape(1, -1),
    }
    return prepped, head


# ----------------------------------------------------------------------------
# cPNNColumns.forward wrapper
# ----------------------------------------------------------------------------
def cpnn_columns_forward(x_bt, prepped, head):
    """x_bt: (B, T, IN) batch-first. Returns last column's logits, (B, T, O)."""
    B, T, IN = x_bt.shape
    H = prepped[0]["whh"].shape[0]
    O = head["wlin"].shape[1]
    n_cols = len(prepped)
    TB = T * B

    # Metadata-only reshape (contiguous merge) -- no transpose kernel; the
    # batch-major <-> time-major reorder happens inside the Pallas kernel.
    x_flat = x_bt.reshape(TB, IN)

    # Compile-time constant row-permutation matrices (built with numpy at trace
    # time -> baked into the executable, zero runtime ops).
    r = np.arange(TB)
    perm_in = np.zeros((TB, TB), np.float32)
    perm_in[r, (r % B) * T + (r // B)] = 1.0     # time-major row i <- batch-major row
    perm_out = np.zeros((TB, TB), np.float32)
    perm_out[r, (r % T) * B + (r // T)] = 1.0    # batch-major row i <- time-major row
    # TODO(synk): the (T*B)^2 permutation matmul only makes sense for small T*B;
    #             for long sequences use a T-chunk grid with (B,1,*) index_maps.

    args = [x_flat, jnp.asarray(perm_in), jnp.asarray(perm_out)]
    for ci, p in enumerate(prepped):
        args.append(p["wx"])
        if ci > 0:
            args.append(p["wlat"])
        args.append(p["whh"])
        args.append(p["b"])
    args.append(head["wlin"])
    args.append(head["blin"])

    vmem = pltpu.MemorySpace.VMEM
    out_flat = pl.pallas_call(
        build_fused_cpnn_kernel(n_cols, T, B, H),
        out_shape=jax.ShapeDtypeStruct((TB, O), jnp.float32),
        in_specs=[pl.BlockSpec(memory_space=vmem) for _ in args],
        out_specs=pl.BlockSpec(memory_space=vmem),
        scratch_shapes=([pltpu.VMEM((TB, 4 * H), jnp.float32) for _ in range(n_cols)]
                        + [pltpu.VMEM((TB, H), jnp.float32)]),
        compiler_params=pltpu.CompilerParams(vmem_limit_bytes=32 * 1024 * 1024),
    )(*args)
    return out_flat.reshape(B, T, O)   # metadata-only reshape back to batch-first


# ----------------------------------------------------------------------------
# Deterministic parameter construction (PyTorch nn.LSTM / nn.Linear shapes)
# ----------------------------------------------------------------------------
def make_column_params(key, input_size, hidden_size, output_size):
    k = 1.0 / np.sqrt(hidden_size)
    keys = jax.random.split(key, 6)
    u = lambda kk, shape: jax.random.uniform(kk, shape, jnp.float32, -k, k)
    return {
        "wih": u(keys[0], (4 * hidden_size, input_size)),   # LSTM weight_ih_l0
        "whh": u(keys[1], (4 * hidden_size, hidden_size)),  # LSTM weight_hh_l0
        "b_ih": u(keys[2], (4 * hidden_size,)),
        "b_hh": u(keys[3], (4 * hidden_size,)),
        "wlin": u(keys[4], (output_size, hidden_size)),     # Linear.weight
        "blin": u(keys[5], (output_size,)),
    }


# ----------------------------------------------------------------------------
# Pure-JAX reference (lax.scan, combined weights + concat) for validation
# ----------------------------------------------------------------------------
def _reference_column(x_tm, p):
    H = p["whh"].shape[1]
    B = x_tm.shape[1]
    wih_T, whh_T = p["wih"].T, p["whh"].T
    b = (p["b_ih"] + p["b_hh"]).reshape(1, -1)

    def step(carry, xt):
        h, c = carry
        gates = xt @ wih_T + h @ whh_T + b
        i = jax.nn.sigmoid(gates[:, 0 * H:1 * H])
        f = jax.nn.sigmoid(gates[:, 1 * H:2 * H])
        g = jnp.tanh(gates[:, 2 * H:3 * H])
        o = jax.nn.sigmoid(gates[:, 3 * H:4 * H])
        c = f * c + i * g
        h = o * jnp.tanh(c)
        return (h, c), h

    h0 = jnp.zeros((B, H), jnp.float32)
    _, hs = lax.scan(step, (h0, h0), x_tm)
    outs = hs @ p["wlin"].T + p["blin"].reshape(1, -1)
    return outs, hs


def reference_forward(x_bt, columns):
    x_tm = jnp.transpose(x_bt, (1, 0, 2))
    out, prev_h = None, None
    for p in columns:
        inp = x_tm if prev_h is None else jnp.concatenate([x_tm, prev_h], axis=-1)
        out, prev_h = _reference_column(inp, p)
    return jnp.transpose(out, (1, 0, 2))


if __name__ == "__main__":
    # Small shapes consistent with the module: batch=2, seq=8, features=4,
    # hidden=32, classes=2.  Two columns (state after one add_new_column())
    # to exercise the lateral prev-hidden connection.
    B, T, IN, H, OUT = 2, 8, 4, 32, 2

    key = jax.random.PRNGKey(0)
    kx, k0, k1 = jax.random.split(key, 3)
    x = jax.random.normal(kx, (B, T, IN), jnp.float32)

    columns = [
        make_column_params(k0, IN, H, OUT),        # column 0: input_size = IN
        make_column_params(k1, IN + H, H, OUT),    # column 1: input_size = IN + H
    ]

    prepped, head = prepare_columns(columns, IN)   # one-time weight prep (cached)
    fwd = jax.jit(cpnn_columns_forward)

    out = jax.block_until_ready(fwd(x, prepped, head))
    ref = reference_forward(x, columns)

    assert out.shape == (B, T, OUT)
    np.testing.assert_allclose(np.asarray(out), np.asarray(ref),
                               rtol=1e-4, atol=1e-5)
    print("KERNEL_OK")
</pallas_src>

<mosaic_0001>
module attributes {stable_mosaic.version = 11 : i64} {
  func.func @kernel(%arg0: memref<16x4xf32, #tpu.memory_space<vmem>>, %arg1: memref<16x16xf32, #tpu.memory_space<vmem>>, %arg2: memref<16x16xf32, #tpu.memory_space<vmem>>, %arg3: memref<4x128xf32, #tpu.memory_space<vmem>>, %arg4: memref<32x128xf32, #tpu.memory_space<vmem>>, %arg5: memref<1x128xf32, #tpu.memory_space<vmem>>, %arg6: memref<4x128xf32, #tpu.memory_space<vmem>>, %arg7: memref<32x128xf32, #tpu.memory_space<vmem>>, %arg8: memref<32x128xf32, #tpu.memory_space<vmem>>, %arg9: memref<1x128xf32, #tpu.memory_space<vmem>>, %arg10: memref<32x2xf32, #tpu.memory_space<vmem>>, %arg11: memref<1x2xf32, #tpu.memory_space<vmem>>, %arg12: memref<16x2xf32, #tpu.memory_space<vmem>>, %arg13: memref<16x128xf32, #tpu.memory_space<vmem>>, %arg14: memref<16x128xf32, #tpu.memory_space<vmem>>, %arg15: memref<16x32xf32, #tpu.memory_space<vmem>>) attributes {dimension_semantics = [], scalar_prefetch = 0 : i64, scratch_operands = 3 : i64, tpu.core_type = #tpu.core_type<tc>} {
    %c0 = arith.constant 0 : index
    %c0_0 = arith.constant 0 : index
    %0 = vector.load %arg1[%c0, %c0_0] : memref<16x16xf32, #tpu.memory_space<vmem>>, vector<16x16xf32>
    %c0_1 = arith.constant 0 : index
    %c0_2 = arith.constant 0 : index
    %1 = vector.load %arg0[%c0_1, %c0_2] : memref<16x4xf32, #tpu.memory_space<vmem>>, vector<16x4xf32>
    %cst = arith.constant dense<0.000000e+00> : vector<16x4xf32>
    %2 = tpu.matmul %0, %1, %cst {dimension_numbers = #tpu.dot_dimension_numbers<[1], [0], [0], [1], [0, 0, 1, 1], [], []>} : vector<16x16xf32>, vector<16x4xf32>, vector<16x4xf32> -> vector<16x4xf32>
    %c0_3 = arith.constant 0 : index
    %c0_4 = arith.constant 0 : index
    %3 = vector.load %arg3[%c0_3, %c0_4] : memref<4x128xf32, #tpu.memory_space<vmem>>, vector<4x128xf32>
    %cst_5 = arith.constant dense<0.000000e+00> : vector<16x128xf32>
    %4 = tpu.matmul %2, %3, %cst_5 {dimension_numbers = #tpu.dot_dimension_numbers<[1], [0], [0], [1], [0, 0, 1, 1], [], []>} : vector<16x4xf32>, vector<4x128xf32>, vector<16x128xf32> -> vector<16x128xf32>
    %c0_6 = arith.constant 0 : index
    %c0_7 = arith.constant 0 : index
    %5 = vector.load %arg5[%c0_6, %c0_7] : memref<1x128xf32, #tpu.memory_space<vmem>>, vector<1x128xf32>
    %6 = vector.broadcast %5 : vector<1x128xf32> to vector<16x128xf32>
    %7 = arith.addf %4, %6 : vector<16x128xf32>
    %c0_8 = arith.constant 0 : index
    %c0_9 = arith.constant 0 : index
    %8 = vector.load %arg13[%c0_8, %c0_9] : memref<16x128xf32, #tpu.memory_space<vmem>>, vector<16x128xf32>
    tpu.vector_store %arg13[%c0_8, %c0_9], %7 {strides = array<i32>} : memref<16x128xf32, #tpu.memory_space<vmem>>, vector<16x128xf32>,
    %c0_10 = arith.constant 0 : index
    %c0_11 = arith.constant 0 : index
    %9 = vector.load %arg4[%c0_10, %c0_11] : memref<32x128xf32, #tpu.memory_space<vmem>>, vector<32x128xf32>
    %c0_12 = arith.constant 0 : index
    %c0_13 = arith.constant 0 : index
    %10 = vector.load %arg6[%c0_12, %c0_13] : memref<4x128xf32, #tpu.memory_space<vmem>>, vector<4x128xf32>
    %cst_14 = arith.constant dense<0.000000e+00> : vector<16x128xf32>
    %11 = tpu.matmul %2, %10, %cst_14 {dimension_numbers = #tpu.dot_dimension_numbers<[1], [0], [0], [1], [0, 0, 1, 1], [], []>} : vector<16x4xf32>, vector<4x128xf32>, vector<16x128xf32> -> vector<16x128xf32>
    %c0_15 = arith.constant 0 : index
    %c0_16 = arith.constant 0 : index
    %12 = vector.load %arg9[%c0_15, %c0_16] : memref<1x128xf32, #tpu.memory_space<vmem>>, vector<1x128xf32>
    %13 = vector.broadcast %12 : vector<1x128xf32> to vector<16x128xf32>
    %14 = arith.addf %11, %13 : vector<16x128xf32>
    %c0_17 = arith.constant 0 : index
    %c0_18 = arith.constant 0 : index
    %15 = vector.load %arg14[%c0_17, %c0_18] : memref<16x128xf32, #tpu.memory_space<vmem>>, vector<16x128xf32>
    tpu.vector_store %arg14[%c0_17, %c0_18], %14 {strides = array<i32>} : memref<16x128xf32, #tpu.memory_space<vmem>>, vector<16x128xf32>,
    %c0_19 = arith.constant 0 : index
    %c0_20 = arith.constant 0 : index
    %16 = vector.load %arg8[%c0_19, %c0_20] : memref<32x128xf32, #tpu.memory_space<vmem>>, vector<32x128xf32>
    %c0_21 = arith.constant 0 : index
    %c0_22 = arith.constant 0 : index
    %17 = vector.load %arg7[%c0_21, %c0_22] : memref<32x128xf32, #tpu.memory_space<vmem>>, vector<32x128xf32>
    %18 = tpu.iota {dimensions = array<i32: 1>} : vector<2x128xi32>
    %c64_i32 = arith.constant 64 : i32
    %19 = vector.broadcast %c64_i32 : i32 to vector<2x128xi32>
    %20 = arith.cmpi sge, %18, %19 : vector<2x128xi32>
    %c96_i32 = arith.constant 96 : i32
    %21 = vector.broadcast %c96_i32 : i32 to vector<2x128xi32>
    %22 = arith.cmpi slt, %18, %21 : vector<2x128xi32>
    %23 = arith.andi %20, %22 : vector<2x128xi1>
    %cst_23 = arith.constant 2.000000e+00 : f32
    %cst_24 = arith.constant 1.000000e+00 : f32
    %24 = vector.broadcast %cst_23 : f32 to vector<2x128xf32>
    %25 = vector.broadcast %cst_24 : f32 to vector<2x128xf32>
    %26 = arith.select %23, %24, %25 : vector<2x128xi1>, vector<2x128xf32>
    %cst_25 = arith.constant 1.000000e+00 : f32
    %cst_26 = arith.constant 0.000000e+00 : f32
    %27 = vector.broadcast %cst_25 : f32 to vector<2x128xf32>
    %28 = vector.broadcast %cst_26 : f32 to vector<2x128xf32>
    %29 = arith.select %23, %27, %28 : vector<2x128xi1>, vector<2x128xf32>
    %cst_27 = arith.constant 0.000000e+00 : f32
    %30 = vector.broadcast %cst_27 : f32 to vector<2x32xf32>
    %cst_28 = arith.constant 0.000000e+00 : f32
    %31 = vector.broadcast %cst_28 : f32 to vector<2x32xf32>
    %cst_29 = arith.constant 0.000000e+00 : f32
    %32 = vector.broadcast %cst_29 : f32 to vector<2x32xf32>
    %cst_30 = arith.constant 0.000000e+00 : f32
    %33 = vector.broadcast %cst_30 : f32 to vector<2x32xf32>
    %c0_31 = arith.constant 0 : index
    %c0_32 = arith.constant 0 : index
    %34 = vector.load %arg13[%c0_31, %c0_32] : memref<16x128xf32, #tpu.memory_space<vmem>>, vector<2x128xf32>
    %cst_33 = arith.constant dense<0.000000e+00> : vector<2x128xf32>
    %35 = tpu.matmul %30, %9, %cst_33 {dimension_numbers = #tpu.dot_dimension_numbers<[1], [0], [0], [1], [0, 0, 1, 1], [], []>} : vector<2x32xf32>, vector<32x128xf32>, vector<2x128xf32> -> vector<2x128xf32>
    %36 = arith.addf %34, %35 : vector<2x128xf32>
    %37 = arith.mulf %36, %26 : vector<2x128xf32>
    %38 = arith.negf %37 : vector<2x128xf32>
    %39 = math.exp %38 : vector<2x128xf32>
    %cst_34 = arith.constant 1.000000e+00 : f32
    %40 = vector.broadcast %cst_34 : f32 to vector<2x128xf32>
    %41 = arith.addf %40, %39 : vector<2x128xf32>
    %42 = arith.divf %40, %41 : vector<2x128xf32>
    %43 = arith.mulf %42, %26 : vector<2x128xf32>
    %44 = arith.subf %43, %29 : vector<2x128xf32>
    %45 = vector.extract_strided_slice %44 {offsets = [0, 0], sizes = [2, 32], strides = [1, 1]} : vector<2x128xf32> to vector<2x32xf32>
    %46 = vector.extract_strided_slice %44 {offsets = [0, 32], sizes = [2, 32], strides = [1, 1]} : vector<2x128xf32> to vector<2x32xf32>
    %47 = vector.extract_strided_slice %44 {offsets = [0, 64], sizes = [2, 32], strides = [1, 1]} : vector<2x128xf32> to vector<2x32xf32>
    %48 = vector.extract_strided_slice %44 {offsets = [0, 96], sizes = [2, 32], strides = [1, 1]} : vector<2x128xf32> to vector<2x32xf32>
    %49 = arith.mulf %46, %32 : vector<2x32xf32>
    %50 = arith.mulf %45, %47 : vector<2x32xf32>
    %51 = arith.addf %49, %50 : vector<2x32xf32>
    %52 = math.tanh %51 : vector<2x32xf32>
    %53 = arith.mulf %48, %52 : vector<2x32xf32>
    %c0_35 = arith.constant 0 : index
    %c0_36 = arith.constant 0 : index
    %54 = vector.load %arg14[%c0_35, %c0_36] : memref<16x128xf32, #tpu.memory_space<vmem>>, vector<2x128xf32>
    %cst_37 = arith.constant dense<0.000000e+00> : vector<2x128xf32>
    %55 = tpu.matmul %53, %17, %cst_37 {dimension_numbers = #tpu.dot_dimension_numbers<[1], [0], [0], [1], [0, 0, 1, 1], [], []>} : vector<2x32xf32>, vector<32x128xf32>, vector<2x128xf32> -> vector<2x128xf32>
    %56 = arith.addf %54, %55 : vector<2x128xf32>
    %cst_38 = arith.constant dense<0.000000e+00> : vector<2x128xf32>
    %57 = tpu.matmul %31, %16, %cst_38 {dimension_numbers = #tpu.dot_dimension_numbers<[1], [0], [0], [1], [0, 0, 1, 1], [], []>} : vector<2x32xf32>, vector<32x128xf32>, vector<2x128xf32> -> vector<2x128xf32>
    %58 = arith.addf %56, %57 : vector<2x128xf32>
    %59 = arith.mulf %58, %26 : vector<2x128xf32>
    %60 = arith.negf %59 : vector<2x128xf32>
    %61 = math.exp %60 : vector<2x128xf32>
    %cst_39 = arith.constant 1.000000e+00 : f32
    %62 = vector.broadcast %cst_39 : f32 to vector<2x128xf32>
    %63 = arith.addf %62, %61 : vector<2x128xf32>
    %64 = arith.divf %62, %63 : vector<2x128xf32>
    %65 = arith.mulf %64, %26 : vector<2x128xf32>
    %66 = arith.subf %65, %29 : vector<2x128xf32>
    %67 = vector.extract_strided_slice %66 {offsets = [0, 0], sizes = [2, 32], strides = [1, 1]} : vector<2x128xf32> to vector<2x32xf32>
    %68 = vector.extract_strided_slice %66 {offsets = [0, 32], sizes = [2, 32], strides = [1, 1]} : vector<2x128xf32> to vector<2x32xf32>
    %69 = vector.extract_strided_slice %66 {offsets = [0, 64], sizes = [2, 32], strides = [1, 1]} : vector<2x128xf32> to vector<2x32xf32>
    %70 = vector.extract_strided_slice %66 {offsets = [0, 96], sizes = [2, 32], strides = [1, 1]} : vector<2x128xf32> to vector<2x32xf32>
    %71 = arith.mulf %68, %33 : vector<2x32xf32>
    %72 = arith.mulf %67, %69 : vector<2x32xf32>
    %73 = arith.addf %71, %72 : vector<2x32xf32>
    %74 = math.tanh %73 : vector<2x32xf32>
    %75 = arith.mulf %70, %74 : vector<2x32xf32>
    %c0_40 = arith.constant 0 : index
    %c0_41 = arith.constant 0 : index
    %76 = vector.load %arg15[%c0_40, %c0_41] : memref<16x32xf32, #tpu.memory_space<vmem>>, vector<2x32xf32>
    tpu.vector_store %arg15[%c0_40, %c0_41], %75 {strides = array<i32>} : memref<16x32xf32, #tpu.memory_space<vmem>>, vector<2x32xf32>,
    %c2 = arith.constant 2 : index
    %c0_42 = arith.constant 0 : index
    %77 = vector.load %arg13[%c2, %c0_42] : memref<16x128xf32, #tpu.memory_space<vmem>>, vector<2x128xf32>
    %cst_43 = arith.constant dense<0.000000e+00> : vector<2x128xf32>
    %78 = tpu.matmul %53, %9, %cst_43 {dimension_numbers = #tpu.dot_dimension_numbers<[1], [0], [0], [1], [0, 0, 1, 1], [], []>} : vector<2x32xf32>, vector<32x128xf32>, vector<2x128xf32> -> vector<2x128xf32>
    %79 = arith.addf %77, %78 : vector<2x128xf32>
    %80 = arith.mulf %79, %26 : vector<2x128xf32>
    %81 = arith.negf %80 : vector<2x128xf32>
    %82 = math.exp %81 : vector<2x128xf32>
    %cst_44 = arith.constant 1.000000e+00 : f32
    %83 = vector.broadcast %cst_44 : f32 to vector<2x128xf32>
    %84 = arith.addf %83, %82 : vector<2x128xf32>
    %85 = arith.divf %83, %84 : vector<2x128xf32>
    %86 = arith.mulf %85, %26 : vector<2x128xf32>
    %87 = arith.subf %86, %29 : vector<2x128xf32>
    %88 = vector.extract_strided_slice %87 {offsets = [0, 0], sizes = [2, 32], strides = [1, 1]} : vector<2x128xf32> to vector<2x32xf32>
    %89 = vector.extract_strided_slice %87 {offsets = [0, 32], sizes = [2, 32], strides = [1, 1]} : vector<2x128xf32> to vector<2x32xf32>
    %90 = vector.extract_strided_slice %87 {offsets = [0, 64], sizes = [2, 32], strides = [1, 1]} : vector<2x128xf32> to vector<2x32xf32>
    %91 = vector.extract_strided_slice %87 {offsets = [0, 96], sizes = [2, 32], strides = [1, 1]} : vector<2x128xf32> to vector<2x32xf32>
    %92 = arith.mulf %89, %51 : vector<2x32xf32>
    %93 = arith.mulf %88, %90 : vector<2x32xf32>
    %94 = arith.addf %92, %93 : vector<2x32xf32>
    %95 = math.tanh %94 : vector<2x32xf32>
    %96 = arith.mulf %91, %95 : vector<2x32xf32>
    %c2_45 = arith.constant 2 : index
    %c0_46 = arith.constant 0 : index
    %97 = vector.load %arg14[%c2_45, %c0_46] : memref<16x128xf32, #tpu.memory_space<vmem>>, vector<2x128xf32>
    %cst_47 = arith.constant dense<0.000000e+00> : vector<2x128xf32>
    %98 = tpu.matmul %96, %17, %cst_47 {dimension_numbers = #tpu.dot_dimension_numbers<[1], [0], [0], [1], [0, 0, 1, 1], [], []>} : vector<2x32xf32>, vector<32x128xf32>, vector<2x128xf32> -> vector<2x128xf32>
    %99 = arith.addf %97, %98 : vector<2x128xf32>
    %cst_48 = arith.constant dense<0.000000e+00> : vector<2x128xf32>
    %100 = tpu.matmul %75, %16, %cst_48 {dimension_numbers = #tpu.dot_dimension_numbers<[1], [0], [0], [1], [0, 0, 1, 1], [], []>} : vector<2x32xf32>, vector<32x128xf32>, vector<2x128xf32> -> vector<2x128xf32>
    %101 = arith.addf %99, %100 : vector<2x128xf32>
    %102 = arith.mulf %101, %26 : vector<2x128xf32>
    %103 = arith.negf %102 : vector<2x128xf32>
    %104 = math.exp %103 : vector<2x128xf32>
    %cst_49 = arith.constant 1.000000e+00 : f32
    %105 = vector.broadcast %cst_49 : f32 to vector<2x128xf32>
    %106 = arith.addf %105, %104 : vector<2x128xf32>
    %107 = arith.divf %105, %106 : vector<2x128xf32>
    %108 = arith.mulf %107, %26 : vector<2x128xf32>
    %109 = arith.subf %108, %29 : vector<2x128xf32>
    %110 = vector.extract_strided_slice %109 {offsets = [0, 0], sizes = [2, 32], strides = [1, 1]} : vector<2x128xf32> to vector<2x32xf32>
    %111 = vector.extract_strided_slice %109 {offsets = [0, 32], sizes = [2, 32], strides = [1, 1]} : vector<2x128xf32> to vector<2x32xf32>
    %112 = vector.extract_strided_slice %109 {offsets = [0, 64], sizes = [2, 32], strides = [1, 1]} : vector<2x128xf32> to vector<2x32xf32>
    %113 = vector.extract_strided_slice %109 {offsets = [0, 96], sizes = [2, 32], strides = [1, 1]} : vector<2x128xf32> to vector<2x32xf32>
    %114 = arith.mulf %111, %73 : vector<2x32xf32>
    %115 = arith.mulf %110, %112 : vector<2x32xf32>
    %116 = arith.addf %114, %115 : vector<2x32xf32>
    %117 = math.tanh %116 : vector<2x32xf32>
    %118 = arith.mulf %113, %117 : vector<2x32xf32>
    %c2_50 = arith.constant 2 : index
    %c0_51 = arith.constant 0 : index
    %119 = vector.load %arg15[%c2_50, %c0_51] : memref<16x32xf32, #tpu.memory_space<vmem>>, vector<2x32xf32>
    tpu.vector_store %arg15[%c2_50, %c0_51], %118 {strides = array<i32>} : memref<16x32xf32, #tpu.memory_space<vmem>>, vector<2x32xf32>,
    %c4 = arith.constant 4 : index
    %c0_52 = arith.constant 0 : index
    %120 = vector.load %arg13[%c4, %c0_52] : memref<16x128xf32, #tpu.memory_space<vmem>>, vector<2x128xf32>
    %cst_53 = arith.constant dense<0.000000e+00> : vector<2x128xf32>
    %121 = tpu.matmul %96, %9, %cst_53 {dimension_numbers = #tpu.dot_dimension_numbers<[1], [0], [0], [1], [0, 0, 1, 1], [], []>} : vector<2x32xf32>, vector<32x128xf32>, vector<2x128xf32> -> vector<2x128xf32>
    %122 = arith.addf %120, %121 : vector<2x128xf32>
    %123 = arith.mulf %122, %26 : vector<2x128xf32>
    %124 = arith.negf %123 : vector<2x128xf32>
    %125 = math.exp %124 : vector<2x128xf32>
    %cst_54 = arith.constant 1.000000e+00 : f32
    %126 = vector.broadcast %cst_54 : f32 to vector<2x128xf32>
    %127 = arith.addf %126, %125 : vector<2x128xf32>
    %128 = arith.divf %126, %127 : vector<2x128xf32>
    %129 = arith.mulf %128, %26 : vector<2x128xf32>
    %130 = arith.subf %129, %29 : vector<2x128xf32>
    %131 = vector.extract_strided_slice %130 {offsets = [0, 0], sizes = [2, 32], strides = [1, 1]} : vector<2x128xf32> to vector<2x32xf32>
    %132 = vector.extract_strided_slice %130 {offsets = [0, 32], sizes = [2, 32], strides = [1, 1]} : vector<2x128xf32> to vector<2x32xf32>
    %133 = vector.extract_strided_slice %130 {offsets = [0, 64], sizes = [2, 32], strides = [1, 1]} : vector<2x128xf32> to vector<2x32xf32>
    %134 = vector.extract_strided_slice %130 {offsets = [0, 96], sizes = [2, 32], strides = [1, 1]} : vector<2x128xf32> to vector<2x32xf32>
    %135 = arith.mulf %132, %94 : vector<2x32xf32>
    %136 = arith.mulf %131, %133 : vector<2x32xf32>
    %137 = arith.addf %135, %136 : vector<2x32xf32>
    %138 = math.tanh %137 : vector<2x32xf32>
    %139 = arith.mulf %134, %138 : vector<2x32xf32>
    %c4_55 = arith.constant 4 : index
    %c0_56 = arith.constant 0 : index
    %140 = vector.load %arg14[%c4_55, %c0_56] : memref<16x128xf32, #tpu.memory_space<vmem>>, vector<2x128xf32>
    %cst_57 = arith.constant dense<0.000000e+00> : vector<2x128xf32>
    %141 = tpu.matmul %139, %17, %cst_57 {dimension_numbers = #tpu.dot_dimension_numbers<[1], [0], [0], [1], [0, 0, 1, 1], [], []>} : vector<2x32xf32>, vector<32x128xf32>, vector<2x128xf32> -> vector<2x128xf32>
    %142 = arith.addf %140, %141 : vector<2x128xf32>
    %cst_58 = arith.constant dense<0.000000e+00> : vector<2x128xf32>
    %143 = tpu.matmul %118, %16, %cst_58 {dimension_numbers = #tpu.dot_dimension_numbers<[1], [0], [0], [1], [0, 0, 1, 1], [], []>} : vector<2x32xf32>, vector<32x128xf32>, vector<2x128xf32> -> vector<2x128xf32>
    %144 = arith.addf %142, %143 : vector<2x128xf32>
    %145 = arith.mulf %144, %26 : vector<2x128xf32>
    %146 = arith.negf %145 : vector<2x128xf32>
    %147 = math.exp %146 : vector<2x128xf32>
    %cst_59 = arith.constant 1.000000e+00 : f32
    %148 = vector.broadcast %cst_59 : f32 to vector<2x128xf32>
    %149 = arith.addf %148, %147 : vector<2x128xf32>
    %150 = arith.divf %148, %149 : vector<2x128xf32>
    %151 = arith.mulf %150, %26 : vector<2x128xf32>
    %152 = arith.subf %151, %29 : vector<2x128xf32>
    %153 = vector.extract_strided_slice %152 {offsets = [0, 0], sizes = [2, 32], strides = [1, 1]} : vector<2x128xf32> to vector<2x32xf32>
    %154 = vector.extract_strided_slice %152 {offsets = [0, 32], sizes = [2, 32], strides = [1, 1]} : vector<2x128xf32> to vector<2x32xf32>
    %155 = vector.extract_strided_slice %152 {offsets = [0, 64], sizes = [2, 32], strides = [1, 1]} : vector<2x128xf32> to vector<2x32xf32>
    %156 = vector.extract_strided_slice %152 {offsets = [0, 96], sizes = [2, 32], strides = [1, 1]} : vector<2x128xf32> to vector<2x32xf32>
    %157 = arith.mulf %154, %116 : vector<2x32xf32>
    %158 = arith.mulf %153, %155 : vector<2x32xf32>
    %159 = arith.addf %157, %158 : vector<2x32xf32>
    %160 = math.tanh %159 : vector<2x32xf32>
    %161 = arith.mulf %156, %160 : vector<2x32xf32>
    %c4_60 = arith.constant 4 : index
    %c0_61 = arith.constant 0 : index
    %162 = vector.load %arg15[%c4_60, %c0_61] : memref<16x32xf32, #tpu.memory_space<vmem>>, vector<2x32xf32>
    tpu.vector_store %arg15[%c4_60, %c0_61], %161 {strides = array<i32>} : memref<16x32xf32, #tpu.memory_space<vmem>>, vector<2x32xf32>,
    %c6 = arith.constant 6 : index
    %c0_62 = arith.constant 0 : index
    %163 = vector.load %arg13[%c6, %c0_62] : memref<16x128xf32, #tpu.memory_space<vmem>>, vector<2x128xf32>
    %cst_63 = arith.constant dense<0.000000e+00> : vector<2x128xf32>
    %164 = tpu.matmul %139, %9, %cst_63 {dimension_numbers = #tpu.dot_dimension_numbers<[1], [0], [0], [1], [0, 0, 1, 1], [], []>} : vector<2x32xf32>, vector<32x128xf32>, vector<2x128xf32> -> vector<2x128xf32>
    %165 = arith.addf %163, %164 : vector<2x128xf32>
    %166 = arith.mulf %165, %26 : vector<2x128xf32>
    %167 = arith.negf %166 : vector<2x128xf32>
    %168 = math.exp %167 : vector<2x128xf32>
    %cst_64 = arith.constant 1.000000e+00 : f32
    %169 = vector.broadcast %cst_64 : f32 to vector<2x128xf32>
    %170 = arith.addf %169, %168 : vector<2x128xf32>
    %171 = arith.divf %169, %170 : vector<2x128xf32>
    %172 = arith.mulf %171, %26 : vector<2x128xf32>
    %173 = arith.subf %172, %29 : vector<2x128xf32>
    %174 = vector.extract_strided_slice %173 {offsets = [0, 0], sizes = [2, 32], strides = [1, 1]} : vector<2x128xf32> to vector<2x32xf32>
    %175 = vector.extract_strided_slice %173 {offsets = [0, 32], sizes = [2, 32], strides = [1, 1]} : vector<2x128xf32> to vector<2x32xf32>
    %176 = vector.extract_strided_slice %173 {offsets = [0, 64], sizes = [2, 32], strides = [1, 1]} : vector<2x128xf32> to vector<2x32xf32>
    %177 = vector.extract_strided_slice %173 {offsets = [0, 96], sizes = [2, 32], strides = [1, 1]} : vector<2x128xf32> to vector<2x32xf32>
    %178 = arith.mulf %175, %137 : vector<2x32xf32>
    %179 = arith.mulf %174, %176 : vector<2x32xf32>
    %180 = arith.addf %178, %179 : vector<2x32xf32>
    %181 = math.tanh %180 : vector<2x32xf32>
    %182 = arith.mulf %177, %181 : vector<2x32xf32>
    %c6_65 = arith.constant 6 : index
    %c0_66 = arith.constant 0 : index
    %183 = vector.load %arg14[%c6_65, %c0_66] : memref<16x128xf32, #tpu.memory_space<vmem>>, vector<2x128xf32>
    %cst_67 = arith.constant dense<0.000000e+00> : vector<2x128xf32>
    %184 = tpu.matmul %182, %17, %cst_67 {dimension_numbers = #tpu.dot_dimension_numbers<[1], [0], [0], [1], [0, 0, 1, 1], [], []>} : vector<2x32xf32>, vector<32x128xf32>, vector<2x128xf32> -> vector<2x128xf32>
    %185 = arith.addf %183, %184 : vector<2x128xf32>
    %cst_68 = arith.constant dense<0.000000e+00> : vector<2x128xf32>
    %186 = tpu.matmul %161, %16, %cst_68 {dimension_numbers = #tpu.dot_dimension_numbers<[1], [0], [0], [1], [0, 0, 1, 1], [], []>} : vector<2x32xf32>, vector<32x128xf32>, vector<2x128xf32> -> vector<2x128xf32>
    %187 = arith.addf %185, %186 : vector<2x128xf32>
    %188 = arith.mulf %187, %26 : vector<2x128xf32>
    %189 = arith.negf %188 : vector<2x128xf32>
    %190 = math.exp %189 : vector<2x128xf32>
    %cst_69 = arith.constant 1.000000e+00 : f32
    %191 = vector.broadcast %cst_69 : f32 to vector<2x128xf32>
    %192 = arith.addf %191, %190 : vector<2x128xf32>
    %193 = arith.divf %191, %192 : vector<2x128xf32>
    %194 = arith.mulf %193, %26 : vector<2x128xf32>
    %195 = arith.subf %194, %29 : vector<2x128xf32>
    %196 = vector.extract_strided_slice %195 {offsets = [0, 0], sizes = [2, 32], strides = [1, 1]} : vector<2x128xf32> to vector<2x32xf32>
    %197 = vector.extract_strided_slice %195 {offsets = [0, 32], sizes = [2, 32], strides = [1, 1]} : vector<2x128xf32> to vector<2x32xf32>
    %198 = vector.extract_strided_slice %195 {offsets = [0, 64], sizes = [2, 32], strides = [1, 1]} : vector<2x128xf32> to vector<2x32xf32>
    %199 = vector.extract_strided_slice %195 {offsets = [0, 96], sizes = [2, 32], strides = [1, 1]} : vector<2x128xf32> to vector<2x32xf32>
    %200 = arith.mulf %197, %159 : vector<2x32xf32>
    %201 = arith.mulf %196, %198 : vector<2x32xf32>
    %202 = arith.addf %200, %201 : vector<2x32xf32>
    %203 = math.tanh %202 : vector<2x32xf32>
    %204 = arith.mulf %199, %203 : vector<2x32xf32>
    %c6_70 = arith.constant 6 : index
    %c0_71 = arith.constant 0 : index
    %205 = vector.load %arg15[%c6_70, %c0_71] : memref<16x32xf32, #tpu.memory_space<vmem>>, vector<2x32xf32>
    tpu.vector_store %arg15[%c6_70, %c0_71], %204 {strides = array<i32>} : memref<16x32xf32, #tpu.memory_space<vmem>>, vector<2x32xf32>,
    %c8 = arith.constant 8 : index
    %c0_72 = arith.constant 0 : index
    %206 = vector.load %arg13[%c8, %c0_72] : memref<16x128xf32, #tpu.memory_space<vmem>>, vector<2x128xf32>
    %cst_73 = arith.constant dense<0.000000e+00> : vector<2x128xf32>
    %207 = tpu.matmul %182, %9, %cst_73 {dimension_numbers = #tpu.dot_dimension_numbers<[1], [0], [0], [1], [0, 0, 1, 1], [], []>} : vector<2x32xf32>, vector<32x128xf32>, vector<2x128xf32> -> vector<2x128xf32>
    %208 = arith.addf %206, %207 : vector<2x128xf32>
    %209 = arith.mulf %208, %26 : vector<2x128xf32>
    %210 = arith.negf %209 : vector<2x128xf32>
    %211 = math.exp %210 : vector<2x128xf32>
    %cst_74 = arith.constant 1.000000e+00 : f32
    %212 = vector.broadcast %cst_74 : f32 to vector<2x128xf32>
    %213 = arith.addf %212, %211 : vector<2x128xf32>
    %214 = arith.divf %212, %213 : vector<2x128xf32>
    %215 = arith.mulf %214, %26 : vector<2x128xf32>
    %216 = arith.subf %215, %29 : vector<2x128xf32>
    %217 = vector.extract_strided_slice %216 {offsets = [0, 0], sizes = [2, 32], strides = [1, 1]} : vector<2x128xf32> to vector<2x32xf32>
    %218 = vector.extract_strided_slice %216 {offsets = [0, 32], sizes = [2, 32], strides = [1, 1]} : vector<2x128xf32> to vector<2x32xf32>
    %219 = vector.extract_strided_slice %216 {offsets = [0, 64], sizes = [2, 32], strides = [1, 1]} : vector<2x128xf32> to vector<2x32xf32>
    %220 = vector.extract_strided_slice %216 {offsets = [0, 96], sizes = [2, 32], strides = [1, 1]} : vector<2x128xf32> to vector<2x32xf32>
    %221 = arith.mulf %218, %180 : vector<2x32xf32>
    %222 = arith.mulf %217, %219 : vector<2x32xf32>
    %223 = arith.addf %221, %222 : vector<2x32xf32>
    %224 = math.tanh %223 : vector<2x32xf32>
    %225 = arith.mulf %220, %224 : vector<2x32xf32>
    %c8_75 = arith.constant 8 : index
    %c0_76 = arith.constant 0 : index
    %226 = vector.load %arg14[%c8_75, %c0_76] : memref<16x128xf32, #tpu.memory_space<vmem>>, vector<2x128xf32>
    %cst_77 = arith.constant dense<0.000000e+00> : vector<2x128xf32>
    %227 = tpu.matmul %225, %17, %cst_77 {dimension_numbers = #tpu.dot_dimension_numbers<[1], [0], [0], [1], [0, 0, 1, 1], [], []>} : vector<2x32xf32>, vector<32x128xf32>, vector<2x128xf32> -> vector<2x128xf32>
    %228 = arith.addf %226, %227 : vector<2x128xf32>
    %cst_78 = arith.constant dense<0.000000e+00> : vector<2x128xf32>
    %229 = tpu.matmul %204, %16, %cst_78 {dimension_numbers = #tpu.dot_dimension_numbers<[1], [0], [0], [1], [0, 0, 1, 1], [], []>} : vector<2x32xf32>, vector<32x128xf32>, vector<2x128xf32> -> vector<2x128xf32>
    %230 = arith.addf %228, %229 : vector<2x128xf32>
    %231 = arith.mulf %230, %26 : vector<2x128xf32>
    %232 = arith.negf %231 : vector<2x128xf32>
    %233 = math.exp %232 : vector<2x128xf32>
    %cst_79 = arith.constant 1.000000e+00 : f32
    %234 = vector.broadcast %cst_79 : f32 to vector<2x128xf32>
    %235 = arith.addf %234, %233 : vector<2x128xf32>
    %236 = arith.divf %234, %235 : vector<2x128xf32>
    %237 = arith.mulf %236, %26 : vector<2x128xf32>
    %238 = arith.subf %237, %29 : vector<2x128xf32>
    %239 = vector.extract_strided_slice %238 {offsets = [0, 0], sizes = [2, 32], strides = [1, 1]} : vector<2x128xf32> to vector<2x32xf32>
    %240 = vector.extract_strided_slice %238 {offsets = [0, 32], sizes = [2, 32], strides = [1, 1]} : vector<2x128xf32> to vector<2x32xf32>
    %241 = vector.extract_strided_slice %238 {offsets = [0, 64], sizes = [2, 32], strides = [1, 1]} : vector<2x128xf32> to vector<2x32xf32>
    %242 = vector.extract_strided_slice %238 {offsets = [0, 96], sizes = [2, 32], strides = [1, 1]} : vector<2x128xf32> to vector<2x32xf32>
    %243 = arith.mulf %240, %202 : vector<2x32xf32>
    %244 = arith.mulf %239, %241 : vector<2x32xf32>
    %245 = arith.addf %243, %244 : vector<2x32xf32>
    %246 = math.tanh %245 : vector<2x32xf32>
    %247 = arith.mulf %242, %246 : vector<2x32xf32>
    %c8_80 = arith.constant 8 : index
    %c0_81 = arith.constant 0 : index
    %248 = vector.load %arg15[%c8_80, %c0_81] : memref<16x32xf32, #tpu.memory_space<vmem>>, vector<2x32xf32>
    tpu.vector_store %arg15[%c8_80, %c0_81], %247 {strides = array<i32>} : memref<16x32xf32, #tpu.memory_space<vmem>>, vector<2x32xf32>,
    %c10 = arith.constant 10 : index
    %c0_82 = arith.constant 0 : index
    %249 = vector.load %arg13[%c10, %c0_82] : memref<16x128xf32, #tpu.memory_space<vmem>>, vector<2x128xf32>
    %cst_83 = arith.constant dense<0.000000e+00> : vector<2x128xf32>
    %250 = tpu.matmul %225, %9, %cst_83 {dimension_numbers = #tpu.dot_dimension_numbers<[1], [0], [0], [1], [0, 0, 1, 1], [], []>} : vector<2x32xf32>, vector<32x128xf32>, vector<2x128xf32> -> vector<2x128xf32>
    %251 = arith.addf %249, %250 : vector<2x128xf32>
    %252 = arith.mulf %251, %26 : vector<2x128xf32>
    %253 = arith.negf %252 : vector<2x128xf32>
    %254 = math.exp %253 : vector<2x128xf32>
    %cst_84 = arith.constant 1.000000e+00 : f32
    %255 = vector.broadcast %cst_84 : f32 to vector<2x128xf32>
    %256 = arith.addf %255, %254 : vector<2x128xf32>
    %257 = arith.divf %255, %256 : vector<2x128xf32>
    %258 = arith.mulf %257, %26 : vector<2x128xf32>
    %259 = arith.subf %258, %29 : vector<2x128xf32>
    %260 = vector.extract_strided_slice %259 {offsets = [0, 0], sizes = [2, 32], strides = [1, 1]} : vector<2x128xf32> to vector<2x32xf32>
    %261 = vector.extract_strided_slice %259 {offsets = [0, 32], sizes = [2, 32], strides = [1, 1]} : vector<2x128xf32> to vector<2x32xf32>
    %262 = vector.extract_strided_slice %259 {offsets = [0, 64], sizes = [2, 32], strides = [1, 1]} : vector<2x128xf32> to vector<2x32xf32>
    %263 = vector.extract_strided_slice %259 {offsets = [0, 96], sizes = [2, 32], strides = [1, 1]} : vector<2x128xf32> to vector<2x32xf32>
    %264 = arith.mulf %261, %223 : vector<2x32xf32>
    %265 = arith.mulf %260, %262 : vector<2x32xf32>
    %266 = arith.addf %264, %265 : vector<2x32xf32>
    %267 = math.tanh %266 : vector<2x32xf32>
    %268 = arith.mulf %263, %267 : vector<2x32xf32>
    %c10_85 = arith.constant 10 : index
    %c0_86 = arith.constant 0 : index
    %269 = vector.load %arg14[%c10_85, %c0_86] : memref<16x128xf32, #tpu.memory_space<vmem>>, vector<2x128xf32>
    %cst_87 = arith.constant dense<0.000000e+00> : vector<2x128xf32>
    %270 = tpu.matmul %268, %17, %cst_87 {dimension_numbers = #tpu.dot_dimension_numbers<[1], [0], [0], [1], [0, 0, 1, 1], [], []>} : vector<2x32xf32>, vector<32x128xf32>, vector<2x128xf32> -> vector<2x128xf32>
    %271 = arith.addf %269, %270 : vector<2x128xf32>
    %cst_88 = arith.constant dense<0.000000e+00> : vector<2x128xf32>
    %272 = tpu.matmul %247, %16, %cst_88 {dimension_numbers = #tpu.dot_dimension_numbers<[1], [0], [0], [1], [0, 0, 1, 1], [], []>} : vector<2x32xf32>, vector<32x128xf32>, vector<2x128xf32> -> vector<2x128xf32>
    %273 = arith.addf %271, %272 : vector<2x128xf32>
    %274 = arith.mulf %273, %26 : vector<2x128xf32>
    %275 = arith.negf %274 : vector<2x128xf32>
    %276 = math.exp %275 : vector<2x128xf32>
    %cst_89 = arith.constant 1.000000e+00 : f32
    %277 = vector.broadcast %cst_89 : f32 to vector<2x128xf32>
    %278 = arith.addf %277, %276 : vector<2x128xf32>
    %279 = arith.divf %277, %278 : vector<2x128xf32>
    %280 = arith.mulf %279, %26 : vector<2x128xf32>
    %281 = arith.subf %280, %29 : vector<2x128xf32>
    %282 = vector.extract_strided_slice %281 {offsets = [0, 0], sizes = [2, 32], strides = [1, 1]} : vector<2x128xf32> to vector<2x32xf32>
    %283 = vector.extract_strided_slice %281 {offsets = [0, 32], sizes = [2, 32], strides = [1, 1]} : vector<2x128xf32> to vector<2x32xf32>
    %284 = vector.extract_strided_slice %281 {offsets = [0, 64], sizes = [2, 32], strides = [1, 1]} : vector<2x128xf32> to vector<2x32xf32>
    %285 = vector.extract_strided_slice %281 {offsets = [0, 96], sizes = [2, 32], strides = [1, 1]} : vector<2x128xf32> to vector<2x32xf32>
    %286 = arith.mulf %283, %245 : vector<2x32xf32>
    %287 = arith.mulf %282, %284 : vector<2x32xf32>
    %288 = arith.addf %286, %287 : vector<2x32xf32>
    %289 = math.tanh %288 : vector<2x32xf32>
    %290 = arith.mulf %285, %289 : vector<2x32xf32>
    %c10_90 = arith.constant 10 : index
    %c0_91 = arith.constant 0 : index
    %291 = vector.load %arg15[%c10_90, %c0_91] : memref<16x32xf32, #tpu.memory_space<vmem>>, vector<2x32xf32>
    tpu.vector_store %arg15[%c10_90, %c0_91], %290 {strides = array<i32>} : memref<16x32xf32, #tpu.memory_space<vmem>>, vector<2x32xf32>,
    %c12 = arith.constant 12 : index
    %c0_92 = arith.constant 0 : index
    %292 = vector.load %arg13[%c12, %c0_92] : memref<16x128xf32, #tpu.memory_space<vmem>>, vector<2x128xf32>
    %cst_93 = arith.constant dense<0.000000e+00> : vector<2x128xf32>
    %293 = tpu.matmul %268, %9, %cst_93 {dimension_numbers = #tpu.dot_dimension_numbers<[1], [0], [0], [1], [0, 0, 1, 1], [], []>} : vector<2x32xf32>, vector<32x128xf32>, vector<2x128xf32> -> vector<2x128xf32>
    %294 = arith.addf %292, %293 : vector<2x128xf32>
    %295 = arith.mulf %294, %26 : vector<2x128xf32>
    %296 = arith.negf %295 : vector<2x128xf32>
    %297 = math.exp %296 : vector<2x128xf32>
    %cst_94 = arith.constant 1.000000e+00 : f32
    %298 = vector.broadcast %cst_94 : f32 to vector<2x128xf32>
    %299 = arith.addf %298, %297 : vector<2x128xf32>
    %300 = arith.divf %298, %299 : vector<2x128xf32>
    %301 = arith.mulf %300, %26 : vector<2x128xf32>
    %302 = arith.subf %301, %29 : vector<2x128xf32>
    %303 = vector.extract_strided_slice %302 {offsets = [0, 0], sizes = [2, 32], strides = [1, 1]} : vector<2x128xf32> to vector<2x32xf32>
    %304 = vector.extract_strided_slice %302 {offsets = [0, 32], sizes = [2, 32], strides = [1, 1]} : vector<2x128xf32> to vector<2x32xf32>
    %305 = vector.extract_strided_slice %302 {offsets = [0, 64], sizes = [2, 32], strides = [1, 1]} : vector<2x128xf32> to vector<2x32xf32>
    %306 = vector.extract_strided_slice %302 {offsets = [0, 96], sizes = [2, 32], strides = [1, 1]} : vector<2x128xf32> to vector<2x32xf32>
    %307 = arith.mulf %304, %266 : vector<2x32xf32>
    %308 = arith.mulf %303, %305 : vector<2x32xf32>
    %309 = arith.addf %307, %308 : vector<2x32xf32>
    %310 = math.tanh %309 : vector<2x32xf32>
    %311 = arith.mulf %306, %310 : vector<2x32xf32>
    %c12_95 = arith.constant 12 : index
    %c0_96 = arith.constant 0 : index
    %312 = vector.load %arg14[%c12_95, %c0_96] : memref<16x128xf32, #tpu.memory_space<vmem>>, vector<2x128xf32>
    %cst_97 = arith.constant dense<0.000000e+00> : vector<2x128xf32>
    %313 = tpu.matmul %311, %17, %cst_97 {dimension_numbers = #tpu.dot_dimension_numbers<[1], [0], [0], [1], [0, 0, 1, 1], [], []>} : vector<2x32xf32>, vector<32x128xf32>, vector<2x128xf32> -> vector<2x128xf32>
    %314 = arith.addf %312, %313 : vector<2x128xf32>
    %cst_98 = arith.constant dense<0.000000e+00> : vector<2x128xf32>
    %315 = tpu.matmul %290, %16, %cst_98 {dimension_numbers = #tpu.dot_dimension_numbers<[1], [0], [0], [1], [0, 0, 1, 1], [], []>} : vector<2x32xf32>, vector<32x128xf32>, vector<2x128xf32> -> vector<2x128xf32>
    %316 = arith.addf %314, %315 : vector<2x128xf32>
    %317 = arith.mulf %316, %26 : vector<2x128xf32>
    %318 = arith.negf %317 : vector<2x128xf32>
    %319 = math.exp %318 : vector<2x128xf32>
    %cst_99 = arith.constant 1.000000e+00 : f32
    %320 = vector.broadcast %cst_99 : f32 to vector<2x128xf32>
    %321 = arith.addf %320, %319 : vector<2x128xf32>
    %322 = arith.divf %320, %321 : vector<2x128xf32>
    %323 = arith.mulf %322, %26 : vector<2x128xf32>
    %324 = arith.subf %323, %29 : vector<2x128xf32>
    %325 = vector.extract_strided_slice %324 {offsets = [0, 0], sizes = [2, 32], strides = [1, 1]} : vector<2x128xf32> to vector<2x32xf32>
    %326 = vector.extract_strided_slice %324 {offsets = [0, 32], sizes = [2, 32], strides = [1, 1]} : vector<2x128xf32> to vector<2x32xf32>
    %327 = vector.extract_strided_slice %324 {offsets = [0, 64], sizes = [2, 32], strides = [1, 1]} : vector<2x128xf32> to vector<2x32xf32>
    %328 = vector.extract_strided_slice %324 {offsets = [0, 96], sizes = [2, 32], strides = [1, 1]} : vector<2x128xf32> to vector<2x32xf32>
    %329 = arith.mulf %326, %288 : vector<2x32xf32>
    %330 = arith.mulf %325, %327 : vector<2x32xf32>
    %331 = arith.addf %329, %330 : vector<2x32xf32>
    %332 = math.tanh %331 : vector<2x32xf32>
    %333 = arith.mulf %328, %332 : vector<2x32xf32>
    %c12_100 = arith.constant 12 : index
    %c0_101 = arith.constant 0 : index
    %334 = vector.load %arg15[%c12_100, %c0_101] : memref<16x32xf32, #tpu.memory_space<vmem>>, vector<2x32xf32>
    tpu.vector_store %arg15[%c12_100, %c0_101], %333 {strides = array<i32>} : memref<16x32xf32, #tpu.memory_space<vmem>>, vector<2x32xf32>,
    %c14 = arith.constant 14 : index
    %c0_102 = arith.constant 0 : index
    %335 = vector.load %arg13[%c14, %c0_102] : memref<16x128xf32, #tpu.memory_space<vmem>>, vector<2x128xf32>
    %cst_103 = arith.constant dense<0.000000e+00> : vector<2x128xf32>
    %336 = tpu.matmul %311, %9, %cst_103 {dimension_numbers = #tpu.dot_dimension_numbers<[1], [0], [0], [1], [0, 0, 1, 1], [], []>} : vector<2x32xf32>, vector<32x128xf32>, vector<2x128xf32> -> vector<2x128xf32>
    %337 = arith.addf %335, %336 : vector<2x128xf32>
    %338 = arith.mulf %337, %26 : vector<2x128xf32>
    %339 = arith.negf %338 : vector<2x128xf32>
    %340 = math.exp %339 : vector<2x128xf32>
    %cst_104 = arith.constant 1.000000e+00 : f32
    %341 = vector.broadcast %cst_104 : f32 to vector<2x128xf32>
    %342 = arith.addf %341, %340 : vector<2x128xf32>
    %343 = arith.divf %341, %342 : vector<2x128xf32>
    %344 = arith.mulf %343, %26 : vector<2x128xf32>
    %345 = arith.subf %344, %29 : vector<2x128xf32>
    %346 = vector.extract_strided_slice %345 {offsets = [0, 0], sizes = [2, 32], strides = [1, 1]} : vector<2x128xf32> to vector<2x32xf32>
    %347 = vector.extract_strided_slice %345 {offsets = [0, 32], sizes = [2, 32], strides = [1, 1]} : vector<2x128xf32> to vector<2x32xf32>
    %348 = vector.extract_strided_slice %345 {offsets = [0, 64], sizes = [2, 32], strides = [1, 1]} : vector<2x128xf32> to vector<2x32xf32>
    %349 = vector.extract_strided_slice %345 {offsets = [0, 96], sizes = [2, 32], strides = [1, 1]} : vector<2x128xf32> to vector<2x32xf32>
    %350 = arith.mulf %347, %309 : vector<2x32xf32>
    %351 = arith.mulf %346, %348 : vector<2x32xf32>
    %352 = arith.addf %350, %351 : vector<2x32xf32>
    %353 = math.tanh %352 : vector<2x32xf32>
    %354 = arith.mulf %349, %353 : vector<2x32xf32>
    %c14_105 = arith.constant 14 : index
    %c0_106 = arith.constant 0 : index
    %355 = vector.load %arg14[%c14_105, %c0_106] : memref<16x128xf32, #tpu.memory_space<vmem>>, vector<2x128xf32>
    %cst_107 = arith.constant dense<0.000000e+00> : vector<2x128xf32>
    %356 = tpu.matmul %354, %17, %cst_107 {dimension_numbers = #tpu.dot_dimension_numbers<[1], [0], [0], [1], [0, 0, 1, 1], [], []>} : vector<2x32xf32>, vector<32x128xf32>, vector<2x128xf32> -> vector<2x128xf32>
    %357 = arith.addf %355, %356 : vector<2x128xf32>
    %cst_108 = arith.constant dense<0.000000e+00> : vector<2x128xf32>
    %358 = tpu.matmul %333, %16, %cst_108 {dimension_numbers = #tpu.dot_dimension_numbers<[1], [0], [0], [1], [0, 0, 1, 1], [], []>} : vector<2x32xf32>, vector<32x128xf32>, vector<2x128xf32> -> vector<2x128xf32>
    %359 = arith.addf %357, %358 : vector<2x128xf32>
    %360 = arith.mulf %359, %26 : vector<2x128xf32>
    %361 = arith.negf %360 : vector<2x128xf32>
    %362 = math.exp %361 : vector<2x128xf32>
    %cst_109 = arith.constant 1.000000e+00 : f32
    %363 = vector.broadcast %cst_109 : f32 to vector<2x128xf32>
    %364 = arith.addf %363, %362 : vector<2x128xf32>
    %365 = arith.divf %363, %364 : vector<2x128xf32>
    %366 = arith.mulf %365, %26 : vector<2x128xf32>
    %367 = arith.subf %366, %29 : vector<2x128xf32>
    %368 = vector.extract_strided_slice %367 {offsets = [0, 0], sizes = [2, 32], strides = [1, 1]} : vector<2x128xf32> to vector<2x32xf32>
    %369 = vector.extract_strided_slice %367 {offsets = [0, 32], sizes = [2, 32], strides = [1, 1]} : vector<2x128xf32> to vector<2x32xf32>
    %370 = vector.extract_strided_slice %367 {offsets = [0, 64], sizes = [2, 32], strides = [1, 1]} : vector<2x128xf32> to vector<2x32xf32>
    %371 = vector.extract_strided_slice %367 {offsets = [0, 96], sizes = [2, 32], strides = [1, 1]} : vector<2x128xf32> to vector<2x32xf32>
    %372 = arith.mulf %369, %331 : vector<2x32xf32>
    %373 = arith.mulf %368, %370 : vector<2x32xf32>
    %374 = arith.addf %372, %373 : vector<2x32xf32>
    %375 = math.tanh %374 : vector<2x32xf32>
    %376 = arith.mulf %371, %375 : vector<2x32xf32>
    %c14_110 = arith.constant 14 : index
    %c0_111 = arith.constant 0 : index
    %377 = vector.load %arg15[%c14_110, %c0_111] : memref<16x32xf32, #tpu.memory_space<vmem>>, vector<2x32xf32>
    tpu.vector_store %arg15[%c14_110, %c0_111], %376 {strides = array<i32>} : memref<16x32xf32, #tpu.memory_space<vmem>>, vector<2x32xf32>,
    %c0_112 = arith.constant 0 : index
    %c0_113 = arith.constant 0 : index
    %378 = vector.load %arg15[%c0_112, %c0_113] : memref<16x32xf32, #tpu.memory_space<vmem>>, vector<16x32xf32>
    %c0_114 = arith.constant 0 : index
    %c0_115 = arith.constant 0 : index
    %379 = vector.load %arg10[%c0_114, %c0_115] : memref<32x2xf32, #tpu.memory_space<vmem>>, vector<32x2xf32>
    %cst_116 = arith.constant dense<0.000000e+00> : vector<16x2xf32>
    %380 = tpu.matmul %378, %379, %cst_116 {dimension_numbers = #tpu.dot_dimension_numbers<[1], [0], [0], [1], [0, 0, 1, 1], [], []>} : vector<16x32xf32>, vector<32x2xf32>, vector<16x2xf32> -> vector<16x2xf32>
    %c0_117 = arith.constant 0 : index
    %c0_118 = arith.constant 0 : index
    %381 = vector.load %arg2[%c0_117, %c0_118] : memref<16x16xf32, #tpu.memory_space<vmem>>, vector<16x16xf32>
    %cst_119 = arith.constant dense<0.000000e+00> : vector<16x2xf32>
    %382 = tpu.matmul %381, %380, %cst_119 {dimension_numbers = #tpu.dot_dimension_numbers<[1], [0], [0], [1], [0, 0, 1, 1], [], []>} : vector<16x16xf32>, vector<16x2xf32>, vector<16x2xf32> -> vector<16x2xf32>
    %c0_120 = arith.constant 0 : index
    %c0_121 = arith.constant 0 : index
    %383 = vector.load %arg11[%c0_120, %c0_121] : memref<1x2xf32, #tpu.memory_space<vmem>>, vector<1x2xf32>
    %384 = vector.broadcast %383 : vector<1x2xf32> to vector<16x2xf32>
    %385 = arith.addf %382, %384 : vector<16x2xf32>
    %c0_122 = arith.constant 0 : index
    %c0_123 = arith.constant 0 : index
    %386 = vector.load %arg12[%c0_122, %c0_123] : memref<16x2xf32, #tpu.memory_space<vmem>>, vector<16x2xf32>
    tpu.vector_store %arg12[%c0_122, %c0_123], %385 {strides = array<i32>} : memref<16x2xf32, #tpu.memory_space<vmem>>, vector<16x2xf32>,
    return
  }
}

</mosaic_0001>

<llo_original>
// kernel: cpnn_columns_forward.1
$region0: #{cpnn_columns_forward.1}
  #allocation0 [shape = 'u32[]', space=smem, size = 0x4, offset = 0x4, fixed_abs, tag = 'smem constant byte address 0x4 - core index']
  #allocation1 [shape = 'u32[144,128]{1,0:T(1,128)}', space=vmem, size = 0x12000, scoped, tag = 'internal scratch']
  #allocation2 [shape = 'f32[16,128]{1,0:T(8,128)}', space=vmem, size = 0x2000, scoped, tag = 'scratch operand']
  #allocation3 [shape = 'f32[16,128]{1,0:T(8,128)}', space=vmem, size = 0x2000, scoped, tag = 'scratch operand']
  #allocation4 [shape = 'f32[16,32]{1,0:T(8,128)}', space=vmem, size = 0x2000, scoped, tag = 'scratch operand']
  %s0 = inlined_call_operand.vmem [shape: f32[16,4], index: 0, kind: input, shape index: {}]
  %s1 = inlined_call_operand.vmem [shape: f32[16,16], index: 1, kind: input, shape index: {}]
  %s2 = inlined_call_operand.vmem [shape: f32[16,16], index: 2, kind: input, shape index: {}]
  %s3 = inlined_call_operand.hbm [shape: f32[4,128], index: 3, kind: input, shape index: {}]
  %s4 = inlined_call_operand.vmem [shape: f32[32,128], index: 4, kind: input, shape index: {}]
  %s5 = inlined_call_operand.hbm [shape: f32[1,128], index: 5, kind: input, shape index: {}]
  %s6 = inlined_call_operand.hbm [shape: f32[4,128], index: 6, kind: input, shape index: {}]
  %s7 = inlined_call_operand.vmem [shape: f32[32,128], index: 7, kind: input, shape index: {}]
  %s8 = inlined_call_operand.hbm [shape: f32[32,128], index: 8, kind: input, shape index: {}]
  %s9 = inlined_call_operand.hbm [shape: f32[1,128], index: 9, kind: input, shape index: {}]
  %s10 = inlined_call_operand.vmem [shape: f32[32,2], index: 10, kind: input, shape index: {}]
  %s11 = inlined_call_operand.vmem [shape: f32[1,2], index: 11, kind: input, shape index: {}]
  %s12 = inlined_call_operand.vmem [shape: f32[16,2], index: 12, kind: output, shape index: {}]
  %s13 = sld [smem:[#allocation0]]
  $region78: #{cpnn_columns_forward.1} parent=0
    _
  %s15 = ssub.s32 1, %s13
  %s16 = scalar_select 0, %s15, %s13
  $region1: #{cpnn_columns_forward.1} parent=0
    #allocation5 [shape = 'u8[2048]{0}', space=vmem, size = 0x800, scoped, tag = 'input window, operand 3, single buffered']
    #allocation6 [shape = 's32[1]{0}', space=sflag, size = 0x4, scoped, tag = 'scoped memory for cpnn_columns_forward.1']
    #allocation7 [shape = 'u8[512]{0}', space=vmem, size = 0x400, scoped, tag = 'input window, operand 5, single buffered']
    #allocation8 [shape = 's32[1]{0}', space=sflag, size = 0x4, scoped, tag = 'scoped memory for cpnn_columns_forward.1']
    #allocation9 [shape = 'u8[2048]{0}', space=vmem, size = 0x800, scoped, tag = 'input window, operand 6, single buffered']
    #allocation10 [shape = 'u8[16384]{0}', space=vmem, size = 0x4000, scoped, tag = 'input window, operand 8, single buffered']
    #allocation11 [shape = 's32[1]{0}', space=sflag, size = 0x4, scoped, tag = 'scoped memory for cpnn_columns_forward.1']
    #allocation12 [shape = 'u8[512]{0}', space=vmem, size = 0x400, scoped, tag = 'input window, operand 9, single buffered']
    %17 = vsyncpa [#allocation6], 0
    %18 = vsyncpa [#allocation8], 0
    %19 = vsyncpa [#allocation11], 0
    // Predicated region
    $region2: #{cpnn_columns_forward.1} parent=1 // pred_check
      _
    $region3: #{cpnn_columns_forward.1} parent=1 // pred_check_branch
      %21 = sbr.rel (0) target = $region5
    $region4: #{cpnn_columns_forward.1} parent=1 // pred_region
      _
    $region5: #{cpnn_columns_forward.1} parent=1 // pred_fallthru
      _
    // Predicated region
    $region6: #{cpnn_columns_forward.1} parent=1 // pred_check
      _
    $region7: #{cpnn_columns_forward.1} parent=1 // pred_check_branch
      %23 = sbr.rel (0) target = $region9
    $region8: #{cpnn_columns_forward.1} parent=1 // pred_region
      _
    $region9: #{cpnn_columns_forward.1} parent=1 // pred_fallthru
      _
    // Predicated region
    $region10: #{cpnn_columns_forward.1} parent=1 // pred_check
      _
    $region11: #{cpnn_columns_forward.1} parent=1 // pred_check_branch
      %25 = sbr.rel (0) target = $region13
    $region12: #{cpnn_columns_forward.1} parent=1 // pred_region
      _
    $region13: #{cpnn_columns_forward.1} parent=1 // pred_fallthru
      _
    // Predicated region
    $region14: #{cpnn_columns_forward.1} parent=1 // pred_check
      _
    $region15: #{cpnn_columns_forward.1} parent=1 // pred_check_branch
      %27 = sbr.rel (0) target = $region17
    $region16: #{cpnn_columns_forward.1} parent=1 // pred_region
      %s29 = ssub.s32 64, 64
      %30 = vsyncadd [#allocation6], %s29
      %s32 = sshll.u32 [#allocation5], 4
      %s33 = int_to_ptr.vmem [resolvable:$true] %s32
      %35 = dma.hbm_to_vmem [thread:$0]  %s3, 64, %s33, [#allocation6]
    $region17: #{cpnn_columns_forward.1} parent=1 // pred_fallthru
      _
    // Predicated region
    $region18: #{cpnn_columns_forward.1} parent=1 // pred_check
      _
    $region19: #{cpnn_columns_forward.1} parent=1 // pred_check_branch
      %37 = sbr.rel (0) target = $region21
    $region20: #{cpnn_columns_forward.1} parent=1 // pred_region
      _
    $region21: #{cpnn_columns_forward.1} parent=1 // pred_fallthru
      _
    // Predicated region
    $region22: #{cpnn_columns_forward.1} parent=1 // pred_check
      _
    $region23: #{cpnn_columns_forward.1} parent=1 // pred_check_branch
      %39 = sbr.rel (0) target = $region25
    $region24: #{cpnn_columns_forward.1} parent=1 // pred_region
      %s41 = ssub.s32 16, 16
      %42 = vsyncadd [#allocation8], %s41
      %s44 = sshll.u32 [#allocation7], 4
      %s45 = int_to_ptr.vmem [resolvable:$true] %s44
      %47 = dma.hbm_to_vmem [thread:$0]  %s5, 16, %s45, [#allocation8]
    $region25: #{cpnn_columns_forward.1} parent=1 // pred_fallthru
      _
    // Predicated region
    $region26: #{cpnn_columns_forward.1} parent=1 // pred_check
      _
    $region27: #{cpnn_columns_forward.1} parent=1 // pred_check_branch
      %49 = sbr.rel (0) target = $region29
    $region28: #{cpnn_columns_forward.1} parent=1 // pred_region
      %s51 = ssub.s32 64, 64
      %52 = vsyncadd [#allocation8], %s51
      %s54 = sshll.u32 [#allocation9], 4
      %s55 = int_to_ptr.vmem [resolvable:$true] %s54
      %57 = dma.hbm_to_vmem [thread:$0]  %s6, 64, %s55, [#allocation8]
    $region29: #{cpnn_columns_forward.1} parent=1 // pred_fallthru
      _
    // Predicated region
    $region30: #{cpnn_columns_forward.1} parent=1 // pred_check
      _
    $region31: #{cpnn_columns_forward.1} parent=1 // pred_check_branch
      %59 = sbr.rel (0) target = $region33
    $region32: #{cpnn_columns_forward.1} parent=1 // pred_region
      _
    $region33: #{cpnn_columns_forward.1} parent=1 // pred_fallthru
      _
    // Predicated region
    $region34: #{cpnn_columns_forward.1} parent=1 // pred_check
      _
    $region35: #{cpnn_columns_forward.1} parent=1 // pred_check_branch
      %61 = sbr.rel (0) target = $region37
    $region36: #{cpnn_columns_forward.1} parent=1 // pred_region
      %s63 = ssub.s32 512, 512
      %64 = vsyncadd [#allocation11], %s63
      %s65 = sshll.u32 [#allocation10], 4
      %s66 = int_to_ptr.vmem [resolvable:$true] %s65
      %71 = dma.hbm_to_vmem [thread:$0]  %s8, 512, %s66, [#allocation11], 128, 128, 8
    $region37: #{cpnn_columns_forward.1} parent=1 // pred_fallthru
      _
    // Predicated region
    $region38: #{cpnn_columns_forward.1} parent=1 // pred_check
      _
    $region39: #{cpnn_columns_forward.1} parent=1 // pred_check_branch
      %73 = sbr.rel (0) target = $region41
    $region40: #{cpnn_columns_forward.1} parent=1 // pred_region
      %s75 = ssub.s32 16, 16
      %76 = vsyncadd [#allocation11], %s75
      %s78 = sshll.u32 [#allocation12], 4
      %s79 = int_to_ptr.vmem [resolvable:$true] %s78
      %81 = dma.hbm_to_vmem [thread:$0]  %s9, 16, %s79, [#allocation11]
    $region41: #{cpnn_columns_forward.1} parent=1 // pred_fallthru
      _
    // Predicated region
    $region42: #{cpnn_columns_forward.1} parent=1 // pred_check
      _
    $region43: #{cpnn_columns_forward.1} parent=1 // pred_check_branch
      %83 = sbr.rel (0) target = $region45
    $region44: #{cpnn_columns_forward.1} parent=1 // pred_region
      _
    $region45: #{cpnn_columns_forward.1} parent=1 // pred_fallthru
      _
    // Predicated region
    $region46: #{cpnn_columns_forward.1} parent=1 // pred_check
      _
    $region47: #{cpnn_columns_forward.1} parent=1 // pred_check_branch
      %85 = sbr.rel (0) target = $region49
    $region48: #{cpnn_columns_forward.1} parent=1 // pred_region
      _
    $region49: #{cpnn_columns_forward.1} parent=1 // pred_fallthru
      _
    // Predicated region
    $region50: #{cpnn_columns_forward.1} parent=1 // pred_check
      _
    $region51: #{cpnn_columns_forward.1} parent=1 // pred_check_branch
      %87 = sbr.rel (0) target = $region53
    $region52: #{cpnn_columns_forward.1} parent=1 // pred_region
      %88 = dma.done [#allocation6], 64
    $region53: #{cpnn_columns_forward.1} parent=1 // pred_fallthru
      _
    // Predicated region
    $region54: #{cpnn_columns_forward.1} parent=1 // pred_check
      _
    $region55: #{cpnn_columns_forward.1} parent=1 // pred_check_branch
      %90 = sbr.rel (0) target = $region57
    $region56: #{cpnn_columns_forward.1} parent=1 // pred_region
      %91 = dma.done [#allocation8], 16
    $region57: #{cpnn_columns_forward.1} parent=1 // pred_fallthru
      _
    // Predicated region
    $region58: #{cpnn_columns_forward.1} parent=1 // pred_check
      _
    $region59: #{cpnn_columns_forward.1} parent=1 // pred_check_branch
      %93 = sbr.rel (0) target = $region61
    $region60: #{cpnn_columns_forward.1} parent=1 // pred_region
      %94 = dma.done [#allocation8], 64
    $region61: #{cpnn_columns_forward.1} parent=1 // pred_fallthru
      _
    // Predicated region
    $region62: #{cpnn_columns_forward.1} parent=1 // pred_check
      _
    $region63: #{cpnn_columns_forward.1} parent=1 // pred_check_branch
      %96 = sbr.rel (0) target = $region65
    $region64: #{cpnn_columns_forward.1} parent=1 // pred_region
      %97 = dma.done [#allocation11], 512
    $region65: #{cpnn_columns_forward.1} parent=1 // pred_fallthru
      _
    // Predicated region
    $region66: #{cpnn_columns_forward.1} parent=1 // pred_check
      _
    $region67: #{cpnn_columns_forward.1} parent=1 // pred_check_branch
      %99 = sbr.rel (0) target = $region69
    $region68: #{cpnn_columns_forward.1} parent=1 // pred_region
      %100 = dma.done [#allocation11], 16
    $region69: #{cpnn_columns_forward.1} parent=1 // pred_fallthru
      _
    %v101 = vld [vmem:[%s1] sm:$0xff]
    %v102 = vld [vmem:[%s1 + $0x8] sm:$0xff]
    %v103 = vld [vmem:[%s0] sm:$0xff]
    %v104 = vld [vmem:[%s0 + $0x8] sm:$0xff]
    %vm105 = vcmask 130048
    %v107 = vsel %vm105, %v101, 0
    %v110 = vsel %vm105, %v102, 0
    %112 = vmatprep.subr.mxu0 0.0
    %113 = vmatpush1.msra.mxu0 %v103
    %114 = vmatprep.subr.mxu0 0.0
    %115 = vmatpush1.msra.mxu0 %v104
    %116 = vmatprep.subr.mxu0 0.0
    %117 = vmatpush1.msra.mxu0 0.0
    %118 = vmatprep.subr.mxu0 0.0
    %119 = vmatpush1.msra.mxu0 0.0
    %120 = vmatprep.subr.mxu0 0.0
    %121 = vmatpush1.msra.mxu0 0.0
    %122 = vmatprep.subr.mxu0 0.0
    %123 = vmatpush1.msra.mxu0 0.0
    %124 = vmatprep.subr.mxu0 0.0
    %125 = vmatpush1.msra.mxu0 0.0
    %126 = vmatprep.subr.mxu0 0.0
    %127 = vmatpush1.msra.mxu0 0.0
    %128 = vmatprep.subr.mxu0 0.0
    %129 = vmatpush1.msra.mxu0 0.0
    %130 = vmatprep.subr.mxu0 0.0
    %131 = vmatpush1.msra.mxu0 0.0
    %132 = vmatprep.subr.mxu0 0.0
    %133 = vmatpush1.msra.mxu0 0.0
    %134 = vmatprep.subr.mxu0 0.0
    %135 = vmatpush1.msra.mxu0 0.0
    %136 = vmatprep.subr.mxu0 0.0
    %137 = vmatpush1.msra.mxu0 0.0
    %138 = vmatprep.subr.mxu0 0.0
    %139 = vmatpush1.msra.mxu0 0.0
    %140 = vmatprep.subr.mxu0 0.0
    %141 = vmatpush1.msra.mxu0 0.0
    %142 = vmatprep.subr.mxu0 0.0
    %143 = vmatpush1.msra.mxu0 0.0
    %144 = vmatprep.subr.mxu0 0.0
    %145 = vmatpush1.msra.mxu0 0.0
    %146 = vmatprep.subr.mxu0 0.0
    %147 = vmatpush1.msra.mxu0 0.0
    %148 = vmatprep.subr.mxu0 0.0
    %149 = vmatpush1.msra.mxu0 0.0
    %150 = vmatprep.subr.mxu0 0.0
    %151 = vmatpush1.msra.mxu0 0.0
    %152 = vmatprep.subr.mxu0 0.0
    %153 = vmatpush1.msra.mxu0 0.0
    %154 = vmatprep.subr.mxu0 0.0
    %155 = vmatpush1.msra.mxu0 0.0
    %156 = vmatprep.subr.mxu0 0.0
    %157 = vmatpush1.msra.mxu0 0.0
    %158 = vmatprep.subr.mxu0 0.0
    %159 = vmatpush1.msra.mxu0 0.0
    %160 = vmatprep.subr.mxu0 0.0
    %161 = vmatpush1.msra.mxu0 0.0
    %162 = vmatprep.subr.mxu0 0.0
    %163 = vmatpush1.msra.mxu0 0.0
    %164 = vmatprep.subr.mxu0 0.0
    %165 = vmatpush1.msra.mxu0 0.0
    %166 = vmatprep.subr.mxu0 0.0
    %167 = vmatpush1.msra.mxu0 0.0
    %168 = vmatprep.subr.mxu0 0.0
    %169 = vmatpush1.msra.mxu0 0.0
    %170 = vmatprep.subr.mxu0 0.0
    %171 = vmatpush1.msra.mxu0 0.0
    %172 = vmatprep.subr.mxu0 0.0
    %173 = vmatpush1.msra.mxu0 0.0
    %174 = vmatprep.subr.mxu0 0.0
    %175 = vmatpush1.msra.mxu0 0.0
    %176 = vmatprep.mubr.f32.mxu0 0.0
    %177 = vmatmul.mubr.f32.gmra.mrb[0].mxu0 %v107
    %v178 = vpop.f32.mrb[0].mxu0
    %v179 = vadd.f32 0.0, %v178
    %v180 = vpop.f32.mrb[0].mxu0
    %181 = vmatprep.mubr.f32.mxu0 0.0
    %182 = vmatmul.mubr.f32.gmra.mrb[0].mxu0 %v110
    %v183 = vpop.f32.mrb[0].mxu0
    %v184 = vadd.f32 0.0, %v183
    %v185 = vpop.f32.mrb[0].mxu0
    %186 = vdwg.mxu0
    %v187 = vld [vmem:[#allocation5] sm:$0xf]
    %v188 = vld [vmem:[#allocation7] sm:$0x1]
    %v190 = vlaneseq
    %v191 = vshrl.u32 %v190, 7
    %v192 = vsub.s32 0, %v191
    %v193 = vrot.slane %v188, %v192
    %vm195 = vcmask 31744
    %v197 = vsel %vm195, %v179, 0
    %v200 = vsel %vm195, %v184, 0
    %vm202 = vcmask 1043456
    %v204 = vsel %vm202, %v187, 0
    %206 = vmatprep.subr.mxu0 0.0
    %207 = vmatpush1.msra.mxu0 %v204
    %208 = vmatprep.subr.mxu0 0.0
    %209 = vmatpush1.msra.mxu0 0.0
    %210 = vmatprep.subr.mxu0 0.0
    %211 = vmatpush1.msra.mxu0 0.0
    %212 = vmatprep.subr.mxu0 0.0
    %213 = vmatpush1.msra.mxu0 0.0
    %214 = vmatprep.subr.mxu0 0.0
    %215 = vmatpush1.msra.mxu0 0.0
    %216 = vmatprep.subr.mxu0 0.0
    %217 = vmatpush1.msra.mxu0 0.0
    %218 = vmatprep.subr.mxu0 0.0
    %219 = vmatpush1.msra.mxu0 0.0
    %220 = vmatprep.subr.mxu0 0.0
    %221 = vmatpush1.msra.mxu0 0.0
    %222 = vmatprep.subr.mxu0 0.0
    %223 = vmatpush1.msra.mxu0 0.0
    %224 = vmatprep.subr.mxu0 0.0
    %225 = vmatpush1.msra.mxu0 0.0
    %226 = vmatprep.subr.mxu0 0.0
    %227 = vmatpush1.msra.mxu0 0.0
    %228 = vmatprep.subr.mxu0 0.0
    %229 = vmatpush1.msra.mxu0 0.0
    %230 = vmatprep.subr.mxu0 0.0
    %231 = vmatpush1.msra.mxu0 0.0
    %232 = vmatprep.subr.mxu0 0.0
    %233 = vmatpush1.msra.mxu0 0.0
    %234 = vmatprep.subr.mxu0 0.0
    %235 = vmatpush1.msra.mxu0 0.0
    %236 = vmatprep.subr.mxu0 0.0
    %237 = vmatpush1.msra.mxu0 0.0
    %238 = vmatprep.subr.mxu0 0.0
    %239 = vmatpush1.msra.mxu0 0.0
    %240 = vmatprep.subr.mxu0 0.0
    %241 = vmatpush1.msra.mxu0 0.0
    %242 = vmatprep.subr.mxu0 0.0
    %243 = vmatpush1.msra.mxu0 0.0
    %244 = vmatprep.subr.mxu0 0.0
    %245 = vmatpush1.msra.mxu0 0.0
    %246 = vmatprep.subr.mxu0 0.0
    %247 = vmatpush1.msra.mxu0 0.0
    %248 = vmatprep.subr.mxu0 0.0
    %249 = vmatpush1.msra.mxu0 0.0
    %250 = vmatprep.subr.mxu0 0.0
    %251 = vmatpush1.msra.mxu0 0.0
    %252 = vmatprep.subr.mxu0 0.0
    %253 = vmatpush1.msra.mxu0 0.0
    %254 = vmatprep.subr.mxu0 0.0
    %255 = vmatpush1.msra.mxu0 0.0
    %256 = vmatprep.subr.mxu0 0.0
    %257 = vmatpush1.msra.mxu0 0.0
    %258 = vmatprep.subr.mxu0 0.0
    %259 = vmatpush1.msra.mxu0 0.0
    %260 = vmatprep.subr.mxu0 0.0
    %261 = vmatpush1.msra.mxu0 0.0
    %262 = vmatprep.subr.mxu0 0.0
    %263 = vmatpush1.msra.mxu0 0.0
    %264 = vmatprep.subr.mxu0 0.0
    %265 = vmatpush1.msra.mxu0 0.0
    %266 = vmatprep.subr.mxu0 0.0
    %267 = vmatpush1.msra.mxu0 0.0
    %268 = vmatprep.subr.mxu0 0.0
    %269 = vmatpush1.msra.mxu0 0.0
    %270 = vmatprep.mubr.f32.mxu0 0.0
    %271 = vmatmul.mubr.f32.gmra.mrb[0].mxu0 %v197
    %v272 = vpop.f32.mrb[0].mxu0
    %v273 = vadd.f32 %v193, %v272
    %v274 = vpop.f32.mrb[0].mxu0
    %275 = vmatprep.mubr.f32.mxu0 0.0
    %276 = vmatmul.mubr.f32.gmra.mrb[0].mxu0 %v200
    %v277 = vpop.f32.mrb[0].mxu0
    %v278 = vadd.f32 %v193, %v277
    %v279 = vpop.f32.mrb[0].mxu0
    %280 = vdwg.mxu0
    %281 = vst [vmem:[#allocation2] sm:$0xff] %v273
    %282 = vst [vmem:[#allocation2 + $0x8] sm:$0xff] %v278
    %v283 = vld [vmem:[%s4] sm:$0xff]
    %v284 = vld [vmem:[%s4 + $0x8] sm:$0xff]
    %v285 = vld [vmem:[%s4 + $0x10] sm:$0xff]
    %v286 = vld [vmem:[%s4 + $0x18] sm:$0xff]
    %v287 = vld [vmem:[#allocation9] sm:$0xf]
    %v288 = vld [vmem:[#allocation12] sm:$0x1]
    %v290 = vlaneseq
    %v291 = vshrl.u32 %v290, 7
    %v292 = vsub.s32 0, %v291
    %v293 = vrot.slane %v288, %v292
    %v296 = vsel %vm202, %v287, 0
    %298 = vmatprep.subr.mxu0 0.0
    %299 = vmatpush1.msra.mxu0 %v296
    %300 = vmatprep.subr.mxu0 0.0
    %301 = vmatpush1.msra.mxu0 0.0
    %302 = vmatprep.subr.mxu0 0.0
    %303 = vmatpush1.msra.mxu0 0.0
    %304 = vmatprep.subr.mxu0 0.0
    %305 = vmatpush1.msra.mxu0 0.0
    %306 = vmatprep.subr.mxu0 0.0
    %307 = vmatpush1.msra.mxu0 0.0
    %308 = vmatprep.subr.mxu0 0.0
    %309 = vmatpush1.msra.mxu0 0.0
    %310 = vmatprep.subr.mxu0 0.0
    %311 = vmatpush1.msra.mxu0 0.0
    %312 = vmatprep.subr.mxu0 0.0
    %313 = vmatpush1.msra.mxu0 0.0
    %314 = vmatprep.subr.mxu0 0.0
    %315 = vmatpush1.msra.mxu0 0.0
    %316 = vmatprep.subr.mxu0 0.0
    %317 = vmatpush1.msra.mxu0 0.0
    %318 = vmatprep.subr.mxu0 0.0
    %319 = vmatpush1.msra.mxu0 0.0
    %320 = vmatprep.subr.mxu0 0.0
    %321 = vmatpush1.msra.mxu0 0.0
    %322 = vmatprep.subr.mxu0 0.0
    %323 = vmatpush1.msra.mxu0 0.0
    %324 = vmatprep.subr.mxu0 0.0
    %325 = vmatpush1.msra.mxu0 0.0
    %326 = vmatprep.subr.mxu0 0.0
    %327 = vmatpush1.msra.mxu0 0.0
    %328 = vmatprep.subr.mxu0 0.0
    %329 = vmatpush1.msra.mxu0 0.0
    %330 = vmatprep.subr.mxu0 0.0
    %331 = vmatpush1.msra.mxu0 0.0
    %332 = vmatprep.subr.mxu0 0.0
    %333 = vmatpush1.msra.mxu0 0.0
    %334 = vmatprep.subr.mxu0 0.0
    %335 = vmatpush1.msra.mxu0 0.0
    %336 = vmatprep.subr.mxu0 0.0
    %337 = vmatpush1.msra.mxu0 0.0
    %338 = vmatprep.subr.mxu0 0.0
    %339 = vmatpush1.msra.mxu0 0.0
    %340 = vmatprep.subr.mxu0 0.0
    %341 = vmatpush1.msra.mxu0 0.0
    %342 = vmatprep.subr.mxu0 0.0
    %343 = vmatpush1.msra.mxu0 0.0
    %344 = vmatprep.subr.mxu0 0.0
    %345 = vmatpush1.msra.mxu0 0.0
    %346 = vmatprep.subr.mxu0 0.0
    %347 = vmatpush1.msra.mxu0 0.0
    %348 = vmatprep.subr.mxu0 0.0
    %349 = vmatpush1.msra.mxu0 0.0
    %350 = vmatprep.subr.mxu0 0.0
    %351 = vmatpush1.msra.mxu0 0.0
    %352 = vmatprep.subr.mxu0 0.0
    %353 = vmatpush1.msra.mxu0 0.0
    %354 = vmatprep.subr.mxu0 0.0
    %355 = vmatpush1.msra.mxu0 0.0
    %356 = vmatprep.subr.mxu0 0.0
    %357 = vmatpush1.msra.mxu0 0.0
    %358 = vmatprep.subr.mxu0 0.0
    %359 = vmatpush1.msra.mxu0 0.0
    %360 = vmatprep.subr.mxu0 0.0
    %361 = vmatpush1.msra.mxu0 0.0
    %362 = vmatprep.mubr.f32.mxu0 0.0
    %363 = vmatmul.mubr.f32.gmra.mrb[0].mxu0 %v197
    %v364 = vpop.f32.mrb[0].mxu0
    %v365 = vadd.f32 %v293, %v364
    %v366 = vpop.f32.mrb[0].mxu0
    %367 = vmatprep.mubr.f32.mxu0 0.0
    %368 = vmatmul.mubr.f32.gmra.mrb[0].mxu0 %v200
    %v369 = vpop.f32.mrb[0].mxu0
    %v370 = vadd.f32 %v293, %v369
    %v371 = vpop.f32.mrb[0].mxu0
    %372 = vdwg.mxu0
    %373 = vst [vmem:[#allocation3] sm:$0xff] %v365
    %374 = vst [vmem:[#allocation3 + $0x8] sm:$0xff] %v370
    %v375 = vld [vmem:[#allocation10] sm:$0xff]
    %v376 = vld [vmem:[#allocation10 + $0x8] sm:$0xff]
    %v377 = vld [vmem:[#allocation10 + $0x10] sm:$0xff]
    %v378 = vld [vmem:[#allocation10 + $0x18] sm:$0xff]
    %v379 = vld [vmem:[%s7] sm:$0xff]
    %v380 = vld [vmem:[%s7 + $0x8] sm:$0xff]
    %v381 = vld [vmem:[%s7 + $0x10] sm:$0xff]
    %v382 = vld [vmem:[%s7 + $0x18] sm:$0xff]
    %v383 = vlaneseq
    %v384 = vand.u32 %v383, 127
    %vm385 = vcmp.ge.s32.totalorder %v384, 64
    %vm386 = vcmp.lt.s32.totalorder %v384, 96
    %vm387 = vmand %vm385, %vm386
    %v388 = vsel %vm387, 2.0, 1.0
    %v389 = vsel %vm387, 1.0, 0.0
    %v390 = vld [vmem:[#allocation2] sm:$0x3]
    %vm391 = vcmask 261120
    %v393 = vsel %vm391, 0.0, 0
    %395 = vmatprep.subr.mxu0 0.0
    %396 = vmatpush1.msra.mxu0 %v283
    %397 = vmatprep.subr.mxu0 0.0
    %398 = vmatpush1.msra.mxu0 %v284
    %399 = vmatprep.subr.mxu0 0.0
    %400 = vmatpush1.msra.mxu0 %v285
    %401 = vmatprep.subr.mxu0 0.0
    %402 = vmatpush1.msra.mxu0 %v286
    %403 = vmatprep.subr.mxu0 0.0
    %404 = vmatpush1.msra.mxu0 0.0
    %405 = vmatprep.subr.mxu0 0.0
    %406 = vmatpush1.msra.mxu0 0.0
    %407 = vmatprep.subr.mxu0 0.0
    %408 = vmatpush1.msra.mxu0 0.0
    %409 = vmatprep.subr.mxu0 0.0
    %410 = vmatpush1.msra.mxu0 0.0
    %411 = vmatprep.subr.mxu0 0.0
    %412 = vmatpush1.msra.mxu0 0.0
    %413 = vmatprep.subr.mxu0 0.0
    %414 = vmatpush1.msra.mxu0 0.0
    %415 = vmatprep.subr.mxu0 0.0
    %416 = vmatpush1.msra.mxu0 0.0
    %417 = vmatprep.subr.mxu0 0.0
    %418 = vmatpush1.msra.mxu0 0.0
    %419 = vmatprep.subr.mxu0 0.0
    %420 = vmatpush1.msra.mxu0 0.0
    %421 = vmatprep.subr.mxu0 0.0
    %422 = vmatpush1.msra.mxu0 0.0
    %423 = vmatprep.subr.mxu0 0.0
    %424 = vmatpush1.msra.mxu0 0.0
    %425 = vmatprep.subr.mxu0 0.0
    %426 = vmatpush1.msra.mxu0 0.0
    %427 = vmatprep.subr.mxu0 0.0
    %428 = vmatpush1.msra.mxu0 0.0
    %429 = vmatprep.subr.mxu0 0.0
    %430 = vmatpush1.msra.mxu0 0.0
    %431 = vmatprep.subr.mxu0 0.0
    %432 = vmatpush1.msra.mxu0 0.0
    %433 = vmatprep.subr.mxu0 0.0
    %434 = vmatpush1.msra.mxu0 0.0
    %435 = vmatprep.subr.mxu0 0.0
    %436 = vmatpush1.msra.mxu0 0.0
    %437 = vmatprep.subr.mxu0 0.0
    %438 = vmatpush1.msra.mxu0 0.0
    %439 = vmatprep.subr.mxu0 0.0
    %440 = vmatpush1.msra.mxu0 0.0
    %441 = vmatprep.subr.mxu0 0.0
    %442 = vmatpush1.msra.mxu0 0.0
    %443 = vmatprep.subr.mxu0 0.0
    %444 = vmatpush1.msra.mxu0 0.0
    %445 = vmatprep.subr.mxu0 0.0
    %446 = vmatpush1.msra.mxu0 0.0
    %447 = vmatprep.subr.mxu0 0.0
    %448 = vmatpush1.msra.mxu0 0.0
    %449 = vmatprep.subr.mxu0 0.0
    %450 = vmatpush1.msra.mxu0 0.0
    %451 = vmatprep.subr.mxu0 0.0
    %452 = vmatpush1.msra.mxu0 0.0
    %453 = vmatprep.subr.mxu0 0.0
    %454 = vmatpush1.msra.mxu0 0.0
    %455 = vmatprep.subr.mxu0 0.0
    %456 = vmatpush1.msra.mxu0 0.0
    %457 = vmatprep.subr.mxu0 0.0
    %458 = vmatpush1.msra.mxu0 0.0
    %459 = vmatprep.mubr.f32.mxu0 0.0
    %460 = vmatmul.mubr.f32.gmra.mrb[0].mxu0 %v393
    %v461 = vpop.f32.mrb[0].mxu0
    %v462 = vadd.f32 0.0, %v461
    %v463 = vpop.f32.mrb[0].mxu0
    %464 = vdwg.mxu0
    %v465 = vadd.f32 %v390, %v462
    %v466 = vmul.f32 %v465, %v388
    %v467 = vxor.u32 %v466, 2147483648
    %v468 = vmul.f32 %v467, 1.442695
    %v469 = vpow.pop %v468
    %v470 = vadd.f32 %v469, 1.0
    %v471 = vrcp.pop %v470
    %v472 = vmul.f32 1.0, %v471
    %v473 = vmul.f32 %v472, %v388
    %v474 = vsub.f32 %v473, %v389
    %v475 = vmul.f32 %v474, 0.0
    %477 = vrot.lane.b32.xlu0 %v474, 64
    %v478 = vpop.permute.xlu0 %477
    %v480 = vmul.f32 %v474, %v478
    %482 = vrot.lane.b32.xlu0 %v480, 32
    %v483 = vpop.permute.xlu0 %482
    %v485 = vadd.f32 %v475, %v483
    %v486 = vtanh.pop %v485
    %488 = vrot.lane.b32.xlu0 %v486, 64
    %v489 = vpop.permute.xlu0 %488
    %v491 = vmul.f32 %v474, %v489
    %v492 = vld [vmem:[#allocation3] sm:$0x3]
    %494 = vrot.lane.b32.xlu0 %v491, 32
    %v495 = vpop.permute.xlu0 %494
    %v496 = vsel %vm391, %v495, 0
    %498 = vmatprep.subr.mxu0 0.0
    %499 = vmatpush1.msra.mxu0 %v379
    %500 = vmatprep.subr.mxu0 0.0
    %501 = vmatpush1.msra.mxu0 %v380
    %502 = vmatprep.subr.mxu0 0.0
    %503 = vmatpush1.msra.mxu0 %v381
    %504 = vmatprep.subr.mxu0 0.0
    %505 = vmatpush1.msra.mxu0 %v382
    %506 = vmatprep.subr.mxu0 0.0
    %507 = vmatpush1.msra.mxu0 0.0
    %508 = vmatprep.subr.mxu0 0.0
    %509 = vmatpush1.msra.mxu0 0.0
    %510 = vmatprep.subr.mxu0 0.0
    %511 = vmatpush1.msra.mxu0 0.0
    %512 = vmatprep.subr.mxu0 0.0
    %513 = vmatpush1.msra.mxu0 0.0
    %514 = vmatprep.subr.mxu0 0.0
    %515 = vmatpush1.msra.mxu0 0.0
    %516 = vmatprep.subr.mxu0 0.0
    %517 = vmatpush1.msra.mxu0 0.0
    %518 = vmatprep.subr.mxu0 0.0
    %519 = vmatpush1.msra.mxu0 0.0
    %520 = vmatprep.subr.mxu0 0.0
    %521 = vmatpush1.msra.mxu0 0.0
    %522 = vmatprep.subr.mxu0 0.0
    %523 = vmatpush1.msra.mxu0 0.0
    %524 = vmatprep.subr.mxu0 0.0
    %525 = vmatpush1.msra.mxu0 0.0
    %526 = vmatprep.subr.mxu0 0.0
    %527 = vmatpush1.msra.mxu0 0.0
    %528 = vmatprep.subr.mxu0 0.0
    %529 = vmatpush1.msra.mxu0 0.0
    %530 = vmatprep.subr.mxu0 0.0
    %531 = vmatpush1.msra.mxu0 0.0
    %532 = vmatprep.subr.mxu0 0.0
    %533 = vmatpush1.msra.mxu0 0.0
    %534 = vmatprep.subr.mxu0 0.0
    %535 = vmatpush1.msra.mxu0 0.0
    %536 = vmatprep.subr.mxu0 0.0
    %537 = vmatpush1.msra.mxu0 0.0
    %538 = vmatprep.subr.mxu0 0.0
    %539 = vmatpush1.msra.mxu0 0.0
    %540 = vmatprep.subr.mxu0 0.0
    %541 = vmatpush1.msra.mxu0 0.0
    %542 = vmatprep.subr.mxu0 0.0
    %543 = vmatpush1.msra.mxu0 0.0
    %544 = vmatprep.subr.mxu0 0.0
    %545 = vmatpush1.msra.mxu0 0.0
    %546 = vmatprep.subr.mxu0 0.0
    %547 = vmatpush1.msra.mxu0 0.0
    %548 = vmatprep.subr.mxu0 0.0
    %549 = vmatpush1.msra.mxu0 0.0
    %550 = vmatprep.subr.mxu0 0.0
    %551 = vmatpush1.msra.mxu0 0.0
    %552 = vmatprep.subr.mxu0 0.0
    %553 = vmatpush1.msra.mxu0 0.0
    %554 = vmatprep.subr.mxu0 0.0
    %555 = vmatpush1.msra.mxu0 0.0
    %556 = vmatprep.subr.mxu0 0.0
    %557 = vmatpush1.msra.mxu0 0.0
    %558 = vmatprep.subr.mxu0 0.0
    %559 = vmatpush1.msra.mxu0 0.0
    %560 = vmatprep.subr.mxu0 0.0
    %561 = vmatpush1.msra.mxu0 0.0
    %562 = vmatprep.mubr.f32.mxu0 0.0
    %563 = vmatmul.mubr.f32.gmra.mrb[0].mxu0 %v496
    %v564 = vpop.f32.mrb[0].mxu0
    %v565 = vadd.f32 0.0, %v564
    %v566 = vpop.f32.mrb[0].mxu0
    %567 = vdwg.mxu0
    %v568 = vadd.f32 %v492, %v565
    %569 = vmatprep.subr.mxu0 0.0
    %570 = vmatpush1.msra.mxu0 %v375
    %571 = vmatprep.subr.mxu0 0.0
    %572 = vmatpush1.msra.mxu0 %v376
    %573 = vmatprep.subr.mxu0 0.0
    %574 = vmatpush1.msra.mxu0 %v377
    %575 = vmatprep.subr.mxu0 0.0
    %576 = vmatpush1.msra.mxu0 %v378
    %577 = vmatprep.subr.mxu0 0.0
    %578 = vmatpush1.msra.mxu0 0.0
    %579 = vmatprep.subr.mxu0 0.0
    %580 = vmatpush1.msra.mxu0 0.0
    %581 = vmatprep.subr.mxu0 0.0
    %582 = vmatpush1.msra.mxu0 0.0
    %583 = vmatprep.subr.mxu0 0.0
    %584 = vmatpush1.msra.mxu0 0.0
    %585 = vmatprep.subr.mxu0 0.0
    %586 = vmatpush1.msra.mxu0 0.0
    %587 = vmatprep.subr.mxu0 0.0
    %588 = vmatpush1.msra.mxu0 0.0
    %589 = vmatprep.subr.mxu0 0.0
    %590 = vmatpush1.msra.mxu0 0.0
    %591 = vmatprep.subr.mxu0 0.0
    %592 = vmatpush1.msra.mxu0 0.0
    %593 = vmatprep.subr.mxu0 0.0
    %594 = vmatpush1.msra.mxu0 0.0
    %595 = vmatprep.subr.mxu0 0.0
    %596 = vmatpush1.msra.mxu0 0.0
    %597 = vmatprep.subr.mxu0 0.0
    %598 = vmatpush1.msra.mxu0 0.0
    %599 = vmatprep.subr.mxu0 0.0
    %600 = vmatpush1.msra.mxu0 0.0
    %601 = vmatprep.subr.mxu0 0.0
    %602 = vmatpush1.msra.mxu0 0.0
    %603 = vmatprep.subr.mxu0 0.0
    %604 = vmatpush1.msra.mxu0 0.0
    %605 = vmatprep.subr.mxu0 0.0
    %606 = vmatpush1.msra.mxu0 0.0
    %607 = vmatprep.subr.mxu0 0.0
    %608 = vmatpush1.msra.mxu0 0.0
    %609 = vmatprep.subr.mxu0 0.0
    %610 = vmatpush1.msra.mxu0 0.0
    %611 = vmatprep.subr.mxu0 0.0
    %612 = vmatpush1.msra.mxu0 0.0
    %613 = vmatprep.subr.mxu0 0.0
    %614 = vmatpush1.msra.mxu0 0.0
    %615 = vmatprep.subr.mxu0 0.0
    %616 = vmatpush1.msra.mxu0 0.0
    %617 = vmatprep.subr.mxu0 0.0
    %618 = vmatpush1.msra.mxu0 0.0
    %619 = vmatprep.subr.mxu0 0.0
    %620 = vmatpush1.msra.mxu0 0.0
    %621 = vmatprep.subr.mxu0 0.0
    %622 = vmatpush1.msra.mxu0 0.0
    %623 = vmatprep.subr.mxu0 0.0
    %624 = vmatpush1.msra.mxu0 0.0
    %625 = vmatprep.subr.mxu0 0.0
    %626 = vmatpush1.msra.mxu0 0.0
    %627 = vmatprep.subr.mxu0 0.0
    %628 = vmatpush1.msra.mxu0 0.0
    %629 = vmatprep.subr.mxu0 0.0
    %630 = vmatpush1.msra.mxu0 0.0
    %631 = vmatprep.subr.mxu0 0.0
    %632 = vmatpush1.msra.mxu0 0.0
    %633 = vmatprep.mubr.f32.mxu0 0.0
    %634 = vmatmul.mubr.f32.gmra.mrb[0].mxu0 %v393
    %v635 = vpop.f32.mrb[0].mxu0
    %v636 = vadd.f32 0.0, %v635
    %v637 = vpop.f32.mrb[0].mxu0
    %638 = vdwg.mxu0
    %v639 = vadd.f32 %v568, %v636
    %v640 = vmul.f32 %v639, %v388
    %v641 = vxor.u32 %v640, 2147483648
    %v642 = vmul.f32 %v641, 1.442695
    %v643 = vpow.pop %v642
    %v644 = vadd.f32 %v643, 1.0
    %v645 = vrcp.pop %v644
    %v646 = vmul.f32 1.0, %v645
    %v647 = vmul.f32 %v646, %v388
    %v648 = vsub.f32 %v647, %v389
    %v649 = vmul.f32 %v648, 0.0
    %651 = vrot.lane.b32.xlu0 %v648, 64
    %v652 = vpop.permute.xlu0 %651
    %v654 = vmul.f32 %v648, %v652
    %656 = vrot.lane.b32.xlu0 %v654, 32
    %v657 = vpop.permute.xlu0 %656
    %v659 = vadd.f32 %v649, %v657
    %v660 = vtanh.pop %v659
    %662 = vrot.lane.b32.xlu0 %v660, 64
    %v663 = vpop.permute.xlu0 %662
    %v665 = vmul.f32 %v648, %v663
    %667 = vrot.lane.b32.xlu0 %v665, 32
    %v668 = vpop.permute.xlu0 %667
    %vm670 = vcmask 254976
    %671 = vst.msk [vmem:[#allocation4] sm:$0x3] %vm670, %v668
    %v672 = vld [vmem:[#allocation2 + $0x2] sm:$0x3]
    %673 = vmatprep.subr.mxu0 0.0
    %674 = vmatpush1.msra.mxu0 %v283
    %675 = vmatprep.subr.mxu0 0.0
    %676 = vmatpush1.msra.mxu0 %v284
    %677 = vmatprep.subr.mxu0 0.0
    %678 = vmatpush1.msra.mxu0 %v285
    %679 = vmatprep.subr.mxu0 0.0
    %680 = vmatpush1.msra.mxu0 %v286
    %681 = vmatprep.subr.mxu0 0.0
    %682 = vmatpush1.msra.mxu0 0.0
    %683 = vmatprep.subr.mxu0 0.0
    %684 = vmatpush1.msra.mxu0 0.0
    %685 = vmatprep.subr.mxu0 0.0
    %686 = vmatpush1.msra.mxu0 0.0
    %687 = vmatprep.subr.mxu0 0.0
    %688 = vmatpush1.msra.mxu0 0.0
    %689 = vmatprep.subr.mxu0 0.0
    %690 = vmatpush1.msra.mxu0 0.0
    %691 = vmatprep.subr.mxu0 0.0
    %692 = vmatpush1.msra.mxu0 0.0
    %693 = vmatprep.subr.mxu0 0.0
    %694 = vmatpush1.msra.mxu0 0.0
    %695 = vmatprep.subr.mxu0 0.0
    %696 = vmatpush1.msra.mxu0 0.0
    %697 = vmatprep.subr.mxu0 0.0
    %698 = vmatpush1.msra.mxu0 0.0
    %699 = vmatprep.subr.mxu0 0.0
    %700 = vmatpush1.msra.mxu0 0.0
    %701 = vmatprep.subr.mxu0 0.0
    %702 = vmatpush1.msra.mxu0 0.0
    %703 = vmatprep.subr.mxu0 0.0
    %704 = vmatpush1.msra.mxu0 0.0
    %705 = vmatprep.subr.mxu0 0.0
    %706 = vmatpush1.msra.mxu0 0.0
    %707 = vmatprep.subr.mxu0 0.0
    %708 = vmatpush1.msra.mxu0 0.0
    %709 = vmatprep.subr.mxu0 0.0
    %710 = vmatpush1.msra.mxu0 0.0
    %711 = vmatprep.subr.mxu0 0.0
    %712 = vmatpush1.msra.mxu0 0.0
    %713 = vmatprep.subr.mxu0 0.0
    %714 = vmatpush1.msra.mxu0 0.0
    %715 = vmatprep.subr.mxu0 0.0
    %716 = vmatpush1.msra.mxu0 0.0
    %717 = vmatprep.subr.mxu0 0.0
    %718 = vmatpush1.msra.mxu0 0.0
    %719 = vmatprep.subr.mxu0 0.0
    %720 = vmatpush1.msra.mxu0 0.0
    %721 = vmatprep.subr.mxu0 0.0
    %722 = vmatpush1.msra.mxu0 0.0
    %723 = vmatprep.subr.mxu0 0.0
    %724 = vmatpush1.msra.mxu0 0.0
    %725 = vmatprep.subr.mxu0 0.0
    %726 = vmatpush1.msra.mxu0 0.0
    %727 = vmatprep.subr.mxu0 0.0
    %728 = vmatpush1.msra.mxu0 0.0
    %729 = vmatprep.subr.mxu0 0.0
    %730 = vmatpush1.msra.mxu0 0.0
    %731 = vmatprep.subr.mxu0 0.0
    %732 = vmatpush1.msra.mxu0 0.0
    %733 = vmatprep.subr.mxu0 0.0
    %734 = vmatpush1.msra.mxu0 0.0
    %735 = vmatprep.subr.mxu0 0.0
    %736 = vmatpush1.msra.mxu0 0.0
    %737 = vmatprep.mubr.f32.mxu0 0.0
    %738 = vmatmul.mubr.f32.gmra.mrb[0].mxu0 %v496
    %v739 = vpop.f32.mrb[0].mxu0
    %v740 = vadd.f32 0.0, %v739
    %v741 = vpop.f32.mrb[0].mxu0
    %742 = vdwg.mxu0
    %v743 = vadd.f32 %v672, %v740
    %v744 = vmul.f32 %v743, %v388
    %v745 = vxor.u32 %v744, 2147483648
    %v746 = vmul.f32 %v745, 1.442695
    %v747 = vpow.pop %v746
    %v748 = vadd.f32 %v747, 1.0
    %v749 = vrcp.pop %v748
    %v750 = vmul.f32 1.0, %v749
    %v751 = vmul.f32 %v750, %v388
    %v752 = vsub.f32 %v751, %v389
    %v753 = vmul.f32 %v752, %v485
    %755 = vrot.lane.b32.xlu0 %v752, 64
    %v756 = vpop.permute.xlu0 %755
    %v758 = vmul.f32 %v752, %v756
    %760 = vrot.lane.b32.xlu0 %v758, 32
    %v761 = vpop.permute.xlu0 %760
    %v763 = vadd.f32 %v753, %v761
    %v764 = vtanh.pop %v763
    %766 = vrot.lane.b32.xlu0 %v764, 64
    %v767 = vpop.permute.xlu0 %766
    %v769 = vmul.f32 %v752, %v767
    %v770 = vld [vmem:[#allocation3 + $0x2] sm:$0x3]
    %772 = vrot.lane.b32.xlu0 %v769, 32
    %v773 = vpop.permute.xlu0 %772
    %v774 = vsel %vm391, %v773, 0
    %776 = vmatprep.subr.mxu0 0.0
    %777 = vmatpush1.msra.mxu0 %v379
    %778 = vmatprep.subr.mxu0 0.0
    %779 = vmatpush1.msra.mxu0 %v380
    %780 = vmatprep.subr.mxu0 0.0
    %781 = vmatpush1.msra.mxu0 %v381
    %782 = vmatprep.subr.mxu0 0.0
    %783 = vmatpush1.msra.mxu0 %v382
    %784 = vmatprep.subr.mxu0 0.0
    %785 = vmatpush1.msra.mxu0 0.0
    %786 = vmatprep.subr.mxu0 0.0
    %787 = vmatpush1.msra.mxu0 0.0
    %788 = vmatprep.subr.mxu0 0.0
    %789 = vmatpush1.msra.mxu0 0.0
    %790 = vmatprep.subr.mxu0 0.0
    %791 = vmatpush1.msra.mxu0 0.0
    %792 = vmatprep.subr.mxu0 0.0
    %793 = vmatpush1.msra.mxu0 0.0
    %794 = vmatprep.subr.mxu0 0.0
    %795 = vmatpush1.msra.mxu0 0.0
    %796 = vmatprep.subr.mxu0 0.0
    %797 = vmatpush1.msra.mxu0 0.0
    %798 = vmatprep.subr.mxu0 0.0
    %799 = vmatpush1.msra.mxu0 0.0
    %800 = vmatprep.subr.mxu0 0.0
    %801 = vmatpush1.msra.mxu0 0.0
    %802 = vmatprep.subr.mxu0 0.0
    %803 = vmatpush1.msra.mxu0 0.0
    %804 = vmatprep.subr.mxu0 0.0
    %805 = vmatpush1.msra.mxu0 0.0
    %806 = vmatprep.subr.mxu0 0.0
    %807 = vmatpush1.msra.mxu0 0.0
    %808 = vmatprep.subr.mxu0 0.0
    %809 = vmatpush1.msra.mxu0 0.0
    %810 = vmatprep.subr.mxu0 0.0
    %811 = vmatpush1.msra.mxu0 0.0
    %812 = vmatprep.subr.mxu0 0.0
    %813 = vmatpush1.msra.mxu0 0.0
    %814 = vmatprep.subr.mxu0 0.0
    %815 = vmatpush1.msra.mxu0 0.0
    %816 = vmatprep.subr.mxu0 0.0
    %817 = vmatpush1.msra.mxu0 0.0
    %818 = vmatprep.subr.mxu0 0.0
    %819 = vmatpush1.msra.mxu0 0.0
    %820 = vmatprep.subr.mxu0 0.0
    %821 = vmatpush1.msra.mxu0 0.0
    %822 = vmatprep.subr.mxu0 0.0
    %823 = vmatpush1.msra.mxu0 0.0
    %824 = vmatprep.subr.mxu0 0.0
    %825 = vmatpush1.msra.mxu0 0.0
    %826 = vmatprep.subr.mxu0 0.0
    %827 = vmatpush1.msra.mxu0 0.0
    %828 = vmatprep.subr.mxu0 0.0
    %829 = vmatpush1.msra.mxu0 0.0
    %830 = vmatprep.subr.mxu0 0.0
    %831 = vmatpush1.msra.mxu0 0.0
    %832 = vmatprep.subr.mxu0 0.0
    %833 = vmatpush1.msra.mxu0 0.0
    %834 = vmatprep.subr.mxu0 0.0
    %835 = vmatpush1.msra.mxu0 0.0
    %836 = vmatprep.subr.mxu0 0.0
    %837 = vmatpush1.msra.mxu0 0.0
    %838 = vmatprep.subr.mxu0 0.0
    %839 = vmatpush1.msra.mxu0 0.0
    %840 = vmatprep.mubr.f32.mxu0 0.0
    %841 = vmatmul.mubr.f32.gmra.mrb[0].mxu0 %v774
    %v842 = vpop.f32.mrb[0].mxu0
    %v843 = vadd.f32 0.0, %v842
    %v844 = vpop.f32.mrb[0].mxu0
    %845 = vdwg.mxu0
    %v846 = vadd.f32 %v770, %v843
    %v847 = vsel %vm391, %v668, 0
    %849 = vmatprep.subr.mxu0 0.0
    %850 = vmatpush1.msra.mxu0 %v375
    %851 = vmatprep.subr.mxu0 0.0
    %852 = vmatpush1.msra.mxu0 %v376
    %853 = vmatprep.subr.mxu0 0.0
    %854 = vmatpush1.msra.mxu0 %v377
    %855 = vmatprep.subr.mxu0 0.0
    %856 = vmatpush1.msra.mxu0 %v378
    %857 = vmatprep.subr.mxu0 0.0
    %858 = vmatpush1.msra.mxu0 0.0
    %859 = vmatprep.subr.mxu0 0.0
    %860 = vmatpush1.msra.mxu0 0.0
    %861 = vmatprep.subr.mxu0 0.0
    %862 = vmatpush1.msra.mxu0 0.0
    %863 = vmatprep.subr.mxu0 0.0
    %864 = vmatpush1.msra.mxu0 0.0
    %865 = vmatprep.subr.mxu0 0.0
    %866 = vmatpush1.msra.mxu0 0.0
    %867 = vmatprep.subr.mxu0 0.0
    %868 = vmatpush1.msra.mxu0 0.0
    %869 = vmatprep.subr.mxu0 0.0
    %870 = vmatpush1.msra.mxu0 0.0
    %871 = vmatprep.subr.mxu0 0.0
    %872 = vmatpush1.msra.mxu0 0.0
    %873 = vmatprep.subr.mxu0 0.0
    %874 = vmatpush1.msra.mxu0 0.0
    %875 = vmatprep.subr.mxu0 0.0
    %876 = vmatpush1.msra.mxu0 0.0
    %877 = vmatprep.subr.mxu0 0.0
    %878 = vmatpush1.msra.mxu0 0.0
    %879 = vmatprep.subr.mxu0 0.0
    %880 = vmatpush1.msra.mxu0 0.0
    %881 = vmatprep.subr.mxu0 0.0
    %882 = vmatpush1.msra.mxu0 0.0
    %883 = vmatprep.subr.mxu0 0.0
    %884 = vmatpush1.msra.mxu0 0.0
    %885 = vmatprep.subr.mxu0 0.0
    %886 = vmatpush1.msra.mxu0 0.0
    %887 = vmatprep.subr.mxu0 0.0
    %888 = vmatpush1.msra.mxu0 0.0
    %889 = vmatprep.subr.mxu0 0.0
    %890 = vmatpush1.msra.mxu0 0.0
    %891 = vmatprep.subr.mxu0 0.0
    %892 = vmatpush1.msra.mxu0 0.0
    %893 = vmatprep.subr.mxu0 0.0
    %894 = vmatpush1.msra.mxu0 0.0
    %895 = vmatprep.subr.mxu0 0.0
    %896 = vmatpush1.msra.mxu0 0.0
    %897 = vmatprep.subr.mxu0 0.0
    %898 = vmatpush1.msra.mxu0 0.0
    %899 = vmatprep.subr.mxu0 0.0
    %900 = vmatpush1.msra.mxu0 0.0
    %901 = vmatprep.subr.mxu0 0.0
    %902 = vmatpush1.msra.mxu0 0.0
    %903 = vmatprep.subr.mxu0 0.0
    %904 = vmatpush1.msra.mxu0 0.0
    %905 = vmatprep.subr.mxu0 0.0
    %906 = vmatpush1.msra.mxu0 0.0
    %907 = vmatprep.subr.mxu0 0.0
    %908 = vmatpush1.msra.mxu0 0.0
    %909 = vmatprep.subr.mxu0 0.0
    %910 = vmatpush1.msra.mxu0 0.0
    %911 = vmatprep.subr.mxu0 0.0
    %912 = vmatpush1.msra.mxu0 0.0
    %913 = vmatprep.mubr.f32.mxu0 0.0
    %914 = vmatmul.mubr.f32.gmra.mrb[0].mxu0 %v847
    %v915 = vpop.f32.mrb[0].mxu0
    %v916 = vadd.f32 0.0, %v915
    %v917 = vpop.f32.mrb[0].mxu0
    %918 = vdwg.mxu0
    %v919 = vadd.f32 %v846, %v916
    %v920 = vmul.f32 %v919, %v388
    %v921 = vxor.u32 %v920, 2147483648
    %v922 = vmul.f32 %v921, 1.442695
    %v923 = vpow.pop %v922
    %v924 = vadd.f32 %v923, 1.0
    %v925 = vrcp.pop %v924
    %v926 = vmul.f32 1.0, %v925
    %v927 = vmul.f32 %v926, %v388
    %v928 = vsub.f32 %v927, %v389
    %v929 = vmul.f32 %v928, %v659
    %931 = vrot.lane.b32.xlu0 %v928, 64
    %v932 = vpop.permute.xlu0 %931
    %v934 = vmul.f32 %v928, %v932
    %936 = vrot.lane.b32.xlu0 %v934, 32
    %v937 = vpop.permute.xlu0 %936
    %v939 = vadd.f32 %v929, %v937
    %v940 = vtanh.pop %v939
    %942 = vrot.lane.b32.xlu0 %v940, 64
    %v943 = vpop.permute.xlu0 %942
    %v945 = vmul.f32 %v928, %v943
    %947 = vrot.lane.b32.xlu0 %v945, 32
    %v948 = vpop.permute.xlu0 %947
    %950 = vst.msk [vmem:[#allocation4 + $0x2] sm:$0x3] %vm670, %v948
    %v951 = vld [vmem:[#allocation2 + $0x4] sm:$0x3]
    %952 = vmatprep.subr.mxu0 0.0
    %953 = vmatpush1.msra.mxu0 %v283
    %954 = vmatprep.subr.mxu0 0.0
    %955 = vmatpush1.msra.mxu0 %v284
    %956 = vmatprep.subr.mxu0 0.0
    %957 = vmatpush1.msra.mxu0 %v285
    %958 = vmatprep.subr.mxu0 0.0
    %959 = vmatpush1.msra.mxu0 %v286
    %960 = vmatprep.subr.mxu0 0.0
    %961 = vmatpush1.msra.mxu0 0.0
    %962 = vmatprep.subr.mxu0 0.0
    %963 = vmatpush1.msra.mxu0 0.0
    %964 = vmatprep.subr.mxu0 0.0
    %965 = vmatpush1.msra.mxu0 0.0
    %966 = vmatprep.subr.mxu0 0.0
    %967 = vmatpush1.msra.mxu0 0.0
    %968 = vmatprep.subr.mxu0 0.0
    %969 = vmatpush1.msra.mxu0 0.0
    %970 = vmatprep.subr.mxu0 0.0
    %971 = vmatpush1.msra.mxu0 0.0
    %972 = vmatprep.subr.mxu0 0.0
    %973 = vmatpush1.msra.mxu0 0.0
    %974 = vmatprep.subr.mxu0 0.0
    %975 = vmatpush1.msra.mxu0 0.0
    %976 = vmatprep.subr.mxu0 0.0
    %977 = vmatpush1.msra.mxu0 0.0
    %978 = vmatprep.subr.mxu0 0.0
    %979 = vmatpush1.msra.mxu0 0.0
    %980 = vmatprep.subr.mxu0 0.0
    %981 = vmatpush1.msra.mxu0 0.0
    %982 = vmatprep.subr.mxu0 0.0
    %983 = vmatpush1.msra.mxu0 0.0
    %984 = vmatprep.subr.mxu0 0.0
    %985 = vmatpush1.msra.mxu0 0.0
    %986 = vmatprep.subr.mxu0 0.0
    %987 = vmatpush1.msra.mxu0 0.0
    %988 = vmatprep.subr.mxu0 0.0
    %989 = vmatpush1.msra.mxu0 0.0
    %990 = vmatprep.subr.mxu0 0.0
    %991 = vmatpush1.msra.mxu0 0.0
    %992 = vmatprep.subr.mxu0 0.0
    %993 = vmatpush1.msra.mxu0 0.0
    %994 = vmatprep.subr.mxu0 0.0
    %995 = vmatpush1.msra.mxu0 0.0
    %996 = vmatprep.subr.mxu0 0.0
    %997 = vmatpush1.msra.mxu0 0.0
    %998 = vmatprep.subr.mxu0 0.0
    %999 = vmatpush1.msra.mxu0 0.0
    %1000 = vmatprep.subr.mxu0 0.0
    %1001 = vmatpush1.msra.mxu0 0.0
    %1002 = vmatprep.subr.mxu0 0.0
    %1003 = vmatpush1.msra.mxu0 0.0
    %1004 = vmatprep.subr.mxu0 0.0
    %1005 = vmatpush1.msra.mxu0 0.0
    %1006 = vmatprep.subr.mxu0 0.0
    %1007 = vmatpush1.msra.mxu0 0.0
    %1008 = vmatprep.subr.mxu0 0.0
    %1009 = vmatpush1.msra.mxu0 0.0
    %1010 = vmatprep.subr.mxu0 0.0
    %1011 = vmatpush1.msra.mxu0 0.0
    %1012 = vmatprep.subr.mxu0 0.0
    %1013 = vmatpush1.msra.mxu0 0.0
    %1014 = vmatprep.subr.mxu0 0.0
    %1015 = vmatpush1.msra.mxu0 0.0
    %1016 = vmatprep.mubr.f32.mxu0 0.0
    %1017 = vmatmul.mubr.f32.gmra.mrb[0].mxu0 %v774
    %v1018 = vpop.f32.mrb[0].mxu0
    %v1019 = vadd.f32 0.0, %v1018
    %v1020 = vpop.f32.mrb[0].mxu0
    %1021 = vdwg.mxu0
    %v1022 = vadd.f32 %v951, %v1019
    %v1023 = vmul.f32 %v1022, %v388
    %v1024 = vxor.u32 %v1023, 2147483648
    %v1025 = vmul.f32 %v1024, 1.442695
    %v1026 = vpow.pop %v1025
    %v1027 = vadd.f32 %v1026, 1.0
    %v1028 = vrcp.pop %v1027
    %v1029 = vmul.f32 1.0, %v1028
    %v1030 = vmul.f32 %v1029, %v388
    %v1031 = vsub.f32 %v1030, %v389
    %v1032 = vmul.f32 %v1031, %v763
    %1034 = vrot.lane.b32.xlu0 %v1031, 64
    %v1035 = vpop.permute.xlu0 %1034
    %v1037 = vmul.f32 %v1031, %v1035
    %1039 = vrot.lane.b32.xlu0 %v1037, 32
    %v1040 = vpop.permute.xlu0 %1039
    %v1042 = vadd.f32 %v1032, %v1040
    %v1043 = vtanh.pop %v1042
    %1045 = vrot.lane.b32.xlu0 %v1043, 64
    %v1046 = vpop.permute.xlu0 %1045
    %v1048 = vmul.f32 %v1031, %v1046
    %v1049 = vld [vmem:[#allocation3 + $0x4] sm:$0x3]
    %1051 = vrot.lane.b32.xlu0 %v1048, 32
    %v1052 = vpop.permute.xlu0 %1051
    %v1053 = vsel %vm391, %v1052, 0
    %1055 = vmatprep.subr.mxu0 0.0
    %1056 = vmatpush1.msra.mxu0 %v379
    %1057 = vmatprep.subr.mxu0 0.0
    %1058 = vmatpush1.msra.mxu0 %v380
    %1059 = vmatprep.subr.mxu0 0.0
    %1060 = vmatpush1.msra.mxu0 %v381
    %1061 = vmatprep.subr.mxu0 0.0
    %1062 = vmatpush1.msra.mxu0 %v382
    %1063 = vmatprep.subr.mxu0 0.0
    %1064 = vmatpush1.msra.mxu0 0.0
    %1065 = vmatprep.subr.mxu0 0.0
    %1066 = vmatpush1.msra.mxu0 0.0
    %1067 = vmatprep.subr.mxu0 0.0
    %1068 = vmatpush1.msra.mxu0 0.0
    %1069 = vmatprep.subr.mxu0 0.0
    %1070 = vmatpush1.msra.mxu0 0.0
    %1071 = vmatprep.subr.mxu0 0.0
    %1072 = vmatpush1.msra.mxu0 0.0
    %1073 = vmatprep.subr.mxu0 0.0
    %1074 = vmatpush1.msra.mxu0 0.0
    %1075 = vmatprep.subr.mxu0 0.0
    %1076 = vmatpush1.msra.mxu0 0.0
    %1077 = vmatprep.subr.mxu0 0.0
    %1078 = vmatpush1.msra.mxu0 0.0
    %1079 = vmatprep.subr.mxu0 0.0
    %1080 = vmatpush1.msra.mxu0 0.0
    %1081 = vmatprep.subr.mxu0 0.0
    %1082 = vmatpush1.msra.mxu0 0.0
    %1083 = vmatprep.subr.mxu0 0.0
    %1084 = vmatpush1.msra.mxu0 0.0
    %1085 = vmatprep.subr.mxu0 0.0
    %1086 = vmatpush1.msra.mxu0 0.0
    %1087 = vmatprep.subr.mxu0 0.0
    %1088 = vmatpush1.msra.mxu0 0.0
    %1089 = vmatprep.subr.mxu0 0.0
    %1090 = vmatpush1.msra.mxu0 0.0
    %1091 = vmatprep.subr.mxu0 0.0
    %1092 = vmatpush1.msra.mxu0 0.0
    %1093 = vmatprep.subr.mxu0 0.0
    %1094 = vmatpush1.msra.mxu0 0.0
    %1095 = vmatprep.subr.mxu0 0.0
    %1096 = vmatpush1.msra.mxu0 0.0
    %1097 = vmatprep.subr.mxu0 0.0
    %1098 = vmatpush1.msra.mxu0 0.0
    %1099 = vmatprep.subr.mxu0 0.0
    %1100 = vmatpush1.msra.mxu0 0.0
    %1101 = vmatprep.subr.mxu0 0.0
    %1102 = vmatpush1.msra.mxu0 0.0
    %1103 = vmatprep.subr.mxu0 0.0
    %1104 = vmatpush1.msra.mxu0 0.0
    %1105 = vmatprep.subr.mxu0 0.0
    %1106 = vmatpush1.msra.mxu0 0.0
    %1107 = vmatprep.subr.mxu0 0.0
    %1108 = vmatpush1.msra.mxu0 0.0
    %1109 = vmatprep.subr.mxu0 0.0
    %1110 = vmatpush1.msra.mxu0 0.0
    %1111 = vmatprep.subr.mxu0 0.0
    %1112 = vmatpush1.msra.mxu0 0.0
    %1113 = vmatprep.subr.mxu0 0.0
    %1114 = vmatpush1.msra.mxu0 0.0
    %1115 = vmatprep.subr.mxu0 0.0
    %1116 = vmatpush1.msra.mxu0 0.0
    %1117 = vmatprep.subr.mxu0 0.0
    %1118 = vmatpush1.msra.mxu0 0.0
    %1119 = vmatprep.mubr.f32.mxu0 0.0
    %1120 = vmatmul.mubr.f32.gmra.mrb[0].mxu0 %v1053
    %v1121 = vpop.f32.mrb[0].mxu0
    %v1122 = vadd.f32 0.0, %v1121
    %v1123 = vpop.f32.mrb[0].mxu0
    %1124 = vdwg.mxu0
    %v1125 = vadd.f32 %v1049, %v1122
    %v1126 = vsel %vm391, %v948, 0
    %1128 = vmatprep.subr.mxu0 0.0
    %1129 = vmatpush1.msra.mxu0 %v375
    %1130 = vmatprep.subr.mxu0 0.0
    %1131 = vmatpush1.msra.mxu0 %v376
    %1132 = vmatprep.subr.mxu0 0.0
    %1133 = vmatpush1.msra.mxu0 %v377
    %1134 = vmatprep.subr.mxu0 0.0
    %1135 = vmatpush1.msra.mxu0 %v378
    %1136 = vmatprep.subr.mxu0 0.0
    %1137 = vmatpush1.msra.mxu0 0.0
    %1138 = vmatprep.subr.mxu0 0.0
    %1139 = vmatpush1.msra.mxu0 0.0
    %1140 = vmatprep.subr.mxu0 0.0
    %1141 = vmatpush1.msra.mxu0 0.0
    %1142 = vmatprep.subr.mxu0 0.0
    %1143 = vmatpush1.msra.mxu0 0.0
    %1144 = vmatprep.subr.mxu0 0.0
    %1145 = vmatpush1.msra.mxu0 0.0
    %1146 = vmatprep.subr.mxu0 0.0
    %1147 = vmatpush1.msra.mxu0 0.0
    %1148 = vmatprep.subr.mxu0 0.0
    %1149 = vmatpush1.msra.mxu0 0.0
    %1150 = vmatprep.subr.mxu0 0.0
    %1151 = vmatpush1.msra.mxu0 0.0
    %1152 = vmatprep.subr.mxu0 0.0
    %1153 = vmatpush1.msra.mxu0 0.0
    %1154 = vmatprep.subr.mxu0 0.0
    %1155 = vmatpush1.msra.mxu0 0.0
    %1156 = vmatprep.subr.mxu0 0.0
    %1157 = vmatpush1.msra.mxu0 0.0
    %1158 = vmatprep.subr.mxu0 0.0
    %1159 = vmatpush1.msra.mxu0 0.0
    %1160 = vmatprep.subr.mxu0 0.0
    %1161 = vmatpush1.msra.mxu0 0.0
    %1162 = vmatprep.subr.mxu0 0.0
    %1163 = vmatpush1.msra.mxu0 0.0
    %1164 = vmatprep.subr.mxu0 0.0
    %1165 = vmatpush1.msra.mxu0 0.0
    %1166 = vmatprep.subr.mxu0 0.0
    %1167 = vmatpush1.msra.mxu0 0.0
    %1168 = vmatprep.subr.mxu0 0.0
    %1169 = vmatpush1.msra.mxu0 0.0
    %1170 = vmatprep.subr.mxu0 0.0
    %1171 = vmatpush1.msra.mxu0 0.0
    %1172 = vmatprep.subr.mxu0 0.0
    %1173 = vmatpush1.msra.mxu0 0.0
    %1174 = vmatprep.subr.mxu0 0.0
    %1175 = vmatpush1.msra.mxu0 0.0
    %1176 = vmatprep.subr.mxu0 0.0
    %1177 = vmatpush1.msra.mxu0 0.0
    %1178 = vmatprep.subr.mxu0 0.0
    %1179 = vmatpush1.msra.mxu0 0.0
    %1180 = vmatprep.subr.mxu0 0.0
    %1181 = vmatpush1.msra.mxu0 0.0
    %1182 = vmatprep.subr.mxu0 0.0
    %1183 = vmatpush1.msra.mxu0 0.0
    %1184 = vmatprep.subr.mxu0 0.0
    %1185 = vmatpush1.msra.mxu0 0.0
    %1186 = vmatprep.subr.mxu0 0.0
    %1187 = vmatpush1.msra.mxu0 0.0
    %1188 = vmatprep.subr.mxu0 0.0
    %1189 = vmatpush1.msra.mxu0 0.0
    %1190 = vmatprep.subr.mxu0 0.0
    %1191 = vmatpush1.msra.mxu0 0.0
    %1192 = vmatprep.mubr.f32.mxu0 0.0
    %1193 = vmatmul.mubr.f32.gmra.mrb[0].mxu0 %v1126
    %v1194 = vpop.f32.mrb[0].mxu0
    %v1195 = vadd.f32 0.0, %v1194
    %v1196 = vpop.f32.mrb[0].mxu0
    %1197 = vdwg.mxu0
    %v1198 = vadd.f32 %v1125, %v1195
    %v1199 = vmul.f32 %v1198, %v388
    %v1200 = vxor.u32 %v1199, 2147483648
    %v1201 = vmul.f32 %v1200, 1.442695
    %v1202 = vpow.pop %v1201
    %v1203 = vadd.f32 %v1202, 1.0
    %v1204 = vrcp.pop %v1203
    %v1205 = vmul.f32 1.0, %v1204
    %v1206 = vmul.f32 %v1205, %v388
    %v1207 = vsub.f32 %v1206, %v389
    %v1208 = vmul.f32 %v1207, %v939
    %1210 = vrot.lane.b32.xlu0 %v1207, 64
    %v1211 = vpop.permute.xlu0 %1210
    %v1213 = vmul.f32 %v1207, %v1211
    %1215 = vrot.lane.b32.xlu0 %v1213, 32
    %v1216 = vpop.permute.xlu0 %1215
    %v1218 = vadd.f32 %v1208, %v1216
    %v1219 = vtanh.pop %v1218
    %1221 = vrot.lane.b32.xlu0 %v1219, 64
    %v1222 = vpop.permute.xlu0 %1221
    %v1224 = vmul.f32 %v1207, %v1222
    %1226 = vrot.lane.b32.xlu0 %v1224, 32
    %v1227 = vpop.permute.xlu0 %1226
    %1229 = vst.msk [vmem:[#allocation4 + $0x4] sm:$0x3] %vm670, %v1227
    %v1230 = vld [vmem:[#allocation2 + $0x6] sm:$0x3]
    %1231 = vmatprep.subr.mxu0 0.0
    %1232 = vmatpush1.msra.mxu0 %v283
    %1233 = vmatprep.subr.mxu0 0.0
    %1234 = vmatpush1.msra.mxu0 %v284
    %1235 = vmatprep.subr.mxu0 0.0
    %1236 = vmatpush1.msra.mxu0 %v285
    %1237 = vmatprep.subr.mxu0 0.0
    %1238 = vmatpush1.msra.mxu0 %v286
    %1239 = vmatprep.subr.mxu0 0.0
    %1240 = vmatpush1.msra.mxu0 0.0
    %1241 = vmatprep.subr.mxu0 0.0
    %1242 = vmatpush1.msra.mxu0 0.0
    %1243 = vmatprep.subr.mxu0 0.0
    %1244 = vmatpush1.msra.mxu0 0.0
    %1245 = vmatprep.subr.mxu0 0.0
    %1246 = vmatpush1.msra.mxu0 0.0
    %1247 = vmatprep.subr.mxu0 0.0
    %1248 = vmatpush1.msra.mxu0 0.0
    %1249 = vmatprep.subr.mxu0 0.0
    %1250 = vmatpush1.msra.mxu0 0.0
    %1251 = vmatprep.subr.mxu0 0.0
    %1252 = vmatpush1.msra.mxu0 0.0
    %1253 = vmatprep.subr.mxu0 0.0
    %1254 = vmatpush1.msra.mxu0 0.0
    %1255 = vmatprep.subr.mxu0 0.0
    %1256 = vmatpush1.msra.mxu0 0.0
    %1257 = vmatprep.subr.mxu0 0.0
    %1258 = vmatpush1.msra.mxu0 0.0
    %1259 = vmatprep.subr.mxu0 0.0
    %1260 = vmatpush1.msra.mxu0 0.0
    %1261 = vmatprep.subr.mxu0 0.0
    %1262 = vmatpush1.msra.mxu0 0.0
    %1263 = vmatprep.subr.mxu0 0.0
    %1264 = vmatpush1.msra.mxu0 0.0
    %1265 = vmatprep.subr.mxu0 0.0
    %1266 = vmatpush1.msra.mxu0 0.0
    %1267 = vmatprep.subr.mxu0 0.0
    %1268 = vmatpush1.msra.mxu0 0.0
    %1269 = vmatprep.subr.mxu0 0.0
    %1270 = vmatpush1.msra.mxu0 0.0
    %1271 = vmatprep.subr.mxu0 0.0
    %1272 = vmatpush1.msra.mxu0 0.0
    %1273 = vmatprep.subr.mxu0 0.0
    %1274 = vmatpush1.msra.mxu0 0.0
    %1275 = vmatprep.subr.mxu0 0.0
    %1276 = vmatpush1.msra.mxu0 0.0
    %1277 = vmatprep.subr.mxu0 0.0
    %1278 = vmatpush1.msra.mxu0 0.0
    %1279 = vmatprep.subr.mxu0 0.0
    %1280 = vmatpush1.msra.mxu0 0.0
    %1281 = vmatprep.subr.mxu0 0.0
    %1282 = vmatpush1.msra.mxu0 0.0
    %1283 = vmatprep.subr.mxu0 0.0
    %1284 = vmatpush1.msra.mxu0 0.0
    %1285 = vmatprep.subr.mxu0 0.0
    %1286 = vmatpush1.msra.mxu0 0.0
    %1287 = vmatprep.subr.mxu0 0.0
    %1288 = vmatpush1.msra.mxu0 0.0
    %1289 = vmatprep.subr.mxu0 0.0
    %1290 = vmatpush1.msra.mxu0 0.0
    %1291 = vmatprep.subr.mxu0 0.0
    %1292 = vmatpush1.msra.mxu0 0.0
    %1293 = vmatprep.subr.mxu0 0.0
    %1294 = vmatpush1.msra.mxu0 0.0
    %1295 = vmatprep.mubr.f32.mxu0 0.0
    %1296 = vmatmul.mubr.f32.gmra.mrb[0].mxu0 %v1053
    %v1297 = vpop.f32.mrb[0].mxu0
    %v1298 = vadd.f32 0.0, %v1297
    %v1299 = vpop.f32.mrb[0].mxu0
    %1300 = vdwg.mxu0
    %v1301 = vadd.f32 %v1230, %v1298
    %v1302 = vmul.f32 %v1301, %v388
    %v1303 = vxor.u32 %v1302, 2147483648
    %v1304 = vmul.f32 %v1303, 1.442695
    %v1305 = vpow.pop %v1304
    %v1306 = vadd.f32 %v1305, 1.0
    %v1307 = vrcp.pop %v1306
    %v1308 = vmul.f32 1.0, %v1307
    %v1309 = vmul.f32 %v1308, %v388
    %v1310 = vsub.f32 %v1309, %v389
    %v1311 = vmul.f32 %v1310, %v1042
    %1313 = vrot.lane.b32.xlu0 %v1310, 64
    %v1314 = vpop.permute.xlu0 %1313
    %v1316 = vmul.f32 %v1310, %v1314
    %1318 = vrot.lane.b32.xlu0 %v1316, 32
    %v1319 = vpop.permute.xlu0 %1318
    %v1321 = vadd.f32 %v1311, %v1319
    %v1322 = vtanh.pop %v1321
    %1324 = vrot.lane.b32.xlu0 %v1322, 64
    %v1325 = vpop.permute.xlu0 %1324
    %v1327 = vmul.f32 %v1310, %v1325
    %v1328 = vld [vmem:[#allocation3 + $0x6] sm:$0x3]
    %1330 = vrot.lane.b32.xlu0 %v1327, 32
    %v1331 = vpop.permute.xlu0 %1330
    %v1332 = vsel %vm391, %v1331, 0
    %1334 = vmatprep.subr.mxu0 0.0
    %1335 = vmatpush1.msra.mxu0 %v379
    %1336 = vmatprep.subr.mxu0 0.0
    %1337 = vmatpush1.msra.mxu0 %v380
    %1338 = vmatprep.subr.mxu0 0.0
    %1339 = vmatpush1.msra.mxu0 %v381
    %1340 = vmatprep.subr.mxu0 0.0
    %1341 = vmatpush1.msra.mxu0 %v382
    %1342 = vmatprep.subr.mxu0 0.0
    %1343 = vmatpush1.msra.mxu0 0.0
    %1344 = vmatprep.subr.mxu0 0.0
    %1345 = vmatpush1.msra.mxu0 0.0
    %1346 = vmatprep.subr.mxu0 0.0
    %1347 = vmatpush1.msra.mxu0 0.0
    %1348 = vmatprep.subr.mxu0 0.0
    %1349 = vmatpush1.msra.mxu0 0.0
    %1350 = vmatprep.subr.mxu0 0.0
    %1351 = vmatpush1.msra.mxu0 0.0
    %1352 = vmatprep.subr.mxu0 0.0
    %1353 = vmatpush1.msra.mxu0 0.0
    %1354 = vmatprep.subr.mxu0 0.0
    %1355 = vmatpush1.msra.mxu0 0.0
    %1356 = vmatprep.subr.mxu0 0.0
    %1357 = vmatpush1.msra.mxu0 0.0
    %1358 = vmatprep.subr.mxu0 0.0
    %1359 = vmatpush1.msra.mxu0 0.0
    %1360 = vmatprep.subr.mxu0 0.0
    %1361 = vmatpush1.msra.mxu0 0.0
    %1362 = vmatprep.subr.mxu0 0.0
    %1363 = vmatpush1.msra.mxu0 0.0
    %1364 = vmatprep.subr.mxu0 0.0
    %1365 = vmatpush1.msra.mxu0 0.0
    %1366 = vmatprep.subr.mxu0 0.0
    %1367 = vmatpush1.msra.mxu0 0.0
    %1368 = vmatprep.subr.mxu0 0.0
    %1369 = vmatpush1.msra.mxu0 0.0
    %1370 = vmatprep.subr.mxu0 0.0
    %1371 = vmatpush1.msra.mxu0 0.0
    %1372 = vmatprep.subr.mxu0 0.0
    %1373 = vmatpush1.msra.mxu0 0.0
    %1374 = vmatprep.subr.mxu0 0.0
    %1375 = vmatpush1.msra.mxu0 0.0
    %1376 = vmatprep.subr.mxu0 0.0
    %1377 = vmatpush1.msra.mxu0 0.0
    %1378 = vmatprep.subr.mxu0 0.0
    %1379 = vmatpush1.msra.mxu0 0.0
    %1380 = vmatprep.subr.mxu0 0.0
    %1381 = vmatpush1.msra.mxu0 0.0
    %1382 = vmatprep.subr.mxu0 0.0
    %1383 = vmatpush1.msra.mxu0 0.0
    %1384 = vmatprep.subr.mxu0 0.0
    %1385 = vmatpush1.msra.mxu0 0.0
    %1386 = vmatprep.subr.mxu0 0.0
    %1387 = vmatpush1.msra.mxu0 0.0
    %1388 = vmatprep.subr.mxu0 0.0
    %1389 = vmatpush1.msra.mxu0 0.0
    %1390 = vmatprep.subr.mxu0 0.0
    %1391 = vmatpush1.msra.mxu0 0.0
    %1392 = vmatprep.subr.mxu0 0.0
    %1393 = vmatpush1.msra.mxu0 0.0
    %1394 = vmatprep.subr.mxu0 0.0
    %1395 = vmatpush1.msra.mxu0 0.0
    %1396 = vmatprep.subr.mxu0 0.0
    %1397 = vmatpush1.msra.mxu0 0.0
    %1398 = vmatprep.mubr.f32.mxu0 0.0
    %1399 = vmatmul.mubr.f32.gmra.mrb[0].mxu0 %v1332
    %v1400 = vpop.f32.mrb[0].mxu0
    %v1401 = vadd.f32 0.0, %v1400
    %v1402 = vpop.f32.mrb[0].mxu0
    %1403 = vdwg.mxu0
    %v1404 = vadd.f32 %v1328, %v1401
    %v1405 = vsel %vm391, %v1227, 0
    %1407 = vmatprep.subr.mxu0 0.0
    %1408 = vmatpush1.msra.mxu0 %v375
    %1409 = vmatprep.subr.mxu0 0.0
    %1410 = vmatpush1.msra.mxu0 %v376
    %1411 = vmatprep.subr.mxu0 0.0
    %1412 = vmatpush1.msra.mxu0 %v377
    %1413 = vmatprep.subr.mxu0 0.0
    %1414 = vmatpush1.msra.mxu0 %v378
    %1415 = vmatprep.subr.mxu0 0.0
    %1416 = vmatpush1.msra.mxu0 0.0
    %1417 = vmatprep.subr.mxu0 0.0
    %1418 = vmatpush1.msra.mxu0 0.0
    %1419 = vmatprep.subr.mxu0 0.0
    %1420 = vmatpush1.msra.mxu0 0.0
    %1421 = vmatprep.subr.mxu0 0.0
    %1422 = vmatpush1.msra.mxu0 0.0
    %1423 = vmatprep.subr.mxu0 0.0
    %1424 = vmatpush1.msra.mxu0 0.0
    %1425 = vmatprep.subr.mxu0 0.0
    %1426 = vmatpush1.msra.mxu0 0.0
    %1427 = vmatprep.subr.mxu0 0.0
    %1428 = vmatpush1.msra.mxu0 0.0
    %1429 = vmatprep.subr.mxu0 0.0
    %1430 = vmatpush1.msra.mxu0 0.0
    %1431 = vmatprep.subr.mxu0 0.0
    %1432 = vmatpush1.msra.mxu0 0.0
    %1433 = vmatprep.subr.mxu0 0.0
    %1434 = vmatpush1.msra.mxu0 0.0
    %1435 = vmatprep.subr.mxu0 0.0
    %1436 = vmatpush1.msra.mxu0 0.0
    %1437 = vmatprep.subr.mxu0 0.0
    %1438 = vmatpush1.msra.mxu0 0.0
    %1439 = vmatprep.subr.mxu0 0.0
    %1440 = vmatpush1.msra.mxu0 0.0
    %1441 = vmatprep.subr.mxu0 0.0
    %1442 = vmatpush1.msra.mxu0 0.0
    %1443 = vmatprep.subr.mxu0 0.0
    %1444 = vmatpush1.msra.mxu0 0.0
    %1445 = vmatprep.subr.mxu0 0.0
    %1446 = vmatpush1.msra.mxu0 0.0
    %1447 = vmatprep.subr.mxu0 0.0
    %1448 = vmatpush1.msra.mxu0 0.0
    %1449 = vmatprep.subr.mxu0 0.0
    %1450 = vmatpush1.msra.mxu0 0.0
    %1451 = vmatprep.subr.mxu0 0.0
    %1452 = vmatpush1.msra.mxu0 0.0
    %1453 = vmatprep.subr.mxu0 0.0
    %1454 = vmatpush1.msra.mxu0 0.0
    %1455 = vmatprep.subr.mxu0 0.0
    %1456 = vmatpush1.msra.mxu0 0.0
    %1457 = vmatprep.subr.mxu0 0.0
    %1458 = vmatpush1.msra.mxu0 0.0
    %1459 = vmatprep.subr.mxu0 0.0
    %1460 = vmatpush1.msra.mxu0 0.0
    %1461 = vmatprep.subr.mxu0 0.0
    %1462 = vmatpush1.msra.mxu0 0.0
    %1463 = vmatprep.subr.mxu0 0.0
    %1464 = vmatpush1.msra.mxu0 0.0
    %1465 = vmatprep.subr.mxu0 0.0
    %1466 = vmatpush1.msra.mxu0 0.0
    %1467 = vmatprep.subr.mxu0 0.0
    %1468 = vmatpush1.msra.mxu0 0.0
    %1469 = vmatprep.subr.mxu0 0.0
    %1470 = vmatpush1.msra.mxu0 0.0
    %1471 = vmatprep.mubr.f32.mxu0 0.0
    %1472 = vmatmul.mubr.f32.gmra.mrb[0].mxu0 %v1405
    %v1473 = vpop.f32.mrb[0].mxu0
    %v1474 = vadd.f32 0.0, %v1473
    %v1475 = vpop.f32.mrb[0].mxu0
    %1476 = vdwg.mxu0
    %v1477 = vadd.f32 %v1404, %v1474
    %v1478 = vmul.f32 %v1477, %v388
    %v1479 = vxor.u32 %v1478, 2147483648
    %v1480 = vmul.f32 %v1479, 1.442695
    %v1481 = vpow.pop %v1480
    %v1482 = vadd.f32 %v1481, 1.0
    %v1483 = vrcp.pop %v1482
    %v1484 = vmul.f32 1.0, %v1483
    %v1485 = vmul.f32 %v1484, %v388
    %v1486 = vsub.f32 %v1485, %v389
    %v1487 = vmul.f32 %v1486, %v1218
    %1489 = vrot.lane.b32.xlu0 %v1486, 64
    %v1490 = vpop.permute.xlu0 %1489
    %v1492 = vmul.f32 %v1486, %v1490
    %1494 = vrot.lane.b32.xlu0 %v1492, 32
    %v1495 = vpop.permute.xlu0 %1494
    %v1497 = vadd.f32 %v1487, %v1495
    %v1498 = vtanh.pop %v1497
    %1500 = vrot.lane.b32.xlu0 %v1498, 64
    %v1501 = vpop.permute.xlu0 %1500
    %v1503 = vmul.f32 %v1486, %v1501
    %1505 = vrot.lane.b32.xlu0 %v1503, 32
    %v1506 = vpop.permute.xlu0 %1505
    %1508 = vst.msk [vmem:[#allocation4 + $0x6] sm:$0x3] %vm670, %v1506
    %v1509 = vld [vmem:[#allocation2 + $0x8] sm:$0x3]
    %1510 = vmatprep.subr.mxu0 0.0
    %1511 = vmatpush1.msra.mxu0 %v283
    %1512 = vmatprep.subr.mxu0 0.0
    %1513 = vmatpush1.msra.mxu0 %v284
    %1514 = vmatprep.subr.mxu0 0.0
    %1515 = vmatpush1.msra.mxu0 %v285
    %1516 = vmatprep.subr.mxu0 0.0
    %1517 = vmatpush1.msra.mxu0 %v286
    %1518 = vmatprep.subr.mxu0 0.0
    %1519 = vmatpush1.msra.mxu0 0.0
    %1520 = vmatprep.subr.mxu0 0.0
    %1521 = vmatpush1.msra.mxu0 0.0
    %1522 = vmatprep.subr.mxu0 0.0
    %1523 = vmatpush1.msra.mxu0 0.0
    %1524 = vmatprep.subr.mxu0 0.0
    %1525 = vmatpush1.msra.mxu0 0.0
    %1526 = vmatprep.subr.mxu0 0.0
    %1527 = vmatpush1.msra.mxu0 0.0
    %1528 = vmatprep.subr.mxu0 0.0
    %1529 = vmatpush1.msra.mxu0 0.0
    %1530 = vmatprep.subr.mxu0 0.0
    %1531 = vmatpush1.msra.mxu0 0.0
    %1532 = vmatprep.subr.mxu0 0.0
    %1533 = vmatpush1.msra.mxu0 0.0
    %1534 = vmatprep.subr.mxu0 0.0
    %1535 = vmatpush1.msra.mxu0 0.0
    %1536 = vmatprep.subr.mxu0 0.0
    %1537 = vmatpush1.msra.mxu0 0.0
    %1538 = vmatprep.subr.mxu0 0.0
    %1539 = vmatpush1.msra.mxu0 0.0
    %1540 = vmatprep.subr.mxu0 0.0
    %1541 = vmatpush1.msra.mxu0 0.0
    %1542 = vmatprep.subr.mxu0 0.0
    %1543 = vmatpush1.msra.mxu0 0.0
    %1544 = vmatprep.subr.mxu0 0.0
    %1545 = vmatpush1.msra.mxu0 0.0
    %1546 = vmatprep.subr.mxu0 0.0
    %1547 = vmatpush1.msra.mxu0 0.0
    %1548 = vmatprep.subr.mxu0 0.0
    %1549 = vmatpush1.msra.mxu0 0.0
    %1550 = vmatprep.subr.mxu0 0.0
    %1551 = vmatpush1.msra.mxu0 0.0
    %1552 = vmatprep.subr.mxu0 0.0
    %1553 = vmatpush1.msra.mxu0 0.0
    %1554 = vmatprep.subr.mxu0 0.0
    %1555 = vmatpush1.msra.mxu0 0.0
    %1556 = vmatprep.subr.mxu0 0.0
    %1557 = vmatpush1.msra.mxu0 0.0
    %1558 = vmatprep.subr.mxu0 0.0
    %1559 = vmatpush1.msra.mxu0 0.0
    %1560 = vmatprep.subr.mxu0 0.0
    %1561 = vmatpush1.msra.mxu0 0.0
    %1562 = vmatprep.subr.mxu0 0.0
    %1563 = vmatpush1.msra.mxu0 0.0
    %1564 = vmatprep.subr.mxu0 0.0
    %1565 = vmatpush1.msra.mxu0 0.0
    %1566 = vmatprep.subr.mxu0 0.0
    %1567 = vmatpush1.msra.mxu0 0.0
    %1568 = vmatprep.subr.mxu0 0.0
    %1569 = vmatpush1.msra.mxu0 0.0
    %1570 = vmatprep.subr.mxu0 0.0
    %1571 = vmatpush1.msra.mxu0 0.0
    %1572 = vmatprep.subr.mxu0 0.0
    %1573 = vmatpush1.msra.mxu0 0.0
    %1574 = vmatprep.mubr.f32.mxu0 0.0
    %1575 = vmatmul.mubr.f32.gmra.mrb[0].mxu0 %v1332
    %v1576 = vpop.f32.mrb[0].mxu0
    %v1577 = vadd.f32 0.0, %v1576
    %v1578 = vpop.f32.mrb[0].mxu0
    %1579 = vdwg.mxu0
    %v1580 = vadd.f32 %v1509, %v1577
    %v1581 = vmul.f32 %v1580, %v388
    %v1582 = vxor.u32 %v1581, 2147483648
    %v1583 = vmul.f32 %v1582, 1.442695
    %v1584 = vpow.pop %v1583
    %v1585 = vadd.f32 %v1584, 1.0
    %v1586 = vrcp.pop %v1585
    %v1587 = vmul.f32 1.0, %v1586
    %v1588 = vmul.f32 %v1587, %v388
    %v1589 = vsub.f32 %v1588, %v389
    %v1590 = vmul.f32 %v1589, %v1321
    %1592 = vrot.lane.b32.xlu0 %v1589, 64
    %v1593 = vpop.permute.xlu0 %1592
    %v1595 = vmul.f32 %v1589, %v1593
    %1597 = vrot.lane.b32.xlu0 %v1595, 32
    %v1598 = vpop.permute.xlu0 %1597
    %v1600 = vadd.f32 %v1590, %v1598
    %v1601 = vtanh.pop %v1600
    %1603 = vrot.lane.b32.xlu0 %v1601, 64
    %v1604 = vpop.permute.xlu0 %1603
    %v1606 = vmul.f32 %v1589, %v1604
    %v1607 = vld [vmem:[#allocation3 + $0x8] sm:$0x3]
    %1609 = vrot.lane.b32.xlu0 %v1606, 32
    %v1610 = vpop.permute.xlu0 %1609
    %v1611 = vsel %vm391, %v1610, 0
    %1613 = vmatprep.subr.mxu0 0.0
    %1614 = vmatpush1.msra.mxu0 %v379
    %1615 = vmatprep.subr.mxu0 0.0
    %1616 = vmatpush1.msra.mxu0 %v380
    %1617 = vmatprep.subr.mxu0 0.0
    %1618 = vmatpush1.msra.mxu0 %v381
    %1619 = vmatprep.subr.mxu0 0.0
    %1620 = vmatpush1.msra.mxu0 %v382
    %1621 = vmatprep.subr.mxu0 0.0
    %1622 = vmatpush1.msra.mxu0 0.0
    %1623 = vmatprep.subr.mxu0 0.0
    %1624 = vmatpush1.msra.mxu0 0.0
    %1625 = vmatprep.subr.mxu0 0.0
    %1626 = vmatpush1.msra.mxu0 0.0
    %1627 = vmatprep.subr.mxu0 0.0
    %1628 = vmatpush1.msra.mxu0 0.0
    %1629 = vmatprep.subr.mxu0 0.0
    %1630 = vmatpush1.msra.mxu0 0.0
    %1631 = vmatprep.subr.mxu0 0.0
    %1632 = vmatpush1.msra.mxu0 0.0
    %1633 = vmatprep.subr.mxu0 0.0
    %1634 = vmatpush1.msra.mxu0 0.0
    %1635 = vmatprep.subr.mxu0 0.0
    %1636 = vmatpush1.msra.mxu0 0.0
    %1637 = vmatprep.subr.mxu0 0.0
    %1638 = vmatpush1.msra.mxu0 0.0
    %1639 = vmatprep.subr.mxu0 0.0
    %1640 = vmatpush1.msra.mxu0 0.0
    %1641 = vmatprep.subr.mxu0 0.0
    %1642 = vmatpush1.msra.mxu0 0.0
    %1643 = vmatprep.subr.mxu0 0.0
    %1644 = vmatpush1.msra.mxu0 0.0
    %1645 = vmatprep.subr.mxu0 0.0
    %1646 = vmatpush1.msra.mxu0 0.0
    %1647 = vmatprep.subr.mxu0 0.0
    %1648 = vmatpush1.msra.mxu0 0.0
    %1649 = vmatprep.subr.mxu0 0.0
    %1650 = vmatpush1.msra.mxu0 0.0
    %1651 = vmatprep.subr.mxu0 0.0
    %1652 = vmatpush1.msra.mxu0 0.0
    %1653 = vmatprep.subr.mxu0 0.0
    %1654 = vmatpush1.msra.mxu0 0.0
    %1655 = vmatprep.subr.mxu0 0.0
    %1656 = vmatpush1.msra.mxu0 0.0
    %1657 = vmatprep.subr.mxu0 0.0
    %1658 = vmatpush1.msra.mxu0 0.0
    %1659 = vmatprep.subr.mxu0 0.0
    %1660 = vmatpush1.msra.mxu0 0.0
    %1661 = vmatprep.subr.mxu0 0.0
    %1662 = vmatpush1.msra.mxu0 0.0
    %1663 = vmatprep.subr.mxu0 0.0
    %1664 = vmatpush1.msra.mxu0 0.0
    %1665 = vmatprep.subr.mxu0 0.0
    %1666 = vmatpush1.msra.mxu0 0.0
    %1667 = vmatprep.subr.mxu0 0.0
    %1668 = vmatpush1.msra.mxu0 0.0
    %1669 = vmatprep.subr.mxu0 0.0
    %1670 = vmatpush1.msra.mxu0 0.0
    %1671 = vmatprep.subr.mxu0 0.0
    %1672 = vmatpush1.msra.mxu0 0.0
    %1673 = vmatprep.subr.mxu0 0.0
    %1674 = vmatpush1.msra.mxu0 0.0
    %1675 = vmatprep.subr.mxu0 0.0
    %1676 = vmatpush1.msra.mxu0 0.0
    %1677 = vmatprep.mubr.f32.mxu0 0.0
    %1678 = vmatmul.mubr.f32.gmra.mrb[0].mxu0 %v1611
    %v1679 = vpop.f32.mrb[0].mxu0
    %v1680 = vadd.f32 0.0, %v1679
    %v1681 = vpop.f32.mrb[0].mxu0
    %1682 = vdwg.mxu0
    %v1683 = vadd.f32 %v1607, %v1680
    %v1684 = vsel %vm391, %v1506, 0
    %1686 = vmatprep.subr.mxu0 0.0
    %1687 = vmatpush1.msra.mxu0 %v375
    %1688 = vmatprep.subr.mxu0 0.0
    %1689 = vmatpush1.msra.mxu0 %v376
    %1690 = vmatprep.subr.mxu0 0.0
    %1691 = vmatpush1.msra.mxu0 %v377
    %1692 = vmatprep.subr.mxu0 0.0
    %1693 = vmatpush1.msra.mxu0 %v378
    %1694 = vmatprep.subr.mxu0 0.0
    %1695 = vmatpush1.msra.mxu0 0.0
    %1696 = vmatprep.subr.mxu0 0.0
    %1697 = vmatpush1.msra.mxu0 0.0
    %1698 = vmatprep.subr.mxu0 0.0
    %1699 = vmatpush1.msra.mxu0 0.0
    %1700 = vmatprep.subr.mxu0 0.0
    %1701 = vmatpush1.msra.mxu0 0.0
    %1702 = vmatprep.subr.mxu0 0.0
    %1703 = vmatpush1.msra.mxu0 0.0
    %1704 = vmatprep.subr.mxu0 0.0
    %1705 = vmatpush1.msra.mxu0 0.0
    %1706 = vmatprep.subr.mxu0 0.0
    %1707 = vmatpush1.msra.mxu0 0.0
    %1708 = vmatprep.subr.mxu0 0.0
    %1709 = vmatpush1.msra.mxu0 0.0
    %1710 = vmatprep.subr.mxu0 0.0
    %1711 = vmatpush1.msra.mxu0 0.0
    %1712 = vmatprep.subr.mxu0 0.0
    %1713 = vmatpush1.msra.mxu0 0.0
    %1714 = vmatprep.subr.mxu0 0.0
    %1715 = vmatpush1.msra.mxu0 0.0
    %1716 = vmatprep.subr.mxu0 0.0
    %1717 = vmatpush1.msra.mxu0 0.0
    %1718 = vmatprep.subr.mxu0 0.0
    %1719 = vmatpush1.msra.mxu0 0.0
    %1720 = vmatprep.subr.mxu0 0.0
    %1721 = vmatpush1.msra.mxu0 0.0
    %1722 = vmatprep.subr.mxu0 0.0
    %1723 = vmatpush1.msra.mxu0 0.0
    %1724 = vmatprep.subr.mxu0 0.0
    %1725 = vmatpush1.msra.mxu0 0.0
    %1726 = vmatprep.subr.mxu0 0.0
    %1727 = vmatpush1.msra.mxu0 0.0
    %1728 = vmatprep.subr.mxu0 0.0
    %1729 = vmatpush1.msra.mxu0 0.0
    %1730 = vmatprep.subr.mxu0 0.0
    %1731 = vmatpush1.msra.mxu0 0.0
    %1732 = vmatprep.subr.mxu0 0.0
    %1733 = vmatpush1.msra.mxu0 0.0
    %1734 = vmatprep.subr.mxu0 0.0
    %1735 = vmatpush1.msra.mxu0 0.0
    %1736 = vmatprep.subr.mxu0 0.0
    %1737 = vmatpush1.msra.mxu0 0.0
    %1738 = vmatprep.subr.mxu0 0.0
    %1739 = vmatpush1.msra.mxu0 0.0
    %1740 = vmatprep.subr.mxu0 0.0
    %1741 = vmatpush1.msra.mxu0 0.0
    %1742 = vmatprep.subr.mxu0 0.0
    %1743 = vmatpush1.msra.mxu0 0.0
    %1744 = vmatprep.subr.mxu0 0.0
    %1745 = vmatpush1.msra.mxu0 0.0
    %1746 = vmatprep.subr.mxu0 0.0
    %1747 = vmatpush1.msra.mxu0 0.0
    %1748 = vmatprep.subr.mxu0 0.0
    %1749 = vmatpush1.msra.mxu0 0.0
    %1750 = vmatprep.mubr.f32.mxu0 0.0
    %1751 = vmatmul.mubr.f32.gmra.mrb[0].mxu0 %v1684
    %v1752 = vpop.f32.mrb[0].mxu0
    %v1753 = vadd.f32 0.0, %v1752
    %v1754 = vpop.f32.mrb[0].mxu0
    %1755 = vdwg.mxu0
    %v1756 = vadd.f32 %v1683, %v1753
    %v1757 = vmul.f32 %v1756, %v388
    %v1758 = vxor.u32 %v1757, 2147483648
    %v1759 = vmul.f32 %v1758, 1.442695
    %v1760 = vpow.pop %v1759
    %v1761 = vadd.f32 %v1760, 1.0
    %v1762 = vrcp.pop %v1761
    %v1763 = vmul.f32 1.0, %v1762
    %v1764 = vmul.f32 %v1763, %v388
    %v1765 = vsub.f32 %v1764, %v389
    %v1766 = vmul.f32 %v1765, %v1497
    %1768 = vrot.lane.b32.xlu0 %v1765, 64
    %v1769 = vpop.permute.xlu0 %1768
    %v1771 = vmul.f32 %v1765, %v1769
    %1773 = vrot.lane.b32.xlu0 %v1771, 32
    %v1774 = vpop.permute.xlu0 %1773
    %v1776 = vadd.f32 %v1766, %v1774
    %v1777 = vtanh.pop %v1776
    %1779 = vrot.lane.b32.xlu0 %v1777, 64
    %v1780 = vpop.permute.xlu0 %1779
    %v1782 = vmul.f32 %v1765, %v1780
    %1784 = vrot.lane.b32.xlu0 %v1782, 32
    %v1785 = vpop.permute.xlu0 %1784
    %1787 = vst.msk [vmem:[#allocation4 + $0x8] sm:$0x3] %vm670, %v1785
    %v1788 = vld [vmem:[#allocation2 + $0xa] sm:$0x3]
    %1789 = vmatprep.subr.mxu0 0.0
    %1790 = vmatpush1.msra.mxu0 %v283
    %1791 = vmatprep.subr.mxu0 0.0
    %1792 = vmatpush1.msra.mxu0 %v284
    %1793 = vmatprep.subr.mxu0 0.0
    %1794 = vmatpush1.msra.mxu0 %v285
    %1795 = vmatprep.subr.mxu0 0.0
    %1796 = vmatpush1.msra.mxu0 %v286
    %1797 = vmatprep.subr.mxu0 0.0
    %1798 = vmatpush1.msra.mxu0 0.0
    %1799 = vmatprep.subr.mxu0 0.0
    %1800 = vmatpush1.msra.mxu0 0.0
    %1801 = vmatprep.subr.mxu0 0.0
    %1802 = vmatpush1.msra.mxu0 0.0
    %1803 = vmatprep.subr.mxu0 0.0
    %1804 = vmatpush1.msra.mxu0 0.0
    %1805 = vmatprep.subr.mxu0 0.0
    %1806 = vmatpush1.msra.mxu0 0.0
    %1807 = vmatprep.subr.mxu0 0.0
    %1808 = vmatpush1.msra.mxu0 0.0
    %1809 = vmatprep.subr.mxu0 0.0
    %1810 = vmatpush1.msra.mxu0 0.0
    %1811 = vmatprep.subr.mxu0 0.0
    %1812 = vmatpush1.msra.mxu0 0.0
    %1813 = vmatprep.subr.mxu0 0.0
    %1814 = vmatpush1.msra.mxu0 0.0
    %1815 = vmatprep.subr.mxu0 0.0
    %1816 = vmatpush1.msra.mxu0 0.0
    %1817 = vmatprep.subr.mxu0 0.0
    %1818 = vmatpush1.msra.mxu0 0.0
    %1819 = vmatprep.subr.mxu0 0.0
    %1820 = vmatpush1.msra.mxu0 0.0
    %1821 = vmatprep.subr.mxu0 0.0
    %1822 = vmatpush1.msra.mxu0 0.0
    %1823 = vmatprep.subr.mxu0 0.0
    %1824 = vmatpush1.msra.mxu0 0.0
    %1825 = vmatprep.subr.mxu0 0.0
    %1826 = vmatpush1.msra.mxu0 0.0
    %1827 = vmatprep.subr.mxu0 0.0
    %1828 = vmatpush1.msra.mxu0 0.0
    %1829 = vmatprep.subr.mxu0 0.0
    %1830 = vmatpush1.msra.mxu0 0.0
    %1831 = vmatprep.subr.mxu0 0.0
    %1832 = vmatpush1.msra.mxu0 0.0
    %1833 = vmatprep.subr.mxu0 0.0
    %1834 = vmatpush1.msra.mxu0 0.0
    %1835 = vmatprep.subr.mxu0 0.0
    %1836 = vmatpush1.msra.mxu0 0.0
    %1837 = vmatprep.subr.mxu0 0.0
    %1838 = vmatpush1.msra.mxu0 0.0
    %1839 = vmatprep.subr.mxu0 0.0
    %1840 = vmatpush1.msra.mxu0 0.0
    %1841 = vmatprep.subr.mxu0 0.0
    %1842 = vmatpush1.msra.mxu0 0.0
    %1843 = vmatprep.subr.mxu0 0.0
    %1844 = vmatpush1.msra.mxu0 0.0
    %1845 = vmatprep.subr.mxu0 0.0
    %1846 = vmatpush1.msra.mxu0 0.0
    %1847 = vmatprep.subr.mxu0 0.0
    %1848 = vmatpush1.msra.mxu0 0.0
    %1849 = vmatprep.subr.mxu0 0.0
    %1850 = vmatpush1.msra.mxu0 0.0
    %1851 = vmatprep.subr.mxu0 0.0
    %1852 = vmatpush1.msra.mxu0 0.0
    %1853 = vmatprep.mubr.f32.mxu0 0.0
    %1854 = vmatmul.mubr.f32.gmra.mrb[0].mxu0 %v1611
    %v1855 = vpop.f32.mrb[0].mxu0
    %v1856 = vadd.f32 0.0, %v1855
    %v1857 = vpop.f32.mrb[0].mxu0
    %1858 = vdwg.mxu0
    %v1859 = vadd.f32 %v1788, %v1856
    %v1860 = vmul.f32 %v1859, %v388
    %v1861 = vxor.u32 %v1860, 2147483648
    %v1862 = vmul.f32 %v1861, 1.442695
    %v1863 = vpow.pop %v1862
    %v1864 = vadd.f32 %v1863, 1.0
    %v1865 = vrcp.pop %v1864
    %v1866 = vmul.f32 1.0, %v1865
    %v1867 = vmul.f32 %v1866, %v388
    %v1868 = vsub.f32 %v1867, %v389
    %v1869 = vmul.f32 %v1868, %v1600
    %1871 = vrot.lane.b32.xlu0 %v1868, 64
    %v1872 = vpop.permute.xlu0 %1871
    %v1874 = vmul.f32 %v1868, %v1872
    %1876 = vrot.lane.b32.xlu0 %v1874, 32
    %v1877 = vpop.permute.xlu0 %1876
    %v1879 = vadd.f32 %v1869, %v1877
    %v1880 = vtanh.pop %v1879
    %1882 = vrot.lane.b32.xlu0 %v1880, 64
    %v1883 = vpop.permute.xlu0 %1882
    %v1885 = vmul.f32 %v1868, %v1883
    %v1886 = vld [vmem:[#allocation3 + $0xa] sm:$0x3]
    %1888 = vrot.lane.b32.xlu0 %v1885, 32
    %v1889 = vpop.permute.xlu0 %1888
    %v1890 = vsel %vm391, %v1889, 0
    %1892 = vmatprep.subr.mxu0 0.0
    %1893 = vmatpush1.msra.mxu0 %v379
    %1894 = vmatprep.subr.mxu0 0.0
    %1895 = vmatpush1.msra.mxu0 %v380
    %1896 = vmatprep.subr.mxu0 0.0
    %1897 = vmatpush1.msra.mxu0 %v381
    %1898 = vmatprep.subr.mxu0 0.0
    %1899 = vmatpush1.msra.mxu0 %v382
    %1900 = vmatprep.subr.mxu0 0.0
    %1901 = vmatpush1.msra.mxu0 0.0
    %1902 = vmatprep.subr.mxu0 0.0
    %1903 = vmatpush1.msra.mxu0 0.0
    %1904 = vmatprep.subr.mxu0 0.0
    %1905 = vmatpush1.msra.mxu0 0.0
    %1906 = vmatprep.subr.mxu0 0.0
    %1907 = vmatpush1.msra.mxu0 0.0
    %1908 = vmatprep.subr.mxu0 0.0
    %1909 = vmatpush1.msra.mxu0 0.0
    %1910 = vmatprep.subr.mxu0 0.0
    %1911 = vmatpush1.msra.mxu0 0.0
    %1912 = vmatprep.subr.mxu0 0.0
    %1913 = vmatpush1.msra.mxu0 0.0
    %1914 = vmatprep.subr.mxu0 0.0
    %1915 = vmatpush1.msra.mxu0 0.0
    %1916 = vmatprep.subr.mxu0 0.0
    %1917 = vmatpush1.msra.mxu0 0.0
    %1918 = vmatprep.subr.mxu0 0.0
    %1919 = vmatpush1.msra.mxu0 0.0
    %1920 = vmatprep.subr.mxu0 0.0
    %1921 = vmatpush1.msra.mxu0 0.0
    %1922 = vmatprep.subr.mxu0 0.0
    %1923 = vmatpush1.msra.mxu0 0.0
    %1924 = vmatprep.subr.mxu0 0.0
    %1925 = vmatpush1.msra.mxu0 0.0
    %1926 = vmatprep.subr.mxu0 0.0
    %1927 = vmatpush1.msra.mxu0 0.0
    %1928 = vmatprep.subr.mxu0 0.0
    %1929 = vmatpush1.msra.mxu0 0.0
    %1930 = vmatprep.subr.mxu0 0.0
    %1931 = vmatpush1.msra.mxu0 0.0
    %1932 = vmatprep.subr.mxu0 0.0
    %1933 = vmatpush1.msra.mxu0 0.0
    %1934 = vmatprep.subr.mxu0 0.0
    %1935 = vmatpush1.msra.mxu0 0.0
    %1936 = vmatprep.subr.mxu0 0.0
    %1937 = vmatpush1.msra.mxu0 0.0
    %1938 = vmatprep.subr.mxu0 0.0
    %1939 = vmatpush1.msra.mxu0 0.0
    %1940 = vmatprep.subr.mxu0 0.0
    %1941 = vmatpush1.msra.mxu0 0.0
    %1942 = vmatprep.subr.mxu0 0.0
    %1943 = vmatpush1.msra.mxu0 0.0
    %1944 = vmatprep.subr.mxu0 0.0
    %1945 = vmatpush1.msra.mxu0 0.0
    %1946 = vmatprep.subr.mxu0 0.0
    %1947 = vmatpush1.msra.mxu0 0.0
    %1948 = vmatprep.subr.mxu0 0.0
    %1949 = vmatpush1.msra.mxu0 0.0
    %1950 = vmatprep.subr.mxu0 0.0
    %1951 = vmatpush1.msra.mxu0 0.0
    %1952 = vmatprep.subr.mxu0 0.0
    %1953 = vmatpush1.msra.mxu0 0.0
    %1954 = vmatprep.subr.mxu0 0.0
    %1955 = vmatpush1.msra.mxu0 0.0
    %1956 = vmatprep.mubr.f32.mxu0 0.0
    %1957 = vmatmul.mubr.f32.gmra.mrb[0].mxu0 %v1890
    %v1958 = vpop.f32.mrb[0].mxu0
    %v1959 = vadd.f32 0.0, %v1958
    %v1960 = vpop.f32.mrb[0].mxu0
    %1961 = vdwg.mxu0
    %v1962 = vadd.f32 %v1886, %v1959
    %v1963 = vsel %vm391, %v1785, 0
    %1965 = vmatprep.subr.mxu0 0.0
    %1966 = vmatpush1.msra.mxu0 %v375
    %1967 = vmatprep.subr.mxu0 0.0
    %1968 = vmatpush1.msra.mxu0 %v376
    %1969 = vmatprep.subr.mxu0 0.0
    %1970 = vmatpush1.msra.mxu0 %v377
    %1971 = vmatprep.subr.mxu0 0.0
    %1972 = vmatpush1.msra.mxu0 %v378
    %1973 = vmatprep.subr.mxu0 0.0
    %1974 = vmatpush1.msra.mxu0 0.0
    %1975 = vmatprep.subr.mxu0 0.0
    %1976 = vmatpush1.msra.mxu0 0.0
    %1977 = vmatprep.subr.mxu0 0.0
    %1978 = vmatpush1.msra.mxu0 0.0
    %1979 = vmatprep.subr.mxu0 0.0
    %1980 = vmatpush1.msra.mxu0 0.0
    %1981 = vmatprep.subr.mxu0 0.0
    %1982 = vmatpush1.msra.mxu0 0.0
    %1983 = vmatprep.subr.mxu0 0.0
    %1984 = vmatpush1.msra.mxu0 0.0
    %1985 = vmatprep.subr.mxu0 0.0
    %1986 = vmatpush1.msra.mxu0 0.0
    %1987 = vmatprep.subr.mxu0 0.0
    %1988 = vmatpush1.msra.mxu0 0.0
    %1989 = vmatprep.subr.mxu0 0.0
    %1990 = vmatpush1.msra.mxu0 0.0
    %1991 = vmatprep.subr.mxu0 0.0
    %1992 = vmatpush1.msra.mxu0 0.0
    %1993 = vmatprep.subr.mxu0 0.0
    %1994 = vmatpush1.msra.mxu0 0.0
    %1995 = vmatprep.subr.mxu0 0.0
    %1996 = vmatpush1.msra.mxu0 0.0
    %1997 = vmatprep.subr.mxu0 0.0
    %1998 = vmatpush1.msra.mxu0 0.0
    %1999 = vmatprep.subr.mxu0 0.0
    %2000 = vmatpush1.msra.mxu0 0.0
    %2001 = vmatprep.subr.mxu0 0.0
    %2002 = vmatpush1.msra.mxu0 0.0
    %2003 = vmatprep.subr.mxu0 0.0
    %2004 = vmatpush1.msra.mxu0 0.0
    %2005 = vmatprep.subr.mxu0 0.0
    %2006 = vmatpush1.msra.mxu0 0.0
    %2007 = vmatprep.subr.mxu0 0.0
    %2008 = vmatpush1.msra.mxu0 0.0
    %2009 = vmatprep.subr.mxu0 0.0
    %2010 = vmatpush1.msra.mxu0 0.0
    %2011 = vmatprep.subr.mxu0 0.0
    %2012 = vmatpush1.msra.mxu0 0.0
    %2013 = vmatprep.subr.mxu0 0.0
    %2014 = vmatpush1.msra.mxu0 0.0
    %2015 = vmatprep.subr.mxu0 0.0
    %2016 = vmatpush1.msra.mxu0 0.0
    %2017 = vmatprep.subr.mxu0 0.0
    %2018 = vmatpush1.msra.mxu0 0.0
    %2019 = vmatprep.subr.mxu0 0.0
    %2020 = vmatpush1.msra.mxu0 0.0
    %2021 = vmatprep.subr.mxu0 0.0
    %2022 = vmatpush1.msra.mxu0 0.0
    %2023 = vmatprep.subr.mxu0 0.0
    %2024 = vmatpush1.msra.mxu0 0.0
    %2025 = vmatprep.subr.mxu0 0.0
    %2026 = vmatpush1.msra.mxu0 0.0
    %2027 = vmatprep.subr.mxu0 0.0
    %2028 = vmatpush1.msra.mxu0 0.0
    %2029 = vmatprep.mubr.f32.mxu0 0.0
    %2030 = vmatmul.mubr.f32.gmra.mrb[0].mxu0 %v1963
    %v2031 = vpop.f32.mrb[0].mxu0
    %v2032 = vadd.f32 0.0, %v2031
    %v2033 = vpop.f32.mrb[0].mxu0
    %2034 = vdwg.mxu0
    %v2035 = vadd.f32 %v1962, %v2032
    %v2036 = vmul.f32 %v2035, %v388
    %v2037 = vxor.u32 %v2036, 2147483648
    %v2038 = vmul.f32 %v2037, 1.442695
    %v2039 = vpow.pop %v2038
    %v2040 = vadd.f32 %v2039, 1.0
    %v2041 = vrcp.pop %v2040
    %v2042 = vmul.f32 1.0, %v2041
    %v2043 = vmul.f32 %v2042, %v388
    %v2044 = vsub.f32 %v2043, %v389
    %v2045 = vmul.f32 %v2044, %v1776
    %2047 = vrot.lane.b32.xlu0 %v2044, 64
    %v2048 = vpop.permute.xlu0 %2047
    %v2050 = vmul.f32 %v2044, %v2048
    %2052 = vrot.lane.b32.xlu0 %v2050, 32
    %v2053 = vpop.permute.xlu0 %2052
    %v2055 = vadd.f32 %v2045, %v2053
    %v2056 = vtanh.pop %v2055
    %2058 = vrot.lane.b32.xlu0 %v2056, 64
    %v2059 = vpop.permute.xlu0 %2058
    %v2061 = vmul.f32 %v2044, %v2059
    %2063 = vrot.lane.b32.xlu0 %v2061, 32
    %v2064 = vpop.permute.xlu0 %2063
    %2066 = vst.msk [vmem:[#allocation4 + $0xa] sm:$0x3] %vm670, %v2064
    %v2067 = vld [vmem:[#allocation2 + $0xc] sm:$0x3]
    %2068 = vmatprep.subr.mxu0 0.0
    %2069 = vmatpush1.msra.mxu0 %v283
    %2070 = vmatprep.subr.mxu0 0.0
    %2071 = vmatpush1.msra.mxu0 %v284
    %2072 = vmatprep.subr.mxu0 0.0
    %2073 = vmatpush1.msra.mxu0 %v285
    %2074 = vmatprep.subr.mxu0 0.0
    %2075 = vmatpush1.msra.mxu0 %v286
    %2076 = vmatprep.subr.mxu0 0.0
    %2077 = vmatpush1.msra.mxu0 0.0
    %2078 = vmatprep.subr.mxu0 0.0
    %2079 = vmatpush1.msra.mxu0 0.0
    %2080 = vmatprep.subr.mxu0 0.0
    %2081 = vmatpush1.msra.mxu0 0.0
    %2082 = vmatprep.subr.mxu0 0.0
    %2083 = vmatpush1.msra.mxu0 0.0
    %2084 = vmatprep.subr.mxu0 0.0
    %2085 = vmatpush1.msra.mxu0 0.0
    %2086 = vmatprep.subr.mxu0 0.0
    %2087 = vmatpush1.msra.mxu0 0.0
    %2088 = vmatprep.subr.mxu0 0.0
    %2089 = vmatpush1.msra.mxu0 0.0
    %2090 = vmatprep.subr.mxu0 0.0
    %2091 = vmatpush1.msra.mxu0 0.0
    %2092 = vmatprep.subr.mxu0 0.0
    %2093 = vmatpush1.msra.mxu0 0.0
    %2094 = vmatprep.subr.mxu0 0.0
    %2095 = vmatpush1.msra.mxu0 0.0
    %2096 = vmatprep.subr.mxu0 0.0
    %2097 = vmatpush1.msra.mxu0 0.0
    %2098 = vmatprep.subr.mxu0 0.0
    %2099 = vmatpush1.msra.mxu0 0.0
    %2100 = vmatprep.subr.mxu0 0.0
    %2101 = vmatpush1.msra.mxu0 0.0
    %2102 = vmatprep.subr.mxu0 0.0
    %2103 = vmatpush1.msra.mxu0 0.0
    %2104 = vmatprep.subr.mxu0 0.0
    %2105 = vmatpush1.msra.mxu0 0.0
    %2106 = vmatprep.subr.mxu0 0.0
    %2107 = vmatpush1.msra.mxu0 0.0
    %2108 = vmatprep.subr.mxu0 0.0
    %2109 = vmatpush1.msra.mxu0 0.0
    %2110 = vmatprep.subr.mxu0 0.0
    %2111 = vmatpush1.msra.mxu0 0.0
    %2112 = vmatprep.subr.mxu0 0.0
    %2113 = vmatpush1.msra.mxu0 0.0
    %2114 = vmatprep.subr.mxu0 0.0
    %2115 = vmatpush1.msra.mxu0 0.0
    %2116 = vmatprep.subr.mxu0 0.0
    %2117 = vmatpush1.msra.mxu0 0.0
    %2118 = vmatprep.subr.mxu0 0.0
    %2119 = vmatpush1.msra.mxu0 0.0
    %2120 = vmatprep.subr.mxu0 0.0
    %2121 = vmatpush1.msra.mxu0 0.0
    %2122 = vmatprep.subr.mxu0 0.0
    %2123 = vmatpush1.msra.mxu0 0.0
    %2124 = vmatprep.subr.mxu0 0.0
    %2125 = vmatpush1.msra.mxu0 0.0
    %2126 = vmatprep.subr.mxu0 0.0
    %2127 = vmatpush1.msra.mxu0 0.0
    %2128 = vmatprep.subr.mxu0 0.0
    %2129 = vmatpush1.msra.mxu0 0.0
    %2130 = vmatprep.subr.mxu0 0.0
    %2131 = vmatpush1.msra.mxu0 0.0
    %2132 = vmatprep.mubr.f32.mxu0 0.0
    %2133 = vmatmul.mubr.f32.gmra.mrb[0].mxu0 %v1890
    %v2134 = vpop.f32.mrb[0].mxu0
    %v2135 = vadd.f32 0.0, %v2134
    %v2136 = vpop.f32.mrb[0].mxu0
    %2137 = vdwg.mxu0
    %v2138 = vadd.f32 %v2067, %v2135
    %v2139 = vmul.f32 %v2138, %v388
    %v2140 = vxor.u32 %v2139, 2147483648
    %v2141 = vmul.f32 %v2140, 1.442695
    %v2142 = vpow.pop %v2141
    %v2143 = vadd.f32 %v2142, 1.0
    %v2144 = vrcp.pop %v2143
    %v2145 = vmul.f32 1.0, %v2144
    %v2146 = vmul.f32 %v2145, %v388
    %v2147 = vsub.f32 %v2146, %v389
    %v2148 = vmul.f32 %v2147, %v1879
    %2150 = vrot.lane.b32.xlu0 %v2147, 64
    %v2151 = vpop.permute.xlu0 %2150
    %v2153 = vmul.f32 %v2147, %v2151
    %2155 = vrot.lane.b32.xlu0 %v2153, 32
    %v2156 = vpop.permute.xlu0 %2155
    %v2158 = vadd.f32 %v2148, %v2156
    %v2159 = vtanh.pop %v2158
    %2161 = vrot.lane.b32.xlu0 %v2159, 64
    %v2162 = vpop.permute.xlu0 %2161
    %v2164 = vmul.f32 %v2147, %v2162
    %v2165 = vld [vmem:[#allocation3 + $0xc] sm:$0x3]
    %2167 = vrot.lane.b32.xlu0 %v2164, 32
    %v2168 = vpop.permute.xlu0 %2167
    %v2169 = vsel %vm391, %v2168, 0
    %2171 = vmatprep.subr.mxu0 0.0
    %2172 = vmatpush1.msra.mxu0 %v379
    %2173 = vmatprep.subr.mxu0 0.0
    %2174 = vmatpush1.msra.mxu0 %v380
    %2175 = vmatprep.subr.mxu0 0.0
    %2176 = vmatpush1.msra.mxu0 %v381
    %2177 = vmatprep.subr.mxu0 0.0
    %2178 = vmatpush1.msra.mxu0 %v382
    %2179 = vmatprep.subr.mxu0 0.0
    %2180 = vmatpush1.msra.mxu0 0.0
    %2181 = vmatprep.subr.mxu0 0.0
    %2182 = vmatpush1.msra.mxu0 0.0
    %2183 = vmatprep.subr.mxu0 0.0
    %2184 = vmatpush1.msra.mxu0 0.0
    %2185 = vmatprep.subr.mxu0 0.0
    %2186 = vmatpush1.msra.mxu0 0.0
    %2187 = vmatprep.subr.mxu0 0.0
    %2188 = vmatpush1.msra.mxu0 0.0
    %2189 = vmatprep.subr.mxu0 0.0
    %2190 = vmatpush1.msra.mxu0 0.0
    %2191 = vmatprep.subr.mxu0 0.0
    %2192 = vmatpush1.msra.mxu0 0.0
    %2193 = vmatprep.subr.mxu0 0.0
    %2194 = vmatpush1.msra.mxu0 0.0
    %2195 = vmatprep.subr.mxu0 0.0
    %2196 = vmatpush1.msra.mxu0 0.0
    %2197 = vmatprep.subr.mxu0 0.0
    %2198 = vmatpush1.msra.mxu0 0.0
    %2199 = vmatprep.subr.mxu0 0.0
    %2200 = vmatpush1.msra.mxu0 0.0
    %2201 = vmatprep.subr.mxu0 0.0
    %2202 = vmatpush1.msra.mxu0 0.0
    %2203 = vmatprep.subr.mxu0 0.0
    %2204 = vmatpush1.msra.mxu0 0.0
    %2205 = vmatprep.subr.mxu0 0.0
    %2206 = vmatpush1.msra.mxu0 0.0
    %2207 = vmatprep.subr.mxu0 0.0
    %2208 = vmatpush1.msra.mxu0 0.0
    %2209 = vmatprep.subr.mxu0 0.0
    %2210 = vmatpush1.msra.mxu0 0.0
    %2211 = vmatprep.subr.mxu0 0.0
    %2212 = vmatpush1.msra.mxu0 0.0
    %2213 = vmatprep.subr.mxu0 0.0
    %2214 = vmatpush1.msra.mxu0 0.0
    %2215 = vmatprep.subr.mxu0 0.0
    %2216 = vmatpush1.msra.mxu0 0.0
    %2217 = vmatprep.subr.mxu0 0.0
    %2218 = vmatpush1.msra.mxu0 0.0
    %2219 = vmatprep.subr.mxu0 0.0
    %2220 = vmatpush1.msra.mxu0 0.0
    %2221 = vmatprep.subr.mxu0 0.0
    %2222 = vmatpush1.msra.mxu0 0.0
    %2223 = vmatprep.subr.mxu0 0.0
    %2224 = vmatpush1.msra.mxu0 0.0
    %2225 = vmatprep.subr.mxu0 0.0
    %2226 = vmatpush1.msra.mxu0 0.0
    %2227 = vmatprep.subr.mxu0 0.0
    %2228 = vmatpush1.msra.mxu0 0.0
    %2229 = vmatprep.subr.mxu0 0.0
    %2230 = vmatpush1.msra.mxu0 0.0
    %2231 = vmatprep.subr.mxu0 0.0
    %2232 = vmatpush1.msra.mxu0 0.0
    %2233 = vmatprep.subr.mxu0 0.0
    %2234 = vmatpush1.msra.mxu0 0.0
    %2235 = vmatprep.mubr.f32.mxu0 0.0
    %2236 = vmatmul.mubr.f32.gmra.mrb[0].mxu0 %v2169
    %v2237 = vpop.f32.mrb[0].mxu0
    %v2238 = vadd.f32 0.0, %v2237
    %v2239 = vpop.f32.mrb[0].mxu0
    %2240 = vdwg.mxu0
    %v2241 = vadd.f32 %v2165, %v2238
    %v2242 = vsel %vm391, %v2064, 0
    %2244 = vmatprep.subr.mxu0 0.0
    %2245 = vmatpush1.msra.mxu0 %v375
    %2246 = vmatprep.subr.mxu0 0.0
    %2247 = vmatpush1.msra.mxu0 %v376
    %2248 = vmatprep.subr.mxu0 0.0
    %2249 = vmatpush1.msra.mxu0 %v377
    %2250 = vmatprep.subr.mxu0 0.0
    %2251 = vmatpush1.msra.mxu0 %v378
    %2252 = vmatprep.subr.mxu0 0.0
    %2253 = vmatpush1.msra.mxu0 0.0
    %2254 = vmatprep.subr.mxu0 0.0
    %2255 = vmatpush1.msra.mxu0 0.0
    %2256 = vmatprep.subr.mxu0 0.0
    %2257 = vmatpush1.msra.mxu0 0.0
    %2258 = vmatprep.subr.mxu0 0.0
    %2259 = vmatpush1.msra.mxu0 0.0
    %2260 = vmatprep.subr.mxu0 0.0
    %2261 = vmatpush1.msra.mxu0 0.0
    %2262 = vmatprep.subr.mxu0 0.0
    %2263 = vmatpush1.msra.mxu0 0.0
    %2264 = vmatprep.subr.mxu0 0.0
    %2265 = vmatpush1.msra.mxu0 0.0
    %2266 = vmatprep.subr.mxu0 0.0
    %2267 = vmatpush1.msra.mxu0 0.0
    %2268 = vmatprep.subr.mxu0 0.0
    %2269 = vmatpush1.msra.mxu0 0.0
    %2270 = vmatprep.subr.mxu0 0.0
    %2271 = vmatpush1.msra.mxu0 0.0
    %2272 = vmatprep.subr.mxu0 0.0
    %2273 = vmatpush1.msra.mxu0 0.0
    %2274 = vmatprep.subr.mxu0 0.0
    %2275 = vmatpush1.msra.mxu0 0.0
    %2276 = vmatprep.subr.mxu0 0.0
    %2277 = vmatpush1.msra.mxu0 0.0
    %2278 = vmatprep.subr.mxu0 0.0
    %2279 = vmatpush1.msra.mxu0 0.0
    %2280 = vmatprep.subr.mxu0 0.0
    %2281 = vmatpush1.msra.mxu0 0.0
    %2282 = vmatprep.subr.mxu0 0.0
    %2283 = vmatpush1.msra.mxu0 0.0
    %2284 = vmatprep.subr.mxu0 0.0
    %2285 = vmatpush1.msra.mxu0 0.0
    %2286 = vmatprep.subr.mxu0 0.0
    %2287 = vmatpush1.msra.mxu0 0.0
    %2288 = vmatprep.subr.mxu0 0.0
    %2289 = vmatpush1.msra.mxu0 0.0
    %2290 = vmatprep.subr.mxu0 0.0
    %2291 = vmatpush1.msra.mxu0 0.0
    %2292 = vmatprep.subr.mxu0 0.0
    %2293 = vmatpush1.msra.mxu0 0.0
    %2294 = vmatprep.subr.mxu0 0.0
    %2295 = vmatpush1.msra.mxu0 0.0
    %2296 = vmatprep.subr.mxu0 0.0
    %2297 = vmatpush1.msra.mxu0 0.0
    %2298 = vmatprep.subr.mxu0 0.0
    %2299 = vmatpush1.msra.mxu0 0.0
    %2300 = vmatprep.subr.mxu0 0.0
    %2301 = vmatpush1.msra.mxu0 0.0
    %2302 = vmatprep.subr.mxu0 0.0
    %2303 = vmatpush1.msra.mxu0 0.0
    %2304 = vmatprep.subr.mxu0 0.0
    %2305 = vmatpush1.msra.mxu0 0.0
    %2306 = vmatprep.subr.mxu0 0.0
    %2307 = vmatpush1.msra.mxu0 0.0
    %2308 = vmatprep.mubr.f32.mxu0 0.0
    %2309 = vmatmul.mubr.f32.gmra.mrb[0].mxu0 %v2242
    %v2310 = vpop.f32.mrb[0].mxu0
    %v2311 = vadd.f32 0.0, %v2310
    %v2312 = vpop.f32.mrb[0].mxu0
    %2313 = vdwg.mxu0
    %v2314 = vadd.f32 %v2241, %v2311
    %v2315 = vmul.f32 %v2314, %v388
    %v2316 = vxor.u32 %v2315, 2147483648
    %v2317 = vmul.f32 %v2316, 1.442695
    %v2318 = vpow.pop %v2317
    %v2319 = vadd.f32 %v2318, 1.0
    %v2320 = vrcp.pop %v2319
    %v2321 = vmul.f32 1.0, %v2320
    %v2322 = vmul.f32 %v2321, %v388
    %v2323 = vsub.f32 %v2322, %v389
    %v2324 = vmul.f32 %v2323, %v2055
    %2326 = vrot.lane.b32.xlu0 %v2323, 64
    %v2327 = vpop.permute.xlu0 %2326
    %v2329 = vmul.f32 %v2323, %v2327
    %2331 = vrot.lane.b32.xlu0 %v2329, 32
    %v2332 = vpop.permute.xlu0 %2331
    %v2334 = vadd.f32 %v2324, %v2332
    %v2335 = vtanh.pop %v2334
    %2337 = vrot.lane.b32.xlu0 %v2335, 64
    %v2338 = vpop.permute.xlu0 %2337
    %v2340 = vmul.f32 %v2323, %v2338
    %2342 = vrot.lane.b32.xlu0 %v2340, 32
    %v2343 = vpop.permute.xlu0 %2342
    %2345 = vst.msk [vmem:[#allocation4 + $0xc] sm:$0x3] %vm670, %v2343
    %v2346 = vld [vmem:[#allocation2 + $0xe] sm:$0x3]
    %2347 = vmatprep.subr.mxu0 0.0
    %2348 = vmatpush1.msra.mxu0 %v283
    %2349 = vmatprep.subr.mxu0 0.0
    %2350 = vmatpush1.msra.mxu0 %v284
    %2351 = vmatprep.subr.mxu0 0.0
    %2352 = vmatpush1.msra.mxu0 %v285
    %2353 = vmatprep.subr.mxu0 0.0
    %2354 = vmatpush1.msra.mxu0 %v286
    %2355 = vmatprep.subr.mxu0 0.0
    %2356 = vmatpush1.msra.mxu0 0.0
    %2357 = vmatprep.subr.mxu0 0.0
    %2358 = vmatpush1.msra.mxu0 0.0
    %2359 = vmatprep.subr.mxu0 0.0
    %2360 = vmatpush1.msra.mxu0 0.0
    %2361 = vmatprep.subr.mxu0 0.0
    %2362 = vmatpush1.msra.mxu0 0.0
    %2363 = vmatprep.subr.mxu0 0.0
    %2364 = vmatpush1.msra.mxu0 0.0
    %2365 = vmatprep.subr.mxu0 0.0
    %2366 = vmatpush1.msra.mxu0 0.0
    %2367 = vmatprep.subr.mxu0 0.0
    %2368 = vmatpush1.msra.mxu0 0.0
    %2369 = vmatprep.subr.mxu0 0.0
    %2370 = vmatpush1.msra.mxu0 0.0
    %2371 = vmatprep.subr.mxu0 0.0
    %2372 = vmatpush1.msra.mxu0 0.0
    %2373 = vmatprep.subr.mxu0 0.0
    %2374 = vmatpush1.msra.mxu0 0.0
    %2375 = vmatprep.subr.mxu0 0.0
    %2376 = vmatpush1.msra.mxu0 0.0
    %2377 = vmatprep.subr.mxu0 0.0
    %2378 = vmatpush1.msra.mxu0 0.0
    %2379 = vmatprep.subr.mxu0 0.0
    %2380 = vmatpush1.msra.mxu0 0.0
    %2381 = vmatprep.subr.mxu0 0.0
    %2382 = vmatpush1.msra.mxu0 0.0
    %2383 = vmatprep.subr.mxu0 0.0
    %2384 = vmatpush1.msra.mxu0 0.0
    %2385 = vmatprep.subr.mxu0 0.0
    %2386 = vmatpush1.msra.mxu0 0.0
    %2387 = vmatprep.subr.mxu0 0.0
    %2388 = vmatpush1.msra.mxu0 0.0
    %2389 = vmatprep.subr.mxu0 0.0
    %2390 = vmatpush1.msra.mxu0 0.0
    %2391 = vmatprep.subr.mxu0 0.0
    %2392 = vmatpush1.msra.mxu0 0.0
    %2393 = vmatprep.subr.mxu0 0.0
    %2394 = vmatpush1.msra.mxu0 0.0
    %2395 = vmatprep.subr.mxu0 0.0
    %2396 = vmatpush1.msra.mxu0 0.0
    %2397 = vmatprep.subr.mxu0 0.0
    %2398 = vmatpush1.msra.mxu0 0.0
    %2399 = vmatprep.subr.mxu0 0.0
    %2400 = vmatpush1.msra.mxu0 0.0
    %2401 = vmatprep.subr.mxu0 0.0
    %2402 = vmatpush1.msra.mxu0 0.0
    %2403 = vmatprep.subr.mxu0 0.0
    %2404 = vmatpush1.msra.mxu0 0.0
    %2405 = vmatprep.subr.mxu0 0.0
    %2406 = vmatpush1.msra.mxu0 0.0
    %2407 = vmatprep.subr.mxu0 0.0
    %2408 = vmatpush1.msra.mxu0 0.0
    %2409 = vmatprep.subr.mxu0 0.0
    %2410 = vmatpush1.msra.mxu0 0.0
    %2411 = vmatprep.mubr.f32.mxu0 0.0
    %2412 = vmatmul.mubr.f32.gmra.mrb[0].mxu0 %v2169
    %v2413 = vpop.f32.mrb[0].mxu0
    %v2414 = vadd.f32 0.0, %v2413
    %v2415 = vpop.f32.mrb[0].mxu0
    %2416 = vdwg.mxu0
    %v2417 = vadd.f32 %v2346, %v2414
    %v2418 = vmul.f32 %v2417, %v388
    %v2419 = vxor.u32 %v2418, 2147483648
    %v2420 = vmul.f32 %v2419, 1.442695
    %v2421 = vpow.pop %v2420
    %v2422 = vadd.f32 %v2421, 1.0
    %v2423 = vrcp.pop %v2422
    %v2424 = vmul.f32 1.0, %v2423
    %v2425 = vmul.f32 %v2424, %v388
    %v2426 = vsub.f32 %v2425, %v389
    %v2427 = vmul.f32 %v2426, %v2158
    %2429 = vrot.lane.b32.xlu0 %v2426, 64
    %v2430 = vpop.permute.xlu0 %2429
    %v2432 = vmul.f32 %v2426, %v2430
    %2434 = vrot.lane.b32.xlu0 %v2432, 32
    %v2435 = vpop.permute.xlu0 %2434
    %v2437 = vadd.f32 %v2427, %v2435
    %v2438 = vtanh.pop %v2437
    %2440 = vrot.lane.b32.xlu0 %v2438, 64
    %v2441 = vpop.permute.xlu0 %2440
    %v2443 = vmul.f32 %v2426, %v2441
    %v2444 = vld [vmem:[#allocation3 + $0xe] sm:$0x3]
    %2446 = vrot.lane.b32.xlu0 %v2443, 32
    %v2447 = vpop.permute.xlu0 %2446
    %v2448 = vsel %vm391, %v2447, 0
    %2450 = vmatprep.subr.mxu0 0.0
    %2451 = vmatpush1.msra.mxu0 %v379
    %2452 = vmatprep.subr.mxu0 0.0
    %2453 = vmatpush1.msra.mxu0 %v380
    %2454 = vmatprep.subr.mxu0 0.0
    %2455 = vmatpush1.msra.mxu0 %v381
    %2456 = vmatprep.subr.mxu0 0.0
    %2457 = vmatpush1.msra.mxu0 %v382
    %2458 = vmatprep.subr.mxu0 0.0
    %2459 = vmatpush1.msra.mxu0 0.0
    %2460 = vmatprep.subr.mxu0 0.0
    %2461 = vmatpush1.msra.mxu0 0.0
    %2462 = vmatprep.subr.mxu0 0.0
    %2463 = vmatpush1.msra.mxu0 0.0
    %2464 = vmatprep.subr.mxu0 0.0
    %2465 = vmatpush1.msra.mxu0 0.0
    %2466 = vmatprep.subr.mxu0 0.0
    %2467 = vmatpush1.msra.mxu0 0.0
    %2468 = vmatprep.subr.mxu0 0.0
    %2469 = vmatpush1.msra.mxu0 0.0
    %2470 = vmatprep.subr.mxu0 0.0
    %2471 = vmatpush1.msra.mxu0 0.0
    %2472 = vmatprep.subr.mxu0 0.0
    %2473 = vmatpush1.msra.mxu0 0.0
    %2474 = vmatprep.subr.mxu0 0.0
    %2475 = vmatpush1.msra.mxu0 0.0
    %2476 = vmatprep.subr.mxu0 0.0
    %2477 = vmatpush1.msra.mxu0 0.0
    %2478 = vmatprep.subr.mxu0 0.0
    %2479 = vmatpush1.msra.mxu0 0.0
    %2480 = vmatprep.subr.mxu0 0.0
    %2481 = vmatpush1.msra.mxu0 0.0
    %2482 = vmatprep.subr.mxu0 0.0
    %2483 = vmatpush1.msra.mxu0 0.0
    %2484 = vmatprep.subr.mxu0 0.0
    %2485 = vmatpush1.msra.mxu0 0.0
    %2486 = vmatprep.subr.mxu0 0.0
    %2487 = vmatpush1.msra.mxu0 0.0
    %2488 = vmatprep.subr.mxu0 0.0
    %2489 = vmatpush1.msra.mxu0 0.0
    %2490 = vmatprep.subr.mxu0 0.0
    %2491 = vmatpush1.msra.mxu0 0.0
    %2492 = vmatprep.subr.mxu0 0.0
    %2493 = vmatpush1.msra.mxu0 0.0
    %2494 = vmatprep.subr.mxu0 0.0
    %2495 = vmatpush1.msra.mxu0 0.0
    %2496 = vmatprep.subr.mxu0 0.0
    %2497 = vmatpush1.msra.mxu0 0.0
    %2498 = vmatprep.subr.mxu0 0.0
    %2499 = vmatpush1.msra.mxu0 0.0
    %2500 = vmatprep.subr.mxu0 0.0
    %2501 = vmatpush1.msra.mxu0 0.0
    %2502 = vmatprep.subr.mxu0 0.0
    %2503 = vmatpush1.msra.mxu0 0.0
    %2504 = vmatprep.subr.mxu0 0.0
    %2505 = vmatpush1.msra.mxu0 0.0
    %2506 = vmatprep.subr.mxu0 0.0
    %2507 = vmatpush1.msra.mxu0 0.0
    %2508 = vmatprep.subr.mxu0 0.0
    %2509 = vmatpush1.msra.mxu0 0.0
    %2510 = vmatprep.subr.mxu0 0.0
    %2511 = vmatpush1.msra.mxu0 0.0
    %2512 = vmatprep.subr.mxu0 0.0
    %2513 = vmatpush1.msra.mxu0 0.0
    %2514 = vmatprep.mubr.f32.mxu0 0.0
    %2515 = vmatmul.mubr.f32.gmra.mrb[0].mxu0 %v2448
    %v2516 = vpop.f32.mrb[0].mxu0
    %v2517 = vadd.f32 0.0, %v2516
    %v2518 = vpop.f32.mrb[0].mxu0
    %2519 = vdwg.mxu0
    %v2520 = vadd.f32 %v2444, %v2517
    %v2521 = vsel %vm391, %v2343, 0
    %2523 = vmatprep.subr.mxu0 0.0
    %2524 = vmatpush1.msra.mxu0 %v375
    %2525 = vmatprep.subr.mxu0 0.0
    %2526 = vmatpush1.msra.mxu0 %v376
    %2527 = vmatprep.subr.mxu0 0.0
    %2528 = vmatpush1.msra.mxu0 %v377
    %2529 = vmatprep.subr.mxu0 0.0
    %2530 = vmatpush1.msra.mxu0 %v378
    %2531 = vmatprep.subr.mxu0 0.0
    %2532 = vmatpush1.msra.mxu0 0.0
    %2533 = vmatprep.subr.mxu0 0.0
    %2534 = vmatpush1.msra.mxu0 0.0
    %2535 = vmatprep.subr.mxu0 0.0
    %2536 = vmatpush1.msra.mxu0 0.0
    %2537 = vmatprep.subr.mxu0 0.0
    %2538 = vmatpush1.msra.mxu0 0.0
    %2539 = vmatprep.subr.mxu0 0.0
    %2540 = vmatpush1.msra.mxu0 0.0
    %2541 = vmatprep.subr.mxu0 0.0
    %2542 = vmatpush1.msra.mxu0 0.0
    %2543 = vmatprep.subr.mxu0 0.0
    %2544 = vmatpush1.msra.mxu0 0.0
    %2545 = vmatprep.subr.mxu0 0.0
    %2546 = vmatpush1.msra.mxu0 0.0
    %2547 = vmatprep.subr.mxu0 0.0
    %2548 = vmatpush1.msra.mxu0 0.0
    %2549 = vmatprep.subr.mxu0 0.0
    %2550 = vmatpush1.msra.mxu0 0.0
    %2551 = vmatprep.subr.mxu0 0.0
    %2552 = vmatpush1.msra.mxu0 0.0
    %2553 = vmatprep.subr.mxu0 0.0
    %2554 = vmatpush1.msra.mxu0 0.0
    %2555 = vmatprep.subr.mxu0 0.0
    %2556 = vmatpush1.msra.mxu0 0.0
    %2557 = vmatprep.subr.mxu0 0.0
    %2558 = vmatpush1.msra.mxu0 0.0
    %2559 = vmatprep.subr.mxu0 0.0
    %2560 = vmatpush1.msra.mxu0 0.0
    %2561 = vmatprep.subr.mxu0 0.0
    %2562 = vmatpush1.msra.mxu0 0.0
    %2563 = vmatprep.subr.mxu0 0.0
    %2564 = vmatpush1.msra.mxu0 0.0
    %2565 = vmatprep.subr.mxu0 0.0
    %2566 = vmatpush1.msra.mxu0 0.0
    %2567 = vmatprep.subr.mxu0 0.0
    %2568 = vmatpush1.msra.mxu0 0.0
    %2569 = vmatprep.subr.mxu0 0.0
    %2570 = vmatpush1.msra.mxu0 0.0
    %2571 = vmatprep.subr.mxu0 0.0
    %2572 = vmatpush1.msra.mxu0 0.0
    %2573 = vmatprep.subr.mxu0 0.0
    %2574 = vmatpush1.msra.mxu0 0.0
    %2575 = vmatprep.subr.mxu0 0.0
    %2576 = vmatpush1.msra.mxu0 0.0
    %2577 = vmatprep.subr.mxu0 0.0
    %2578 = vmatpush1.msra.mxu0 0.0
    %2579 = vmatprep.subr.mxu0 0.0
    %2580 = vmatpush1.msra.mxu0 0.0
    %2581 = vmatprep.subr.mxu0 0.0
    %2582 = vmatpush1.msra.mxu0 0.0
    %2583 = vmatprep.subr.mxu0 0.0
    %2584 = vmatpush1.msra.mxu0 0.0
    %2585 = vmatprep.subr.mxu0 0.0
    %2586 = vmatpush1.msra.mxu0 0.0
    %2587 = vmatprep.mubr.f32.mxu0 0.0
    %2588 = vmatmul.mubr.f32.gmra.mrb[0].mxu0 %v2521
    %v2589 = vpop.f32.mrb[0].mxu0
    %v2590 = vadd.f32 0.0, %v2589
    %v2591 = vpop.f32.mrb[0].mxu0
    %2592 = vdwg.mxu0
    %v2593 = vadd.f32 %v2520, %v2590
    %v2594 = vmul.f32 %v2593, %v388
    %v2595 = vxor.u32 %v2594, 2147483648
    %v2596 = vmul.f32 %v2595, 1.442695
    %v2597 = vpow.pop %v2596
    %v2598 = vadd.f32 %v2597, 1.0
    %v2599 = vrcp.pop %v2598
    %v2600 = vmul.f32 1.0, %v2599
    %v2601 = vmul.f32 %v2600, %v388
    %v2602 = vsub.f32 %v2601, %v389
    %v2603 = vmul.f32 %v2602, %v2334
    %2605 = vrot.lane.b32.xlu0 %v2602, 64
    %v2606 = vpop.permute.xlu0 %2605
    %v2608 = vmul.f32 %v2602, %v2606
    %2610 = vrot.lane.b32.xlu0 %v2608, 32
    %v2611 = vpop.permute.xlu0 %2610
    %v2613 = vadd.f32 %v2603, %v2611
    %v2614 = vtanh.pop %v2613
    %2616 = vrot.lane.b32.xlu0 %v2614, 64
    %v2617 = vpop.permute.xlu0 %2616
    %v2619 = vmul.f32 %v2602, %v2617
    %2621 = vrot.lane.b32.xlu0 %v2619, 32
    %v2622 = vpop.permute.xlu0 %2621
    %2624 = vst.msk [vmem:[#allocation4 + $0xe] sm:$0x3] %vm670, %v2622
    %v2625 = vld [vmem:[#allocation4] sm:$0xff]
    %v2626 = vld [vmem:[#allocation4 + $0x8] sm:$0xff]
    %v2627 = vld [vmem:[%s10] sm:$0xff]
    %v2628 = vld [vmem:[%s10 + $0x8] sm:$0xff]
    %v2629 = vld [vmem:[%s10 + $0x10] sm:$0xff]
    %v2630 = vld [vmem:[%s10 + $0x18] sm:$0xff]
    %v2632 = vsel %vm391, %v2625, 0
    %v2635 = vsel %vm391, %v2626, 0
    %2637 = vmatprep.subr.mxu0 0.0
    %2638 = vmatpush1.msra.mxu0 %v2627
    %2639 = vmatprep.subr.mxu0 0.0
    %2640 = vmatpush1.msra.mxu0 %v2628
    %2641 = vmatprep.subr.mxu0 0.0
    %2642 = vmatpush1.msra.mxu0 %v2629
    %2643 = vmatprep.subr.mxu0 0.0
    %2644 = vmatpush1.msra.mxu0 %v2630
    %2645 = vmatprep.subr.mxu0 0.0
    %2646 = vmatpush1.msra.mxu0 0.0
    %2647 = vmatprep.subr.mxu0 0.0
    %2648 = vmatpush1.msra.mxu0 0.0
    %2649 = vmatprep.subr.mxu0 0.0
    %2650 = vmatpush1.msra.mxu0 0.0
    %2651 = vmatprep.subr.mxu0 0.0
    %2652 = vmatpush1.msra.mxu0 0.0
    %2653 = vmatprep.subr.mxu0 0.0
    %2654 = vmatpush1.msra.mxu0 0.0
    %2655 = vmatprep.subr.mxu0 0.0
    %2656 = vmatpush1.msra.mxu0 0.0
    %2657 = vmatprep.subr.mxu0 0.0
    %2658 = vmatpush1.msra.mxu0 0.0
    %2659 = vmatprep.subr.mxu0 0.0
    %2660 = vmatpush1.msra.mxu0 0.0
    %2661 = vmatprep.subr.mxu0 0.0
    %2662 = vmatpush1.msra.mxu0 0.0
    %2663 = vmatprep.subr.mxu0 0.0
    %2664 = vmatpush1.msra.mxu0 0.0
    %2665 = vmatprep.subr.mxu0 0.0
    %2666 = vmatpush1.msra.mxu0 0.0
    %2667 = vmatprep.subr.mxu0 0.0
    %2668 = vmatpush1.msra.mxu0 0.0
    %2669 = vmatprep.subr.mxu0 0.0
    %2670 = vmatpush1.msra.mxu0 0.0
    %2671 = vmatprep.subr.mxu0 0.0
    %2672 = vmatpush1.msra.mxu0 0.0
    %2673 = vmatprep.subr.mxu0 0.0
    %2674 = vmatpush1.msra.mxu0 0.0
    %2675 = vmatprep.subr.mxu0 0.0
    %2676 = vmatpush1.msra.mxu0 0.0
    %2677 = vmatprep.subr.mxu0 0.0
    %2678 = vmatpush1.msra.mxu0 0.0
    %2679 = vmatprep.subr.mxu0 0.0
    %2680 = vmatpush1.msra.mxu0 0.0
    %2681 = vmatprep.subr.mxu0 0.0
    %2682 = vmatpush1.msra.mxu0 0.0
    %2683 = vmatprep.subr.mxu0 0.0
    %2684 = vmatpush1.msra.mxu0 0.0
    %2685 = vmatprep.subr.mxu0 0.0
    %2686 = vmatpush1.msra.mxu0 0.0
    %2687 = vmatprep.subr.mxu0 0.0
    %2688 = vmatpush1.msra.mxu0 0.0
    %2689 = vmatprep.subr.mxu0 0.0
    %2690 = vmatpush1.msra.mxu0 0.0
    %2691 = vmatprep.subr.mxu0 0.0
    %2692 = vmatpush1.msra.mxu0 0.0
    %2693 = vmatprep.subr.mxu0 0.0
    %2694 = vmatpush1.msra.mxu0 0.0
    %2695 = vmatprep.subr.mxu0 0.0
    %2696 = vmatpush1.msra.mxu0 0.0
    %2697 = vmatprep.subr.mxu0 0.0
    %2698 = vmatpush1.msra.mxu0 0.0
    %2699 = vmatprep.subr.mxu0 0.0
    %2700 = vmatpush1.msra.mxu0 0.0
    %2701 = vmatprep.mubr.f32.mxu0 0.0
    %2702 = vmatmul.mubr.f32.gmra.mrb[0].mxu0 %v2632
    %v2703 = vpop.f32.mrb[0].mxu0
    %v2704 = vadd.f32 0.0, %v2703
    %v2705 = vpop.f32.mrb[0].mxu0
    %2706 = vmatprep.mubr.f32.mxu0 0.0
    %2707 = vmatmul.mubr.f32.gmra.mrb[0].mxu0 %v2635
    %v2708 = vpop.f32.mrb[0].mxu0
    %v2709 = vadd.f32 0.0, %v2708
    %v2710 = vpop.f32.mrb[0].mxu0
    %2711 = vdwg.mxu0
    %v2712 = vld [vmem:[%s2] sm:$0xff]
    %v2713 = vld [vmem:[%s2 + $0x8] sm:$0xff]
    %v2714 = vld [vmem:[%s11] sm:$0x1]
    %v2716 = vlaneseq
    %v2717 = vshrl.u32 %v2716, 7
    %v2718 = vsub.s32 0, %v2717
    %v2719 = vrot.slane %v2714, %v2718
    %v2722 = vsel %vm105, %v2712, 0
    %v2725 = vsel %vm105, %v2713, 0
    %2727 = vmatprep.subr.mxu0 0.0
    %2728 = vmatpush1.msra.mxu0 %v2704
    %2729 = vmatprep.subr.mxu0 0.0
    %2730 = vmatpush1.msra.mxu0 %v2709
    %2731 = vmatprep.subr.mxu0 0.0
    %2732 = vmatpush1.msra.mxu0 0.0
    %2733 = vmatprep.subr.mxu0 0.0
    %2734 = vmatpush1.msra.mxu0 0.0
    %2735 = vmatprep.subr.mxu0 0.0
    %2736 = vmatpush1.msra.mxu0 0.0
    %2737 = vmatprep.subr.mxu0 0.0
    %2738 = vmatpush1.msra.mxu0 0.0
    %2739 = vmatprep.subr.mxu0 0.0
    %2740 = vmatpush1.msra.mxu0 0.0
    %2741 = vmatprep.subr.mxu0 0.0
    %2742 = vmatpush1.msra.mxu0 0.0
    %2743 = vmatprep.subr.mxu0 0.0
    %2744 = vmatpush1.msra.mxu0 0.0
    %2745 = vmatprep.subr.mxu0 0.0
    %2746 = vmatpush1.msra.mxu0 0.0
    %2747 = vmatprep.subr.mxu0 0.0
    %2748 = vmatpush1.msra.mxu0 0.0
    %2749 = vmatprep.subr.mxu0 0.0
    %2750 = vmatpush1.msra.mxu0 0.0
    %2751 = vmatprep.subr.mxu0 0.0
    %2752 = vmatpush1.msra.mxu0 0.0
    %2753 = vmatprep.subr.mxu0 0.0
    %2754 = vmatpush1.msra.mxu0 0.0
    %2755 = vmatprep.subr.mxu0 0.0
    %2756 = vmatpush1.msra.mxu0 0.0
    %2757 = vmatprep.subr.mxu0 0.0
    %2758 = vmatpush1.msra.mxu0 0.0
    %2759 = vmatprep.subr.mxu0 0.0
    %2760 = vmatpush1.msra.mxu0 0.0
    %2761 = vmatprep.subr.mxu0 0.0
    %2762 = vmatpush1.msra.mxu0 0.0
    %2763 = vmatprep.subr.mxu0 0.0
    %2764 = vmatpush1.msra.mxu0 0.0
    %2765 = vmatprep.subr.mxu0 0.0
    %2766 = vmatpush1.msra.mxu0 0.0
    %2767 = vmatprep.subr.mxu0 0.0
    %2768 = vmatpush1.msra.mxu0 0.0
    %2769 = vmatprep.subr.mxu0 0.0
    %2770 = vmatpush1.msra.mxu0 0.0
    %2771 = vmatprep.subr.mxu0 0.0
    %2772 = vmatpush1.msra.mxu0 0.0
    %2773 = vmatprep.subr.mxu0 0.0
    %2774 = vmatpush1.msra.mxu0 0.0
    %2775 = vmatprep.subr.mxu0 0.0
    %2776 = vmatpush1.msra.mxu0 0.0
    %2777 = vmatprep.subr.mxu0 0.0
    %2778 = vmatpush1.msra.mxu0 0.0
    %2779 = vmatprep.subr.mxu0 0.0
    %2780 = vmatpush1.msra.mxu0 0.0
    %2781 = vmatprep.subr.mxu0 0.0
    %2782 = vmatpush1.msra.mxu0 0.0
    %2783 = vmatprep.subr.mxu0 0.0
    %2784 = vmatpush1.msra.mxu0 0.0
    %2785 = vmatprep.subr.mxu0 0.0
    %2786 = vmatpush1.msra.mxu0 0.0
    %2787 = vmatprep.subr.mxu0 0.0
    %2788 = vmatpush1.msra.mxu0 0.0
    %2789 = vmatprep.subr.mxu0 0.0
    %2790 = vmatpush1.msra.mxu0 0.0
    %2791 = vmatprep.mubr.f32.mxu0 0.0
    %2792 = vmatmul.mubr.f32.gmra.mrb[0].mxu0 %v2722
    %v2793 = vpop.f32.mrb[0].mxu0
    %v2794 = vadd.f32 %v2719, %v2793
    %v2795 = vpop.f32.mrb[0].mxu0
    %2796 = vmatprep.mubr.f32.mxu0 0.0
    %2797 = vmatmul.mubr.f32.gmra.mrb[0].mxu0 %v2725
    %v2798 = vpop.f32.mrb[0].mxu0
    %v2799 = vadd.f32 %v2719, %v2798
    %v2800 = vpop.f32.mrb[0].mxu0
    %2801 = vdwg.mxu0
    %vm2802 = vcmask 15360
    %2803 = vst.msk [vmem:[%s12] sm:$0xff] %vm2802, %v2794
    %2804 = vst.msk [vmem:[%s12 + $0x8] sm:$0xff] %vm2802, %v2799
    // Predicated region
    $region70: #{cpnn_columns_forward.1} parent=1 // pred_check
      _
    $region71: #{cpnn_columns_forward.1} parent=1 // pred_check_branch
      %2806 = sbr.rel (0) target = $region73
    $region72: #{cpnn_columns_forward.1} parent=1 // pred_region
      _
    $region73: #{cpnn_columns_forward.1} parent=1 // pred_fallthru
      _
    // Predicated region
    $region74: #{cpnn_columns_forward.1} parent=1 // pred_check
      _
    $region75: #{cpnn_columns_forward.1} parent=1 // pred_check_branch
      %2808 = sbr.rel (0) target = $region77
    $region76: #{cpnn_columns_forward.1} parent=1 // pred_region
      _
    $region77: #{cpnn_columns_forward.1} parent=1 // pred_fallthru
      _
    %2809 = vsyncpa [#allocation6], 1
    %2810 = vsyncpa [#allocation8], 1
    %2811 = vsyncpa [#allocation11], 1

</llo_original>
